<compile_context>
chip_gen: v6e
topology: v6e:2x2x1
jax: 0.10.0
libtpu: 0.0.40
codegen_flags: <defaults>
</compile_context>

<pallas_src>
import jax
import jax.numpy as jnp
from jax.experimental import pallas as pl
from jax.experimental.pallas import tpu as pltpu

# ------------------------- tiny BERT config -------------------------
BATCH = 2
SEQ = 8
HIDDEN = 32
N_HEADS = 2
HEAD_DIM = HIDDEN // N_HEADS
INTER = 64
N_LAYERS = 2
VOCAB = 100
NUM_CLASSES = 2
LN_EPS = 1e-12  # BERT default


def _layernorm(x, gamma, beta, eps=LN_EPS):
    mu = jnp.mean(x, axis=-1, keepdims=True)
    var = jnp.mean((x - mu) ** 2, axis=-1, keepdims=True)
    return (x - mu) * jax.lax.rsqrt(var + eps) * gamma + beta


# ------------------------- fused Pallas kernel -------------------------
def bert_fused_kernel(emb_ref, mask_ref, eg_ref, eb_ref,
                      wq_ref, bq_ref, wk_ref, bk_ref, wv_ref, bv_ref,
                      wo_ref, bo_ref, g1_ref, be1_ref,
                      w1_ref, bf1_ref, w2_ref, bf2_ref, g2_ref, be2_ref,
                      wp_ref, bp_ref, wc_ref, bc_ref,
                      o_ref, ctx_ref):
    # emb_ref: (B*S, H) pre-flattened embeddings; mask_ref: (B, 1, S) additive bias.
    x = _layernorm(emb_ref[...], eg_ref[...], eb_ref[...])   # (B*S, H), f32
    scale = 1.0 / (HEAD_DIM ** 0.5)

    for l in range(N_LAYERS):                                # static layer unroll
        q = jnp.dot(x, wq_ref[l], preferred_element_type=jnp.float32) + bq_ref[l]
        k = jnp.dot(x, wk_ref[l], preferred_element_type=jnp.float32) + bk_ref[l]
        v = jnp.dot(x, wv_ref[l], preferred_element_type=jnp.float32) + bv_ref[l]

        # attention: static (batch, head) unroll; per-head context is written
        # straight into lane slices of the VMEM scratch (no concatenate).
        for b in range(BATCH):
            r0, r1 = b * SEQ, (b + 1) * SEQ
            mb = mask_ref[b]                                 # (1, S) additive bias
            for h in range(N_HEADS):
                c0, c1 = h * HEAD_DIM, (h + 1) * HEAD_DIM
                qh, kh, vh = q[r0:r1, c0:c1], k[r0:r1, c0:c1], v[r0:r1, c0:c1]
                s = jnp.dot(qh, kh.T, preferred_element_type=jnp.float32) * scale
                s = s + mb
                s = s - jnp.max(s, axis=-1, keepdims=True)
                p = jnp.exp(s)
                p = p * pl.reciprocal(jnp.sum(p, axis=-1, keepdims=True), approx=True)
                ctx_ref[pl.ds(r0, SEQ), pl.ds(c0, HEAD_DIM)] = jnp.dot(
                    p, vh, preferred_element_type=jnp.float32)

        ctx = ctx_ref[...]                                   # (B*S, H)
        attn = jnp.dot(ctx, wo_ref[l], preferred_element_type=jnp.float32) + bo_ref[l]
        x1 = _layernorm(x + attn, g1_ref[l], be1_ref[l])

        # TODO(synk): BERT uses exact (erf) GELU; tanh approximation used here for TPU EUP lowering.
        h1 = jax.nn.gelu(
            jnp.dot(x1, w1_ref[l], preferred_element_type=jnp.float32) + bf1_ref[l],
            approximate=True)
        ffn = jnp.dot(h1, w2_ref[l], preferred_element_type=jnp.float32) + bf2_ref[l]
        x = _layernorm(x1 + ffn, g2_ref[l], be2_ref[l])

    # pooler + classifier on the resident activations (CLS row of each batch elem)
    cls = jnp.concatenate([x[b * SEQ:b * SEQ + 1, :] for b in range(BATCH)], axis=0)
    pooled = jnp.tanh(
        jnp.dot(cls, wp_ref[...], preferred_element_type=jnp.float32) + bp_ref[...])
    # dropout = identity at inference (eval mode)
    o_ref[...] = jnp.dot(pooled, wc_ref[...], preferred_element_type=jnp.float32) + bc_ref[...]


# ------------------------- pallas_call wrapper -------------------------
def bert_forward_pallas(emb_flat, mask_bias, params):
    lp = params["layers"]  # stacked per-layer tensors, leading dim N_LAYERS
    inputs = [emb_flat, mask_bias, params["emb_ln_g"], params["emb_ln_b"],
              lp["wq"], lp["bq"], lp["wk"], lp["bk"], lp["wv"], lp["bv"],
              lp["wo"], lp["bo"], lp["ln1_g"], lp["ln1_b"],
              lp["w1"], lp["b1f"], lp["w2"], lp["b2f"], lp["ln2_g"], lp["ln2_b"],
              params["pooler_w"], params["pooler_b"],
              params["cls_w"], params["cls_b"]]

    def _full_spec(a):
        nd = a.ndim
        return pl.BlockSpec(a.shape, lambda i, _nd=nd: (0,) * _nd)

    return pl.pallas_call(
        bert_fused_kernel,
        out_shape=jax.ShapeDtypeStruct((BATCH, NUM_CLASSES), jnp.float32),
        grid=(1,),  # single fused block: weights + activations all resident in VMEM
        in_specs=[_full_spec(a) for a in inputs],
        out_specs=pl.BlockSpec((BATCH, NUM_CLASSES), lambda i: (0, 0)),
        scratch_shapes=[pltpu.VMEM((BATCH * SEQ, HIDDEN), jnp.float32)],
        compiler_params=pltpu.CompilerParams(dimension_semantics=("arbitrary",)),
    )(*inputs)


# ------------------------- parameters -------------------------
def init_params(key):
    keys = iter(jax.random.split(key, 64))

    def nrm(shape):
        return 0.02 * jax.random.normal(next(keys), shape, jnp.float32)

    L = N_LAYERS
    params = {
        "word_emb": nrm((VOCAB, HIDDEN)),
        "pos_emb": nrm((SEQ, HIDDEN)),
        "type_emb": nrm((2, HIDDEN)),
        "emb_ln_g": jnp.ones((1, HIDDEN), jnp.float32),
        "emb_ln_b": jnp.zeros((1, HIDDEN), jnp.float32),
        "pooler_w": nrm((HIDDEN, HIDDEN)),
        "pooler_b": jnp.zeros((1, HIDDEN), jnp.float32),
        "cls_w": nrm((HIDDEN, NUM_CLASSES)),
        "cls_b": jnp.zeros((1, NUM_CLASSES), jnp.float32),
        # per-layer weights stacked along a leading N_LAYERS axis
        "layers": {
            "wq": nrm((L, HIDDEN, HIDDEN)), "bq": jnp.zeros((L, 1, HIDDEN), jnp.float32),
            "wk": nrm((L, HIDDEN, HIDDEN)), "bk": jnp.zeros((L, 1, HIDDEN), jnp.float32),
            "wv": nrm((L, HIDDEN, HIDDEN)), "bv": jnp.zeros((L, 1, HIDDEN), jnp.float32),
            "wo": nrm((L, HIDDEN, HIDDEN)), "bo": jnp.zeros((L, 1, HIDDEN), jnp.float32),
            "ln1_g": jnp.ones((L, 1, HIDDEN), jnp.float32),
            "ln1_b": jnp.zeros((L, 1, HIDDEN), jnp.float32),
            "w1": nrm((L, HIDDEN, INTER)), "b1f": jnp.zeros((L, 1, INTER), jnp.float32),
            "w2": nrm((L, INTER, HIDDEN)), "b2f": jnp.zeros((L, 1, HIDDEN), jnp.float32),
            "ln2_g": jnp.ones((L, 1, HIDDEN), jnp.float32),
            "ln2_b": jnp.zeros((L, 1, HIDDEN), jnp.float32),
        },
    }
    return params


# ------------------------- full forward -------------------------
@jax.jit
def bert_classifier_forward(params, input_ids, attention_mask):
    # embeddings (gather is glue); token_type hardcoded to segment 0
    emb = (params["word_emb"][input_ids]
           + params["pos_emb"][None, :, :]
           + params["type_emb"][0][None, None, :])
    emb_flat = emb.reshape(BATCH * SEQ, HIDDEN)  # flatten batch into the sublane axis

    # attention_mask (B,S) {0,1} -> additive bias (B,1,S)
    mask_bias = (1.0 - attention_mask.astype(jnp.float32))[:, None, :] * -1e9

    return bert_forward_pallas(emb_flat, mask_bias, params)


if __name__ == "__main__":
    key = jax.random.PRNGKey(0)
    k_param, k_ids = jax.random.split(key)
    params = init_params(k_param)

    input_ids = jax.random.randint(k_ids, (BATCH, SEQ), 0, VOCAB, dtype=jnp.int32)
    attention_mask = jnp.array(
        [[1, 1, 1, 1, 1, 1, 1, 1],
         [1, 1, 1, 1, 1, 0, 0, 0]], dtype=jnp.int32)

    logits = bert_classifier_forward(params, input_ids, attention_mask)
    logits = jax.block_until_ready(logits)

    assert logits.shape == (BATCH, NUM_CLASSES), logits.shape
    assert bool(jnp.all(jnp.isfinite(logits)))
    print("KERNEL_OK")
</pallas_src>

<mosaic_0001>
module attributes {stable_mosaic.version = 11 : i64} {
  func.func @bert_fused_kernel(%arg0: i32, %arg1: memref<16x32xf32, #tpu.memory_space<vmem>>, %arg2: memref<2x1x8xf32, #tpu.memory_space<vmem>>, %arg3: memref<1x32xf32, #tpu.memory_space<vmem>>, %arg4: memref<1x32xf32, #tpu.memory_space<vmem>>, %arg5: memref<2x32x32xf32, #tpu.memory_space<vmem>>, %arg6: memref<2x1x32xf32, #tpu.memory_space<vmem>>, %arg7: memref<2x32x32xf32, #tpu.memory_space<vmem>>, %arg8: memref<2x1x32xf32, #tpu.memory_space<vmem>>, %arg9: memref<2x32x32xf32, #tpu.memory_space<vmem>>, %arg10: memref<2x1x32xf32, #tpu.memory_space<vmem>>, %arg11: memref<2x32x32xf32, #tpu.memory_space<vmem>>, %arg12: memref<2x1x32xf32, #tpu.memory_space<vmem>>, %arg13: memref<2x1x32xf32, #tpu.memory_space<vmem>>, %arg14: memref<2x1x32xf32, #tpu.memory_space<vmem>>, %arg15: memref<2x32x64xf32, #tpu.memory_space<vmem>>, %arg16: memref<2x1x64xf32, #tpu.memory_space<vmem>>, %arg17: memref<2x64x32xf32, #tpu.memory_space<vmem>>, %arg18: memref<2x1x32xf32, #tpu.memory_space<vmem>>, %arg19: memref<2x1x32xf32, #tpu.memory_space<vmem>>, %arg20: memref<2x1x32xf32, #tpu.memory_space<vmem>>, %arg21: memref<32x32xf32, #tpu.memory_space<vmem>>, %arg22: memref<1x32xf32, #tpu.memory_space<vmem>>, %arg23: memref<32x2xf32, #tpu.memory_space<vmem>>, %arg24: memref<1x2xf32, #tpu.memory_space<vmem>>, %arg25: memref<2x2xf32, #tpu.memory_space<vmem>>, %arg26: memref<16x32xf32, #tpu.memory_space<vmem>>) attributes {dimension_semantics = [#tpu.dimension_semantics<arbitrary>], iteration_bounds = array<i64: 1>, scalar_prefetch = 0 : i64, scratch_operands = 1 : i64, tpu.core_type = #tpu.core_type<tc>, window_params = [{pipeline_mode = #tpu.pipeline_mode<synchronous>, transform_indices = @transform_0, window_bounds = array<i64: 16, 32>}, {pipeline_mode = #tpu.pipeline_mode<synchronous>, transform_indices = @transform_1, window_bounds = array<i64: 2, 1, 8>}, {pipeline_mode = #tpu.pipeline_mode<synchronous>, transform_indices = @transform_2, window_bounds = array<i64: 1, 32>}, {pipeline_mode = #tpu.pipeline_mode<synchronous>, transform_indices = @transform_3, window_bounds = array<i64: 1, 32>}, {pipeline_mode = #tpu.pipeline_mode<synchronous>, transform_indices = @transform_4, window_bounds = array<i64: 2, 32, 32>}, {pipeline_mode = #tpu.pipeline_mode<synchronous>, transform_indices = @transform_5, window_bounds = array<i64: 2, 1, 32>}, {pipeline_mode = #tpu.pipeline_mode<synchronous>, transform_indices = @transform_6, window_bounds = array<i64: 2, 32, 32>}, {pipeline_mode = #tpu.pipeline_mode<synchronous>, transform_indices = @transform_7, window_bounds = array<i64: 2, 1, 32>}, {pipeline_mode = #tpu.pipeline_mode<synchronous>, transform_indices = @transform_8, window_bounds = array<i64: 2, 32, 32>}, {pipeline_mode = #tpu.pipeline_mode<synchronous>, transform_indices = @transform_9, window_bounds = array<i64: 2, 1, 32>}, {pipeline_mode = #tpu.pipeline_mode<synchronous>, transform_indices = @transform_10, window_bounds = array<i64: 2, 32, 32>}, {pipeline_mode = #tpu.pipeline_mode<synchronous>, transform_indices = @transform_11, window_bounds = array<i64: 2, 1, 32>}, {pipeline_mode = #tpu.pipeline_mode<synchronous>, transform_indices = @transform_12, window_bounds = array<i64: 2, 1, 32>}, {pipeline_mode = #tpu.pipeline_mode<synchronous>, transform_indices = @transform_13, window_bounds = array<i64: 2, 1, 32>}, {pipeline_mode = #tpu.pipeline_mode<synchronous>, transform_indices = @transform_14, window_bounds = array<i64: 2, 32, 64>}, {pipeline_mode = #tpu.pipeline_mode<synchronous>, transform_indices = @transform_15, window_bounds = array<i64: 2, 1, 64>}, {pipeline_mode = #tpu.pipeline_mode<synchronous>, transform_indices = @transform_16, window_bounds = array<i64: 2, 64, 32>}, {pipeline_mode = #tpu.pipeline_mode<synchronous>, transform_indices = @transform_17, window_bounds = array<i64: 2, 1, 32>}, {pipeline_mode = #tpu.pipeline_mode<synchronous>, transform_indices = @transform_18, window_bounds = array<i64: 2, 1, 32>}, {pipeline_mode = #tpu.pipeline_mode<synchronous>, transform_indices = @transform_19, window_bounds = array<i64: 2, 1, 32>}, {pipeline_mode = #tpu.pipeline_mode<synchronous>, transform_indices = @transform_20, window_bounds = array<i64: 32, 32>}, {pipeline_mode = #tpu.pipeline_mode<synchronous>, transform_indices = @transform_21, window_bounds = array<i64: 1, 32>}, {pipeline_mode = #tpu.pipeline_mode<synchronous>, transform_indices = @transform_22, window_bounds = array<i64: 32, 2>}, {pipeline_mode = #tpu.pipeline_mode<synchronous>, transform_indices = @transform_23, window_bounds = array<i64: 1, 2>}, {pipeline_mode = #tpu.pipeline_mode<synchronous>, transform_indices = @transform_24, window_bounds = array<i64: 2, 2>}]} {
    %c0 = arith.constant 0 : index
    %c0_0 = arith.constant 0 : index
    %0 = vector.load %arg1[%c0, %c0_0] : memref<16x32xf32, #tpu.memory_space<vmem>>, vector<16x32xf32>
    %c0_1 = arith.constant 0 : index
    %c0_2 = arith.constant 0 : index
    %1 = vector.load %arg3[%c0_1, %c0_2] : memref<1x32xf32, #tpu.memory_space<vmem>>, vector<1x32xf32>
    %c0_3 = arith.constant 0 : index
    %c0_4 = arith.constant 0 : index
    %2 = vector.load %arg4[%c0_3, %c0_4] : memref<1x32xf32, #tpu.memory_space<vmem>>, vector<1x32xf32>
    %cst = arith.constant dense<0.000000e+00> : vector<16xf32>
    %3 = vector.multi_reduction <add>, %0, %cst [1] : vector<16x32xf32> to vector<16xf32>
    %4 = vector.shape_cast %3 : vector<16xf32> to vector<16x1xf32>
    %cst_5 = arith.constant 3.200000e+01 : f32
    %5 = vector.broadcast %cst_5 : f32 to vector<16x1xf32>
    %6 = arith.divf %4, %5 : vector<16x1xf32>
    %7 = vector.broadcast %6 : vector<16x1xf32> to vector<16x32xf32>
    %8 = arith.subf %0, %7 : vector<16x32xf32>
    %9 = arith.mulf %8, %8 : vector<16x32xf32>
    %cst_6 = arith.constant dense<0.000000e+00> : vector<16xf32>
    %10 = vector.multi_reduction <add>, %9, %cst_6 [1] : vector<16x32xf32> to vector<16xf32>
    %11 = vector.shape_cast %10 : vector<16xf32> to vector<16x1xf32>
    %cst_7 = arith.constant 3.200000e+01 : f32
    %12 = vector.broadcast %cst_7 : f32 to vector<16x1xf32>
    %13 = arith.divf %11, %12 : vector<16x1xf32>
    %14 = vector.broadcast %6 : vector<16x1xf32> to vector<16x32xf32>
    %15 = arith.subf %0, %14 : vector<16x32xf32>
    %cst_8 = arith.constant 9.99999996E-13 : f32
    %16 = vector.broadcast %cst_8 : f32 to vector<16x1xf32>
    %17 = arith.addf %13, %16 : vector<16x1xf32>
    %18 = math.rsqrt %17 : vector<16x1xf32>
    %19 = vector.broadcast %18 : vector<16x1xf32> to vector<16x32xf32>
    %20 = arith.mulf %15, %19 : vector<16x32xf32>
    %21 = vector.broadcast %1 : vector<1x32xf32> to vector<16x32xf32>
    %22 = arith.mulf %20, %21 : vector<16x32xf32>
    %23 = vector.broadcast %2 : vector<1x32xf32> to vector<16x32xf32>
    %24 = arith.addf %22, %23 : vector<16x32xf32>
    %c0_9 = arith.constant 0 : index
    %c0_10 = arith.constant 0 : index
    %c0_11 = arith.constant 0 : index
    %25 = vector.load %arg5[%c0_9, %c0_10, %c0_11] : memref<2x32x32xf32, #tpu.memory_space<vmem>>, vector<1x32x32xf32>
    %26 = vector.shape_cast %25 : vector<1x32x32xf32> to vector<32x32xf32>
    %cst_12 = arith.constant dense<0.000000e+00> : vector<16x32xf32>
    %27 = tpu.matmul %24, %26, %cst_12 {dimension_numbers = #tpu.dot_dimension_numbers<[1], [0], [0], [1], [0, 0, 1, 1], [], []>} : vector<16x32xf32>, vector<32x32xf32>, vector<16x32xf32> -> vector<16x32xf32>
    %c0_13 = arith.constant 0 : index
    %c0_14 = arith.constant 0 : index
    %c0_15 = arith.constant 0 : index
    %28 = vector.load %arg6[%c0_13, %c0_14, %c0_15] : memref<2x1x32xf32, #tpu.memory_space<vmem>>, vector<1x1x32xf32>
    %29 = vector.shape_cast %28 : vector<1x1x32xf32> to vector<1x32xf32>
    %30 = vector.broadcast %29 : vector<1x32xf32> to vector<16x32xf32>
    %31 = arith.addf %27, %30 : vector<16x32xf32>
    %c0_16 = arith.constant 0 : index
    %c0_17 = arith.constant 0 : index
    %c0_18 = arith.constant 0 : index
    %32 = vector.load %arg7[%c0_16, %c0_17, %c0_18] : memref<2x32x32xf32, #tpu.memory_space<vmem>>, vector<1x32x32xf32>
    %33 = vector.shape_cast %32 : vector<1x32x32xf32> to vector<32x32xf32>
    %cst_19 = arith.constant dense<0.000000e+00> : vector<16x32xf32>
    %34 = tpu.matmul %24, %33, %cst_19 {dimension_numbers = #tpu.dot_dimension_numbers<[1], [0], [0], [1], [0, 0, 1, 1], [], []>} : vector<16x32xf32>, vector<32x32xf32>, vector<16x32xf32> -> vector<16x32xf32>
    %c0_20 = arith.constant 0 : index
    %c0_21 = arith.constant 0 : index
    %c0_22 = arith.constant 0 : index
    %35 = vector.load %arg8[%c0_20, %c0_21, %c0_22] : memref<2x1x32xf32, #tpu.memory_space<vmem>>, vector<1x1x32xf32>
    %36 = vector.shape_cast %35 : vector<1x1x32xf32> to vector<1x32xf32>
    %37 = vector.broadcast %36 : vector<1x32xf32> to vector<16x32xf32>
    %38 = arith.addf %34, %37 : vector<16x32xf32>
    %c0_23 = arith.constant 0 : index
    %c0_24 = arith.constant 0 : index
    %c0_25 = arith.constant 0 : index
    %39 = vector.load %arg9[%c0_23, %c0_24, %c0_25] : memref<2x32x32xf32, #tpu.memory_space<vmem>>, vector<1x32x32xf32>
    %40 = vector.shape_cast %39 : vector<1x32x32xf32> to vector<32x32xf32>
    %cst_26 = arith.constant dense<0.000000e+00> : vector<16x32xf32>
    %41 = tpu.matmul %24, %40, %cst_26 {dimension_numbers = #tpu.dot_dimension_numbers<[1], [0], [0], [1], [0, 0, 1, 1], [], []>} : vector<16x32xf32>, vector<32x32xf32>, vector<16x32xf32> -> vector<16x32xf32>
    %c0_27 = arith.constant 0 : index
    %c0_28 = arith.constant 0 : index
    %c0_29 = arith.constant 0 : index
    %42 = vector.load %arg10[%c0_27, %c0_28, %c0_29] : memref<2x1x32xf32, #tpu.memory_space<vmem>>, vector<1x1x32xf32>
    %43 = vector.shape_cast %42 : vector<1x1x32xf32> to vector<1x32xf32>
    %44 = vector.broadcast %43 : vector<1x32xf32> to vector<16x32xf32>
    %45 = arith.addf %41, %44 : vector<16x32xf32>
    %c0_30 = arith.constant 0 : index
    %c0_31 = arith.constant 0 : index
    %c0_32 = arith.constant 0 : index
    %46 = vector.load %arg2[%c0_30, %c0_31, %c0_32] : memref<2x1x8xf32, #tpu.memory_space<vmem>>, vector<1x1x8xf32>
    %47 = vector.shape_cast %46 : vector<1x1x8xf32> to vector<1x8xf32>
    %48 = vector.extract_strided_slice %31 {offsets = [0, 0], sizes = [8, 16], strides = [1, 1]} : vector<16x32xf32> to vector<8x16xf32>
    %49 = vector.extract_strided_slice %38 {offsets = [0, 0], sizes = [8, 16], strides = [1, 1]} : vector<16x32xf32> to vector<8x16xf32>
    %50 = vector.extract_strided_slice %45 {offsets = [0, 0], sizes = [8, 16], strides = [1, 1]} : vector<16x32xf32> to vector<8x16xf32>
    %51 = tpu.transpose %49, [1, 0] : vector<8x16xf32> -> vector<16x8xf32>
    %cst_33 = arith.constant dense<0.000000e+00> : vector<8x8xf32>
    %52 = tpu.matmul %48, %51, %cst_33 {dimension_numbers = #tpu.dot_dimension_numbers<[1], [0], [0], [1], [0, 0, 1, 1], [], []>} : vector<8x16xf32>, vector<16x8xf32>, vector<8x8xf32> -> vector<8x8xf32>
    %cst_34 = arith.constant 2.500000e-01 : f32
    %53 = vector.broadcast %cst_34 : f32 to vector<8x8xf32>
    %54 = arith.mulf %52, %53 : vector<8x8xf32>
    %55 = vector.broadcast %47 : vector<1x8xf32> to vector<8x8xf32>
    %56 = arith.addf %54, %55 : vector<8x8xf32>
    %cst_35 = arith.constant dense<0xFF800000> : vector<8xf32>
    %57 = vector.multi_reduction <maximumf>, %56, %cst_35 [1] : vector<8x8xf32> to vector<8xf32>
    %58 = vector.shape_cast %57 : vector<8xf32> to vector<8x1xf32>
    %59 = vector.broadcast %58 : vector<8x1xf32> to vector<8x8xf32>
    %60 = arith.subf %56, %59 : vector<8x8xf32>
    %61 = math.exp %60 : vector<8x8xf32>
    %cst_36 = arith.constant dense<0.000000e+00> : vector<8xf32>
    %62 = vector.multi_reduction <add>, %61, %cst_36 [1] : vector<8x8xf32> to vector<8xf32>
    %63 = vector.shape_cast %62 : vector<8xf32> to vector<8x1xf32>
    %64 = tpu.reciprocal %63 {approx = true} : vector<8x1xf32> -> vector<8x1xf32>
    %65 = vector.broadcast %64 : vector<8x1xf32> to vector<8x8xf32>
    %66 = arith.mulf %61, %65 : vector<8x8xf32>
    %cst_37 = arith.constant dense<0.000000e+00> : vector<8x16xf32>
    %67 = tpu.matmul %66, %50, %cst_37 {dimension_numbers = #tpu.dot_dimension_numbers<[1], [0], [0], [1], [0, 0, 1, 1], [], []>} : vector<8x8xf32>, vector<8x16xf32>, vector<8x16xf32> -> vector<8x16xf32>
    %c0_38 = arith.constant 0 : index
    %c0_39 = arith.constant 0 : index
    %68 = vector.load %arg26[%c0_38, %c0_39] : memref<16x32xf32, #tpu.memory_space<vmem>>, vector<8x16xf32>
    tpu.vector_store %arg26[%c0_38, %c0_39], %67 {strides = array<i32>} : memref<16x32xf32, #tpu.memory_space<vmem>>, vector<8x16xf32>,
    %69 = vector.extract_strided_slice %31 {offsets = [0, 16], sizes = [8, 16], strides = [1, 1]} : vector<16x32xf32> to vector<8x16xf32>
    %70 = vector.extract_strided_slice %38 {offsets = [0, 16], sizes = [8, 16], strides = [1, 1]} : vector<16x32xf32> to vector<8x16xf32>
    %71 = vector.extract_strided_slice %45 {offsets = [0, 16], sizes = [8, 16], strides = [1, 1]} : vector<16x32xf32> to vector<8x16xf32>
    %72 = tpu.transpose %70, [1, 0] : vector<8x16xf32> -> vector<16x8xf32>
    %cst_40 = arith.constant dense<0.000000e+00> : vector<8x8xf32>
    %73 = tpu.matmul %69, %72, %cst_40 {dimension_numbers = #tpu.dot_dimension_numbers<[1], [0], [0], [1], [0, 0, 1, 1], [], []>} : vector<8x16xf32>, vector<16x8xf32>, vector<8x8xf32> -> vector<8x8xf32>
    %cst_41 = arith.constant 2.500000e-01 : f32
    %74 = vector.broadcast %cst_41 : f32 to vector<8x8xf32>
    %75 = arith.mulf %73, %74 : vector<8x8xf32>
    %76 = vector.broadcast %47 : vector<1x8xf32> to vector<8x8xf32>
    %77 = arith.addf %75, %76 : vector<8x8xf32>
    %cst_42 = arith.constant dense<0xFF800000> : vector<8xf32>
    %78 = vector.multi_reduction <maximumf>, %77, %cst_42 [1] : vector<8x8xf32> to vector<8xf32>
    %79 = vector.shape_cast %78 : vector<8xf32> to vector<8x1xf32>
    %80 = vector.broadcast %79 : vector<8x1xf32> to vector<8x8xf32>
    %81 = arith.subf %77, %80 : vector<8x8xf32>
    %82 = math.exp %81 : vector<8x8xf32>
    %cst_43 = arith.constant dense<0.000000e+00> : vector<8xf32>
    %83 = vector.multi_reduction <add>, %82, %cst_43 [1] : vector<8x8xf32> to vector<8xf32>
    %84 = vector.shape_cast %83 : vector<8xf32> to vector<8x1xf32>
    %85 = tpu.reciprocal %84 {approx = true} : vector<8x1xf32> -> vector<8x1xf32>
    %86 = vector.broadcast %85 : vector<8x1xf32> to vector<8x8xf32>
    %87 = arith.mulf %82, %86 : vector<8x8xf32>
    %cst_44 = arith.constant dense<0.000000e+00> : vector<8x16xf32>
    %88 = tpu.matmul %87, %71, %cst_44 {dimension_numbers = #tpu.dot_dimension_numbers<[1], [0], [0], [1], [0, 0, 1, 1], [], []>} : vector<8x8xf32>, vector<8x16xf32>, vector<8x16xf32> -> vector<8x16xf32>
    %c0_45 = arith.constant 0 : index
    %c16 = arith.constant 16 : index
    %89 = vector.load %arg26[%c0_45, %c16] : memref<16x32xf32, #tpu.memory_space<vmem>>, vector<8x16xf32>
    tpu.vector_store %arg26[%c0_45, %c16], %88 {strides = array<i32>} : memref<16x32xf32, #tpu.memory_space<vmem>>, vector<8x16xf32>,
    %c1 = arith.constant 1 : index
    %c0_46 = arith.constant 0 : index
    %c0_47 = arith.constant 0 : index
    %90 = vector.load %arg2[%c1, %c0_46, %c0_47] : memref<2x1x8xf32, #tpu.memory_space<vmem>>, vector<1x1x8xf32>
    %91 = vector.shape_cast %90 : vector<1x1x8xf32> to vector<1x8xf32>
    %92 = vector.extract_strided_slice %31 {offsets = [8, 0], sizes = [8, 16], strides = [1, 1]} : vector<16x32xf32> to vector<8x16xf32>
    %93 = vector.extract_strided_slice %38 {offsets = [8, 0], sizes = [8, 16], strides = [1, 1]} : vector<16x32xf32> to vector<8x16xf32>
    %94 = vector.extract_strided_slice %45 {offsets = [8, 0], sizes = [8, 16], strides = [1, 1]} : vector<16x32xf32> to vector<8x16xf32>
    %95 = tpu.transpose %93, [1, 0] : vector<8x16xf32> -> vector<16x8xf32>
    %cst_48 = arith.constant dense<0.000000e+00> : vector<8x8xf32>
    %96 = tpu.matmul %92, %95, %cst_48 {dimension_numbers = #tpu.dot_dimension_numbers<[1], [0], [0], [1], [0, 0, 1, 1], [], []>} : vector<8x16xf32>, vector<16x8xf32>, vector<8x8xf32> -> vector<8x8xf32>
    %cst_49 = arith.constant 2.500000e-01 : f32
    %97 = vector.broadcast %cst_49 : f32 to vector<8x8xf32>
    %98 = arith.mulf %96, %97 : vector<8x8xf32>
    %99 = vector.broadcast %91 : vector<1x8xf32> to vector<8x8xf32>
    %100 = arith.addf %98, %99 : vector<8x8xf32>
    %cst_50 = arith.constant dense<0xFF800000> : vector<8xf32>
    %101 = vector.multi_reduction <maximumf>, %100, %cst_50 [1] : vector<8x8xf32> to vector<8xf32>
    %102 = vector.shape_cast %101 : vector<8xf32> to vector<8x1xf32>
    %103 = vector.broadcast %102 : vector<8x1xf32> to vector<8x8xf32>
    %104 = arith.subf %100, %103 : vector<8x8xf32>
    %105 = math.exp %104 : vector<8x8xf32>
    %cst_51 = arith.constant dense<0.000000e+00> : vector<8xf32>
    %106 = vector.multi_reduction <add>, %105, %cst_51 [1] : vector<8x8xf32> to vector<8xf32>
    %107 = vector.shape_cast %106 : vector<8xf32> to vector<8x1xf32>
    %108 = tpu.reciprocal %107 {approx = true} : vector<8x1xf32> -> vector<8x1xf32>
    %109 = vector.broadcast %108 : vector<8x1xf32> to vector<8x8xf32>
    %110 = arith.mulf %105, %109 : vector<8x8xf32>
    %cst_52 = arith.constant dense<0.000000e+00> : vector<8x16xf32>
    %111 = tpu.matmul %110, %94, %cst_52 {dimension_numbers = #tpu.dot_dimension_numbers<[1], [0], [0], [1], [0, 0, 1, 1], [], []>} : vector<8x8xf32>, vector<8x16xf32>, vector<8x16xf32> -> vector<8x16xf32>
    %c8 = arith.constant 8 : index
    %c0_53 = arith.constant 0 : index
    %112 = vector.load %arg26[%c8, %c0_53] : memref<16x32xf32, #tpu.memory_space<vmem>>, vector<8x16xf32>
    tpu.vector_store %arg26[%c8, %c0_53], %111 {strides = array<i32>} : memref<16x32xf32, #tpu.memory_space<vmem>>, vector<8x16xf32>,
    %113 = vector.extract_strided_slice %31 {offsets = [8, 16], sizes = [8, 16], strides = [1, 1]} : vector<16x32xf32> to vector<8x16xf32>
    %114 = vector.extract_strided_slice %38 {offsets = [8, 16], sizes = [8, 16], strides = [1, 1]} : vector<16x32xf32> to vector<8x16xf32>
    %115 = vector.extract_strided_slice %45 {offsets = [8, 16], sizes = [8, 16], strides = [1, 1]} : vector<16x32xf32> to vector<8x16xf32>
    %116 = tpu.transpose %114, [1, 0] : vector<8x16xf32> -> vector<16x8xf32>
    %cst_54 = arith.constant dense<0.000000e+00> : vector<8x8xf32>
    %117 = tpu.matmul %113, %116, %cst_54 {dimension_numbers = #tpu.dot_dimension_numbers<[1], [0], [0], [1], [0, 0, 1, 1], [], []>} : vector<8x16xf32>, vector<16x8xf32>, vector<8x8xf32> -> vector<8x8xf32>
    %cst_55 = arith.constant 2.500000e-01 : f32
    %118 = vector.broadcast %cst_55 : f32 to vector<8x8xf32>
    %119 = arith.mulf %117, %118 : vector<8x8xf32>
    %120 = vector.broadcast %91 : vector<1x8xf32> to vector<8x8xf32>
    %121 = arith.addf %119, %120 : vector<8x8xf32>
    %cst_56 = arith.constant dense<0xFF800000> : vector<8xf32>
    %122 = vector.multi_reduction <maximumf>, %121, %cst_56 [1] : vector<8x8xf32> to vector<8xf32>
    %123 = vector.shape_cast %122 : vector<8xf32> to vector<8x1xf32>
    %124 = vector.broadcast %123 : vector<8x1xf32> to vector<8x8xf32>
    %125 = arith.subf %121, %124 : vector<8x8xf32>
    %126 = math.exp %125 : vector<8x8xf32>
    %cst_57 = arith.constant dense<0.000000e+00> : vector<8xf32>
    %127 = vector.multi_reduction <add>, %126, %cst_57 [1] : vector<8x8xf32> to vector<8xf32>
    %128 = vector.shape_cast %127 : vector<8xf32> to vector<8x1xf32>
    %129 = tpu.reciprocal %128 {approx = true} : vector<8x1xf32> -> vector<8x1xf32>
    %130 = vector.broadcast %129 : vector<8x1xf32> to vector<8x8xf32>
    %131 = arith.mulf %126, %130 : vector<8x8xf32>
    %cst_58 = arith.constant dense<0.000000e+00> : vector<8x16xf32>
    %132 = tpu.matmul %131, %115, %cst_58 {dimension_numbers = #tpu.dot_dimension_numbers<[1], [0], [0], [1], [0, 0, 1, 1], [], []>} : vector<8x8xf32>, vector<8x16xf32>, vector<8x16xf32> -> vector<8x16xf32>
    %c8_59 = arith.constant 8 : index
    %c16_60 = arith.constant 16 : index
    %133 = vector.load %arg26[%c8_59, %c16_60] : memref<16x32xf32, #tpu.memory_space<vmem>>, vector<8x16xf32>
    tpu.vector_store %arg26[%c8_59, %c16_60], %132 {strides = array<i32>} : memref<16x32xf32, #tpu.memory_space<vmem>>, vector<8x16xf32>,
    %c0_61 = arith.constant 0 : index
    %c0_62 = arith.constant 0 : index
    %134 = vector.load %arg26[%c0_61, %c0_62] : memref<16x32xf32, #tpu.memory_space<vmem>>, vector<16x32xf32>
    %c0_63 = arith.constant 0 : index
    %c0_64 = arith.constant 0 : index
    %c0_65 = arith.constant 0 : index
    %135 = vector.load %arg11[%c0_63, %c0_64, %c0_65] : memref<2x32x32xf32, #tpu.memory_space<vmem>>, vector<1x32x32xf32>
    %136 = vector.shape_cast %135 : vector<1x32x32xf32> to vector<32x32xf32>
    %cst_66 = arith.constant dense<0.000000e+00> : vector<16x32xf32>
    %137 = tpu.matmul %134, %136, %cst_66 {dimension_numbers = #tpu.dot_dimension_numbers<[1], [0], [0], [1], [0, 0, 1, 1], [], []>} : vector<16x32xf32>, vector<32x32xf32>, vector<16x32xf32> -> vector<16x32xf32>
    %c0_67 = arith.constant 0 : index
    %c0_68 = arith.constant 0 : index
    %c0_69 = arith.constant 0 : index
    %138 = vector.load %arg12[%c0_67, %c0_68, %c0_69] : memref<2x1x32xf32, #tpu.memory_space<vmem>>, vector<1x1x32xf32>
    %139 = vector.shape_cast %138 : vector<1x1x32xf32> to vector<1x32xf32>
    %140 = vector.broadcast %139 : vector<1x32xf32> to vector<16x32xf32>
    %141 = arith.addf %137, %140 : vector<16x32xf32>
    %142 = arith.addf %24, %141 : vector<16x32xf32>
    %c0_70 = arith.constant 0 : index
    %c0_71 = arith.constant 0 : index
    %c0_72 = arith.constant 0 : index
    %143 = vector.load %arg13[%c0_70, %c0_71, %c0_72] : memref<2x1x32xf32, #tpu.memory_space<vmem>>, vector<1x1x32xf32>
    %144 = vector.shape_cast %143 : vector<1x1x32xf32> to vector<1x32xf32>
    %c0_73 = arith.constant 0 : index
    %c0_74 = arith.constant 0 : index
    %c0_75 = arith.constant 0 : index
    %145 = vector.load %arg14[%c0_73, %c0_74, %c0_75] : memref<2x1x32xf32, #tpu.memory_space<vmem>>, vector<1x1x32xf32>
    %146 = vector.shape_cast %145 : vector<1x1x32xf32> to vector<1x32xf32>
    %cst_76 = arith.constant dense<0.000000e+00> : vector<16xf32>
    %147 = vector.multi_reduction <add>, %142, %cst_76 [1] : vector<16x32xf32> to vector<16xf32>
    %148 = vector.shape_cast %147 : vector<16xf32> to vector<16x1xf32>
    %cst_77 = arith.constant 3.200000e+01 : f32
    %149 = vector.broadcast %cst_77 : f32 to vector<16x1xf32>
    %150 = arith.divf %148, %149 : vector<16x1xf32>
    %151 = vector.broadcast %150 : vector<16x1xf32> to vector<16x32xf32>
    %152 = arith.subf %142, %151 : vector<16x32xf32>
    %153 = arith.mulf %152, %152 : vector<16x32xf32>
    %cst_78 = arith.constant dense<0.000000e+00> : vector<16xf32>
    %154 = vector.multi_reduction <add>, %153, %cst_78 [1] : vector<16x32xf32> to vector<16xf32>
    %155 = vector.shape_cast %154 : vector<16xf32> to vector<16x1xf32>
    %cst_79 = arith.constant 3.200000e+01 : f32
    %156 = vector.broadcast %cst_79 : f32 to vector<16x1xf32>
    %157 = arith.divf %155, %156 : vector<16x1xf32>
    %158 = vector.broadcast %150 : vector<16x1xf32> to vector<16x32xf32>
    %159 = arith.subf %142, %158 : vector<16x32xf32>
    %cst_80 = arith.constant 9.99999996E-13 : f32
    %160 = vector.broadcast %cst_80 : f32 to vector<16x1xf32>
    %161 = arith.addf %157, %160 : vector<16x1xf32>
    %162 = math.rsqrt %161 : vector<16x1xf32>
    %163 = vector.broadcast %162 : vector<16x1xf32> to vector<16x32xf32>
    %164 = arith.mulf %159, %163 : vector<16x32xf32>
    %165 = vector.broadcast %144 : vector<1x32xf32> to vector<16x32xf32>
    %166 = arith.mulf %164, %165 : vector<16x32xf32>
    %167 = vector.broadcast %146 : vector<1x32xf32> to vector<16x32xf32>
    %168 = arith.addf %166, %167 : vector<16x32xf32>
    %c0_81 = arith.constant 0 : index
    %c0_82 = arith.constant 0 : index
    %c0_83 = arith.constant 0 : index
    %169 = vector.load %arg15[%c0_81, %c0_82, %c0_83] : memref<2x32x64xf32, #tpu.memory_space<vmem>>, vector<1x32x64xf32>
    %170 = vector.shape_cast %169 : vector<1x32x64xf32> to vector<32x64xf32>
    %cst_84 = arith.constant dense<0.000000e+00> : vector<16x64xf32>
    %171 = tpu.matmul %168, %170, %cst_84 {dimension_numbers = #tpu.dot_dimension_numbers<[1], [0], [0], [1], [0, 0, 1, 1], [], []>} : vector<16x32xf32>, vector<32x64xf32>, vector<16x64xf32> -> vector<16x64xf32>
    %c0_85 = arith.constant 0 : index
    %c0_86 = arith.constant 0 : index
    %c0_87 = arith.constant 0 : index
    %172 = vector.load %arg16[%c0_85, %c0_86, %c0_87] : memref<2x1x64xf32, #tpu.memory_space<vmem>>, vector<1x1x64xf32>
    %173 = vector.shape_cast %172 : vector<1x1x64xf32> to vector<1x64xf32>
    %174 = vector.broadcast %173 : vector<1x64xf32> to vector<16x64xf32>
    %175 = arith.addf %171, %174 : vector<16x64xf32>
    %176 = arith.mulf %175, %175 : vector<16x64xf32>
    %177 = arith.mulf %175, %176 : vector<16x64xf32>
    %cst_88 = arith.constant 4.471500e-02 : f32
    %178 = vector.broadcast %cst_88 : f32 to vector<16x64xf32>
    %179 = arith.mulf %178, %177 : vector<16x64xf32>
    %180 = arith.addf %175, %179 : vector<16x64xf32>
    %cst_89 = arith.constant 0.797884583 : f32
    %181 = vector.broadcast %cst_89 : f32 to vector<16x64xf32>
    %182 = arith.mulf %181, %180 : vector<16x64xf32>
    %183 = math.tanh %182 : vector<16x64xf32>
    %cst_90 = arith.constant 1.000000e+00 : f32
    %184 = vector.broadcast %cst_90 : f32 to vector<16x64xf32>
    %185 = arith.addf %184, %183 : vector<16x64xf32>
    %cst_91 = arith.constant 5.000000e-01 : f32
    %186 = vector.broadcast %cst_91 : f32 to vector<16x64xf32>
    %187 = arith.mulf %186, %185 : vector<16x64xf32>
    %188 = arith.mulf %175, %187 : vector<16x64xf32>
    %c0_92 = arith.constant 0 : index
    %c0_93 = arith.constant 0 : index
    %c0_94 = arith.constant 0 : index
    %189 = vector.load %arg17[%c0_92, %c0_93, %c0_94] : memref<2x64x32xf32, #tpu.memory_space<vmem>>, vector<1x64x32xf32>
    %190 = vector.shape_cast %189 : vector<1x64x32xf32> to vector<64x32xf32>
    %cst_95 = arith.constant dense<0.000000e+00> : vector<16x32xf32>
    %191 = tpu.matmul %188, %190, %cst_95 {dimension_numbers = #tpu.dot_dimension_numbers<[1], [0], [0], [1], [0, 0, 1, 1], [], []>} : vector<16x64xf32>, vector<64x32xf32>, vector<16x32xf32> -> vector<16x32xf32>
    %c0_96 = arith.constant 0 : index
    %c0_97 = arith.constant 0 : index
    %c0_98 = arith.constant 0 : index
    %192 = vector.load %arg18[%c0_96, %c0_97, %c0_98] : memref<2x1x32xf32, #tpu.memory_space<vmem>>, vector<1x1x32xf32>
    %193 = vector.shape_cast %192 : vector<1x1x32xf32> to vector<1x32xf32>
    %194 = vector.broadcast %193 : vector<1x32xf32> to vector<16x32xf32>
    %195 = arith.addf %191, %194 : vector<16x32xf32>
    %196 = arith.addf %168, %195 : vector<16x32xf32>
    %c0_99 = arith.constant 0 : index
    %c0_100 = arith.constant 0 : index
    %c0_101 = arith.constant 0 : index
    %197 = vector.load %arg19[%c0_99, %c0_100, %c0_101] : memref<2x1x32xf32, #tpu.memory_space<vmem>>, vector<1x1x32xf32>
    %198 = vector.shape_cast %197 : vector<1x1x32xf32> to vector<1x32xf32>
    %c0_102 = arith.constant 0 : index
    %c0_103 = arith.constant 0 : index
    %c0_104 = arith.constant 0 : index
    %199 = vector.load %arg20[%c0_102, %c0_103, %c0_104] : memref<2x1x32xf32, #tpu.memory_space<vmem>>, vector<1x1x32xf32>
    %200 = vector.shape_cast %199 : vector<1x1x32xf32> to vector<1x32xf32>
    %cst_105 = arith.constant dense<0.000000e+00> : vector<16xf32>
    %201 = vector.multi_reduction <add>, %196, %cst_105 [1] : vector<16x32xf32> to vector<16xf32>
    %202 = vector.shape_cast %201 : vector<16xf32> to vector<16x1xf32>
    %cst_106 = arith.constant 3.200000e+01 : f32
    %203 = vector.broadcast %cst_106 : f32 to vector<16x1xf32>
    %204 = arith.divf %202, %203 : vector<16x1xf32>
    %205 = vector.broadcast %204 : vector<16x1xf32> to vector<16x32xf32>
    %206 = arith.subf %196, %205 : vector<16x32xf32>
    %207 = arith.mulf %206, %206 : vector<16x32xf32>
    %cst_107 = arith.constant dense<0.000000e+00> : vector<16xf32>
    %208 = vector.multi_reduction <add>, %207, %cst_107 [1] : vector<16x32xf32> to vector<16xf32>
    %209 = vector.shape_cast %208 : vector<16xf32> to vector<16x1xf32>
    %cst_108 = arith.constant 3.200000e+01 : f32
    %210 = vector.broadcast %cst_108 : f32 to vector<16x1xf32>
    %211 = arith.divf %209, %210 : vector<16x1xf32>
    %212 = vector.broadcast %204 : vector<16x1xf32> to vector<16x32xf32>
    %213 = arith.subf %196, %212 : vector<16x32xf32>
    %cst_109 = arith.constant 9.99999996E-13 : f32
    %214 = vector.broadcast %cst_109 : f32 to vector<16x1xf32>
    %215 = arith.addf %211, %214 : vector<16x1xf32>
    %216 = math.rsqrt %215 : vector<16x1xf32>
    %217 = vector.broadcast %216 : vector<16x1xf32> to vector<16x32xf32>
    %218 = arith.mulf %213, %217 : vector<16x32xf32>
    %219 = vector.broadcast %198 : vector<1x32xf32> to vector<16x32xf32>
    %220 = arith.mulf %218, %219 : vector<16x32xf32>
    %221 = vector.broadcast %200 : vector<1x32xf32> to vector<16x32xf32>
    %222 = arith.addf %220, %221 : vector<16x32xf32>
    %c1_110 = arith.constant 1 : index
    %c0_111 = arith.constant 0 : index
    %c0_112 = arith.constant 0 : index
    %223 = vector.load %arg5[%c1_110, %c0_111, %c0_112] : memref<2x32x32xf32, #tpu.memory_space<vmem>>, vector<1x32x32xf32>
    %224 = vector.shape_cast %223 : vector<1x32x32xf32> to vector<32x32xf32>
    %cst_113 = arith.constant dense<0.000000e+00> : vector<16x32xf32>
    %225 = tpu.matmul %222, %224, %cst_113 {dimension_numbers = #tpu.dot_dimension_numbers<[1], [0], [0], [1], [0, 0, 1, 1], [], []>} : vector<16x32xf32>, vector<32x32xf32>, vector<16x32xf32> -> vector<16x32xf32>
    %c1_114 = arith.constant 1 : index
    %c0_115 = arith.constant 0 : index
    %c0_116 = arith.constant 0 : index
    %226 = vector.load %arg6[%c1_114, %c0_115, %c0_116] : memref<2x1x32xf32, #tpu.memory_space<vmem>>, vector<1x1x32xf32>
    %227 = vector.shape_cast %226 : vector<1x1x32xf32> to vector<1x32xf32>
    %228 = vector.broadcast %227 : vector<1x32xf32> to vector<16x32xf32>
    %229 = arith.addf %225, %228 : vector<16x32xf32>
    %c1_117 = arith.constant 1 : index
    %c0_118 = arith.constant 0 : index
    %c0_119 = arith.constant 0 : index
    %230 = vector.load %arg7[%c1_117, %c0_118, %c0_119] : memref<2x32x32xf32, #tpu.memory_space<vmem>>, vector<1x32x32xf32>
    %231 = vector.shape_cast %230 : vector<1x32x32xf32> to vector<32x32xf32>
    %cst_120 = arith.constant dense<0.000000e+00> : vector<16x32xf32>
    %232 = tpu.matmul %222, %231, %cst_120 {dimension_numbers = #tpu.dot_dimension_numbers<[1], [0], [0], [1], [0, 0, 1, 1], [], []>} : vector<16x32xf32>, vector<32x32xf32>, vector<16x32xf32> -> vector<16x32xf32>
    %c1_121 = arith.constant 1 : index
    %c0_122 = arith.constant 0 : index
    %c0_123 = arith.constant 0 : index
    %233 = vector.load %arg8[%c1_121, %c0_122, %c0_123] : memref<2x1x32xf32, #tpu.memory_space<vmem>>, vector<1x1x32xf32>
    %234 = vector.shape_cast %233 : vector<1x1x32xf32> to vector<1x32xf32>
    %235 = vector.broadcast %234 : vector<1x32xf32> to vector<16x32xf32>
    %236 = arith.addf %232, %235 : vector<16x32xf32>
    %c1_124 = arith.constant 1 : index
    %c0_125 = arith.constant 0 : index
    %c0_126 = arith.constant 0 : index
    %237 = vector.load %arg9[%c1_124, %c0_125, %c0_126] : memref<2x32x32xf32, #tpu.memory_space<vmem>>, vector<1x32x32xf32>
    %238 = vector.shape_cast %237 : vector<1x32x32xf32> to vector<32x32xf32>
    %cst_127 = arith.constant dense<0.000000e+00> : vector<16x32xf32>
    %239 = tpu.matmul %222, %238, %cst_127 {dimension_numbers = #tpu.dot_dimension_numbers<[1], [0], [0], [1], [0, 0, 1, 1], [], []>} : vector<16x32xf32>, vector<32x32xf32>, vector<16x32xf32> -> vector<16x32xf32>
    %c1_128 = arith.constant 1 : index
    %c0_129 = arith.constant 0 : index
    %c0_130 = arith.constant 0 : index
    %240 = vector.load %arg10[%c1_128, %c0_129, %c0_130] : memref<2x1x32xf32, #tpu.memory_space<vmem>>, vector<1x1x32xf32>
    %241 = vector.shape_cast %240 : vector<1x1x32xf32> to vector<1x32xf32>
    %242 = vector.broadcast %241 : vector<1x32xf32> to vector<16x32xf32>
    %243 = arith.addf %239, %242 : vector<16x32xf32>
    %c0_131 = arith.constant 0 : index
    %c0_132 = arith.constant 0 : index
    %c0_133 = arith.constant 0 : index
    %244 = vector.load %arg2[%c0_131, %c0_132, %c0_133] : memref<2x1x8xf32, #tpu.memory_space<vmem>>, vector<1x1x8xf32>
    %245 = vector.shape_cast %244 : vector<1x1x8xf32> to vector<1x8xf32>
    %246 = vector.extract_strided_slice %229 {offsets = [0, 0], sizes = [8, 16], strides = [1, 1]} : vector<16x32xf32> to vector<8x16xf32>
    %247 = vector.extract_strided_slice %236 {offsets = [0, 0], sizes = [8, 16], strides = [1, 1]} : vector<16x32xf32> to vector<8x16xf32>
    %248 = vector.extract_strided_slice %243 {offsets = [0, 0], sizes = [8, 16], strides = [1, 1]} : vector<16x32xf32> to vector<8x16xf32>
    %249 = tpu.transpose %247, [1, 0] : vector<8x16xf32> -> vector<16x8xf32>
    %cst_134 = arith.constant dense<0.000000e+00> : vector<8x8xf32>
    %250 = tpu.matmul %246, %249, %cst_134 {dimension_numbers = #tpu.dot_dimension_numbers<[1], [0], [0], [1], [0, 0, 1, 1], [], []>} : vector<8x16xf32>, vector<16x8xf32>, vector<8x8xf32> -> vector<8x8xf32>
    %cst_135 = arith.constant 2.500000e-01 : f32
    %251 = vector.broadcast %cst_135 : f32 to vector<8x8xf32>
    %252 = arith.mulf %250, %251 : vector<8x8xf32>
    %253 = vector.broadcast %245 : vector<1x8xf32> to vector<8x8xf32>
    %254 = arith.addf %252, %253 : vector<8x8xf32>
    %cst_136 = arith.constant dense<0xFF800000> : vector<8xf32>
    %255 = vector.multi_reduction <maximumf>, %254, %cst_136 [1] : vector<8x8xf32> to vector<8xf32>
    %256 = vector.shape_cast %255 : vector<8xf32> to vector<8x1xf32>
    %257 = vector.broadcast %256 : vector<8x1xf32> to vector<8x8xf32>
    %258 = arith.subf %254, %257 : vector<8x8xf32>
    %259 = math.exp %258 : vector<8x8xf32>
    %cst_137 = arith.constant dense<0.000000e+00> : vector<8xf32>
    %260 = vector.multi_reduction <add>, %259, %cst_137 [1] : vector<8x8xf32> to vector<8xf32>
    %261 = vector.shape_cast %260 : vector<8xf32> to vector<8x1xf32>
    %262 = tpu.reciprocal %261 {approx = true} : vector<8x1xf32> -> vector<8x1xf32>
    %263 = vector.broadcast %262 : vector<8x1xf32> to vector<8x8xf32>
    %264 = arith.mulf %259, %263 : vector<8x8xf32>
    %cst_138 = arith.constant dense<0.000000e+00> : vector<8x16xf32>
    %265 = tpu.matmul %264, %248, %cst_138 {dimension_numbers = #tpu.dot_dimension_numbers<[1], [0], [0], [1], [0, 0, 1, 1], [], []>} : vector<8x8xf32>, vector<8x16xf32>, vector<8x16xf32> -> vector<8x16xf32>
    %c0_139 = arith.constant 0 : index
    %c0_140 = arith.constant 0 : index
    %266 = vector.load %arg26[%c0_139, %c0_140] : memref<16x32xf32, #tpu.memory_space<vmem>>, vector<8x16xf32>
    tpu.vector_store %arg26[%c0_139, %c0_140], %265 {strides = array<i32>} : memref<16x32xf32, #tpu.memory_space<vmem>>, vector<8x16xf32>,
    %267 = vector.extract_strided_slice %229 {offsets = [0, 16], sizes = [8, 16], strides = [1, 1]} : vector<16x32xf32> to vector<8x16xf32>
    %268 = vector.extract_strided_slice %236 {offsets = [0, 16], sizes = [8, 16], strides = [1, 1]} : vector<16x32xf32> to vector<8x16xf32>
    %269 = vector.extract_strided_slice %243 {offsets = [0, 16], sizes = [8, 16], strides = [1, 1]} : vector<16x32xf32> to vector<8x16xf32>
    %270 = tpu.transpose %268, [1, 0] : vector<8x16xf32> -> vector<16x8xf32>
    %cst_141 = arith.constant dense<0.000000e+00> : vector<8x8xf32>
    %271 = tpu.matmul %267, %270, %cst_141 {dimension_numbers = #tpu.dot_dimension_numbers<[1], [0], [0], [1], [0, 0, 1, 1], [], []>} : vector<8x16xf32>, vector<16x8xf32>, vector<8x8xf32> -> vector<8x8xf32>
    %cst_142 = arith.constant 2.500000e-01 : f32
    %272 = vector.broadcast %cst_142 : f32 to vector<8x8xf32>
    %273 = arith.mulf %271, %272 : vector<8x8xf32>
    %274 = vector.broadcast %245 : vector<1x8xf32> to vector<8x8xf32>
    %275 = arith.addf %273, %274 : vector<8x8xf32>
    %cst_143 = arith.constant dense<0xFF800000> : vector<8xf32>
    %276 = vector.multi_reduction <maximumf>, %275, %cst_143 [1] : vector<8x8xf32> to vector<8xf32>
    %277 = vector.shape_cast %276 : vector<8xf32> to vector<8x1xf32>
    %278 = vector.broadcast %277 : vector<8x1xf32> to vector<8x8xf32>
    %279 = arith.subf %275, %278 : vector<8x8xf32>
    %280 = math.exp %279 : vector<8x8xf32>
    %cst_144 = arith.constant dense<0.000000e+00> : vector<8xf32>
    %281 = vector.multi_reduction <add>, %280, %cst_144 [1] : vector<8x8xf32> to vector<8xf32>
    %282 = vector.shape_cast %281 : vector<8xf32> to vector<8x1xf32>
    %283 = tpu.reciprocal %282 {approx = true} : vector<8x1xf32> -> vector<8x1xf32>
    %284 = vector.broadcast %283 : vector<8x1xf32> to vector<8x8xf32>
    %285 = arith.mulf %280, %284 : vector<8x8xf32>
    %cst_145 = arith.constant dense<0.000000e+00> : vector<8x16xf32>
    %286 = tpu.matmul %285, %269, %cst_145 {dimension_numbers = #tpu.dot_dimension_numbers<[1], [0], [0], [1], [0, 0, 1, 1], [], []>} : vector<8x8xf32>, vector<8x16xf32>, vector<8x16xf32> -> vector<8x16xf32>
    %c0_146 = arith.constant 0 : index
    %c16_147 = arith.constant 16 : index
    %287 = vector.load %arg26[%c0_146, %c16_147] : memref<16x32xf32, #tpu.memory_space<vmem>>, vector<8x16xf32>
    tpu.vector_store %arg26[%c0_146, %c16_147], %286 {strides = array<i32>} : memref<16x32xf32, #tpu.memory_space<vmem>>, vector<8x16xf32>,
    %c1_148 = arith.constant 1 : index
    %c0_149 = arith.constant 0 : index
    %c0_150 = arith.constant 0 : index
    %288 = vector.load %arg2[%c1_148, %c0_149, %c0_150] : memref<2x1x8xf32, #tpu.memory_space<vmem>>, vector<1x1x8xf32>
    %289 = vector.shape_cast %288 : vector<1x1x8xf32> to vector<1x8xf32>
    %290 = vector.extract_strided_slice %229 {offsets = [8, 0], sizes = [8, 16], strides = [1, 1]} : vector<16x32xf32> to vector<8x16xf32>
    %291 = vector.extract_strided_slice %236 {offsets = [8, 0], sizes = [8, 16], strides = [1, 1]} : vector<16x32xf32> to vector<8x16xf32>
    %292 = vector.extract_strided_slice %243 {offsets = [8, 0], sizes = [8, 16], strides = [1, 1]} : vector<16x32xf32> to vector<8x16xf32>
    %293 = tpu.transpose %291, [1, 0] : vector<8x16xf32> -> vector<16x8xf32>
    %cst_151 = arith.constant dense<0.000000e+00> : vector<8x8xf32>
    %294 = tpu.matmul %290, %293, %cst_151 {dimension_numbers = #tpu.dot_dimension_numbers<[1], [0], [0], [1], [0, 0, 1, 1], [], []>} : vector<8x16xf32>, vector<16x8xf32>, vector<8x8xf32> -> vector<8x8xf32>
    %cst_152 = arith.constant 2.500000e-01 : f32
    %295 = vector.broadcast %cst_152 : f32 to vector<8x8xf32>
    %296 = arith.mulf %294, %295 : vector<8x8xf32>
    %297 = vector.broadcast %289 : vector<1x8xf32> to vector<8x8xf32>
    %298 = arith.addf %296, %297 : vector<8x8xf32>
    %cst_153 = arith.constant dense<0xFF800000> : vector<8xf32>
    %299 = vector.multi_reduction <maximumf>, %298, %cst_153 [1] : vector<8x8xf32> to vector<8xf32>
    %300 = vector.shape_cast %299 : vector<8xf32> to vector<8x1xf32>
    %301 = vector.broadcast %300 : vector<8x1xf32> to vector<8x8xf32>
    %302 = arith.subf %298, %301 : vector<8x8xf32>
    %303 = math.exp %302 : vector<8x8xf32>
    %cst_154 = arith.constant dense<0.000000e+00> : vector<8xf32>
    %304 = vector.multi_reduction <add>, %303, %cst_154 [1] : vector<8x8xf32> to vector<8xf32>
    %305 = vector.shape_cast %304 : vector<8xf32> to vector<8x1xf32>
    %306 = tpu.reciprocal %305 {approx = true} : vector<8x1xf32> -> vector<8x1xf32>
    %307 = vector.broadcast %306 : vector<8x1xf32> to vector<8x8xf32>
    %308 = arith.mulf %303, %307 : vector<8x8xf32>
    %cst_155 = arith.constant dense<0.000000e+00> : vector<8x16xf32>
    %309 = tpu.matmul %308, %292, %cst_155 {dimension_numbers = #tpu.dot_dimension_numbers<[1], [0], [0], [1], [0, 0, 1, 1], [], []>} : vector<8x8xf32>, vector<8x16xf32>, vector<8x16xf32> -> vector<8x16xf32>
    %c8_156 = arith.constant 8 : index
    %c0_157 = arith.constant 0 : index
    %310 = vector.load %arg26[%c8_156, %c0_157] : memref<16x32xf32, #tpu.memory_space<vmem>>, vector<8x16xf32>
    tpu.vector_store %arg26[%c8_156, %c0_157], %309 {strides = array<i32>} : memref<16x32xf32, #tpu.memory_space<vmem>>, vector<8x16xf32>,
    %311 = vector.extract_strided_slice %229 {offsets = [8, 16], sizes = [8, 16], strides = [1, 1]} : vector<16x32xf32> to vector<8x16xf32>
    %312 = vector.extract_strided_slice %236 {offsets = [8, 16], sizes = [8, 16], strides = [1, 1]} : vector<16x32xf32> to vector<8x16xf32>
    %313 = vector.extract_strided_slice %243 {offsets = [8, 16], sizes = [8, 16], strides = [1, 1]} : vector<16x32xf32> to vector<8x16xf32>
    %314 = tpu.transpose %312, [1, 0] : vector<8x16xf32> -> vector<16x8xf32>
    %cst_158 = arith.constant dense<0.000000e+00> : vector<8x8xf32>
    %315 = tpu.matmul %311, %314, %cst_158 {dimension_numbers = #tpu.dot_dimension_numbers<[1], [0], [0], [1], [0, 0, 1, 1], [], []>} : vector<8x16xf32>, vector<16x8xf32>, vector<8x8xf32> -> vector<8x8xf32>
    %cst_159 = arith.constant 2.500000e-01 : f32
    %316 = vector.broadcast %cst_159 : f32 to vector<8x8xf32>
    %317 = arith.mulf %315, %316 : vector<8x8xf32>
    %318 = vector.broadcast %289 : vector<1x8xf32> to vector<8x8xf32>
    %319 = arith.addf %317, %318 : vector<8x8xf32>
    %cst_160 = arith.constant dense<0xFF800000> : vector<8xf32>
    %320 = vector.multi_reduction <maximumf>, %319, %cst_160 [1] : vector<8x8xf32> to vector<8xf32>
    %321 = vector.shape_cast %320 : vector<8xf32> to vector<8x1xf32>
    %322 = vector.broadcast %321 : vector<8x1xf32> to vector<8x8xf32>
    %323 = arith.subf %319, %322 : vector<8x8xf32>
    %324 = math.exp %323 : vector<8x8xf32>
    %cst_161 = arith.constant dense<0.000000e+00> : vector<8xf32>
    %325 = vector.multi_reduction <add>, %324, %cst_161 [1] : vector<8x8xf32> to vector<8xf32>
    %326 = vector.shape_cast %325 : vector<8xf32> to vector<8x1xf32>
    %327 = tpu.reciprocal %326 {approx = true} : vector<8x1xf32> -> vector<8x1xf32>
    %328 = vector.broadcast %327 : vector<8x1xf32> to vector<8x8xf32>
    %329 = arith.mulf %324, %328 : vector<8x8xf32>
    %cst_162 = arith.constant dense<0.000000e+00> : vector<8x16xf32>
    %330 = tpu.matmul %329, %313, %cst_162 {dimension_numbers = #tpu.dot_dimension_numbers<[1], [0], [0], [1], [0, 0, 1, 1], [], []>} : vector<8x8xf32>, vector<8x16xf32>, vector<8x16xf32> -> vector<8x16xf32>
    %c8_163 = arith.constant 8 : index
    %c16_164 = arith.constant 16 : index
    %331 = vector.load %arg26[%c8_163, %c16_164] : memref<16x32xf32, #tpu.memory_space<vmem>>, vector<8x16xf32>
    tpu.vector_store %arg26[%c8_163, %c16_164], %330 {strides = array<i32>} : memref<16x32xf32, #tpu.memory_space<vmem>>, vector<8x16xf32>,
    %c0_165 = arith.constant 0 : index
    %c0_166 = arith.constant 0 : index
    %332 = vector.load %arg26[%c0_165, %c0_166] : memref<16x32xf32, #tpu.memory_space<vmem>>, vector<16x32xf32>
    %c1_167 = arith.constant 1 : index
    %c0_168 = arith.constant 0 : index
    %c0_169 = arith.constant 0 : index
    %333 = vector.load %arg11[%c1_167, %c0_168, %c0_169] : memref<2x32x32xf32, #tpu.memory_space<vmem>>, vector<1x32x32xf32>
    %334 = vector.shape_cast %333 : vector<1x32x32xf32> to vector<32x32xf32>
    %cst_170 = arith.constant dense<0.000000e+00> : vector<16x32xf32>
    %335 = tpu.matmul %332, %334, %cst_170 {dimension_numbers = #tpu.dot_dimension_numbers<[1], [0], [0], [1], [0, 0, 1, 1], [], []>} : vector<16x32xf32>, vector<32x32xf32>, vector<16x32xf32> -> vector<16x32xf32>
    %c1_171 = arith.constant 1 : index
    %c0_172 = arith.constant 0 : index
    %c0_173 = arith.constant 0 : index
    %336 = vector.load %arg12[%c1_171, %c0_172, %c0_173] : memref<2x1x32xf32, #tpu.memory_space<vmem>>, vector<1x1x32xf32>
    %337 = vector.shape_cast %336 : vector<1x1x32xf32> to vector<1x32xf32>
    %338 = vector.broadcast %337 : vector<1x32xf32> to vector<16x32xf32>
    %339 = arith.addf %335, %338 : vector<16x32xf32>
    %340 = arith.addf %222, %339 : vector<16x32xf32>
    %c1_174 = arith.constant 1 : index
    %c0_175 = arith.constant 0 : index
    %c0_176 = arith.constant 0 : index
    %341 = vector.load %arg13[%c1_174, %c0_175, %c0_176] : memref<2x1x32xf32, #tpu.memory_space<vmem>>, vector<1x1x32xf32>
    %342 = vector.shape_cast %341 : vector<1x1x32xf32> to vector<1x32xf32>
    %c1_177 = arith.constant 1 : index
    %c0_178 = arith.constant 0 : index
    %c0_179 = arith.constant 0 : index
    %343 = vector.load %arg14[%c1_177, %c0_178, %c0_179] : memref<2x1x32xf32, #tpu.memory_space<vmem>>, vector<1x1x32xf32>
    %344 = vector.shape_cast %343 : vector<1x1x32xf32> to vector<1x32xf32>
    %cst_180 = arith.constant dense<0.000000e+00> : vector<16xf32>
    %345 = vector.multi_reduction <add>, %340, %cst_180 [1] : vector<16x32xf32> to vector<16xf32>
    %346 = vector.shape_cast %345 : vector<16xf32> to vector<16x1xf32>
    %cst_181 = arith.constant 3.200000e+01 : f32
    %347 = vector.broadcast %cst_181 : f32 to vector<16x1xf32>
    %348 = arith.divf %346, %347 : vector<16x1xf32>
    %349 = vector.broadcast %348 : vector<16x1xf32> to vector<16x32xf32>
    %350 = arith.subf %340, %349 : vector<16x32xf32>
    %351 = arith.mulf %350, %350 : vector<16x32xf32>
    %cst_182 = arith.constant dense<0.000000e+00> : vector<16xf32>
    %352 = vector.multi_reduction <add>, %351, %cst_182 [1] : vector<16x32xf32> to vector<16xf32>
    %353 = vector.shape_cast %352 : vector<16xf32> to vector<16x1xf32>
    %cst_183 = arith.constant 3.200000e+01 : f32
    %354 = vector.broadcast %cst_183 : f32 to vector<16x1xf32>
    %355 = arith.divf %353, %354 : vector<16x1xf32>
    %356 = vector.broadcast %348 : vector<16x1xf32> to vector<16x32xf32>
    %357 = arith.subf %340, %356 : vector<16x32xf32>
    %cst_184 = arith.constant 9.99999996E-13 : f32
    %358 = vector.broadcast %cst_184 : f32 to vector<16x1xf32>
    %359 = arith.addf %355, %358 : vector<16x1xf32>
    %360 = math.rsqrt %359 : vector<16x1xf32>
    %361 = vector.broadcast %360 : vector<16x1xf32> to vector<16x32xf32>
    %362 = arith.mulf %357, %361 : vector<16x32xf32>
    %363 = vector.broadcast %342 : vector<1x32xf32> to vector<16x32xf32>
    %364 = arith.mulf %362, %363 : vector<16x32xf32>
    %365 = vector.broadcast %344 : vector<1x32xf32> to vector<16x32xf32>
    %366 = arith.addf %364, %365 : vector<16x32xf32>
    %c1_185 = arith.constant 1 : index
    %c0_186 = arith.constant 0 : index
    %c0_187 = arith.constant 0 : index
    %367 = vector.load %arg15[%c1_185, %c0_186, %c0_187] : memref<2x32x64xf32, #tpu.memory_space<vmem>>, vector<1x32x64xf32>
    %368 = vector.shape_cast %367 : vector<1x32x64xf32> to vector<32x64xf32>
    %cst_188 = arith.constant dense<0.000000e+00> : vector<16x64xf32>
    %369 = tpu.matmul %366, %368, %cst_188 {dimension_numbers = #tpu.dot_dimension_numbers<[1], [0], [0], [1], [0, 0, 1, 1], [], []>} : vector<16x32xf32>, vector<32x64xf32>, vector<16x64xf32> -> vector<16x64xf32>
    %c1_189 = arith.constant 1 : index
    %c0_190 = arith.constant 0 : index
    %c0_191 = arith.constant 0 : index
    %370 = vector.load %arg16[%c1_189, %c0_190, %c0_191] : memref<2x1x64xf32, #tpu.memory_space<vmem>>, vector<1x1x64xf32>
    %371 = vector.shape_cast %370 : vector<1x1x64xf32> to vector<1x64xf32>
    %372 = vector.broadcast %371 : vector<1x64xf32> to vector<16x64xf32>
    %373 = arith.addf %369, %372 : vector<16x64xf32>
    %374 = arith.mulf %373, %373 : vector<16x64xf32>
    %375 = arith.mulf %373, %374 : vector<16x64xf32>
    %cst_192 = arith.constant 4.471500e-02 : f32
    %376 = vector.broadcast %cst_192 : f32 to vector<16x64xf32>
    %377 = arith.mulf %376, %375 : vector<16x64xf32>
    %378 = arith.addf %373, %377 : vector<16x64xf32>
    %cst_193 = arith.constant 0.797884583 : f32
    %379 = vector.broadcast %cst_193 : f32 to vector<16x64xf32>
    %380 = arith.mulf %379, %378 : vector<16x64xf32>
    %381 = math.tanh %380 : vector<16x64xf32>
    %cst_194 = arith.constant 1.000000e+00 : f32
    %382 = vector.broadcast %cst_194 : f32 to vector<16x64xf32>
    %383 = arith.addf %382, %381 : vector<16x64xf32>
    %cst_195 = arith.constant 5.000000e-01 : f32
    %384 = vector.broadcast %cst_195 : f32 to vector<16x64xf32>
    %385 = arith.mulf %384, %383 : vector<16x64xf32>
    %386 = arith.mulf %373, %385 : vector<16x64xf32>
    %c1_196 = arith.constant 1 : index
    %c0_197 = arith.constant 0 : index
    %c0_198 = arith.constant 0 : index
    %387 = vector.load %arg17[%c1_196, %c0_197, %c0_198] : memref<2x64x32xf32, #tpu.memory_space<vmem>>, vector<1x64x32xf32>
    %388 = vector.shape_cast %387 : vector<1x64x32xf32> to vector<64x32xf32>
    %cst_199 = arith.constant dense<0.000000e+00> : vector<16x32xf32>
    %389 = tpu.matmul %386, %388, %cst_199 {dimension_numbers = #tpu.dot_dimension_numbers<[1], [0], [0], [1], [0, 0, 1, 1], [], []>} : vector<16x64xf32>, vector<64x32xf32>, vector<16x32xf32> -> vector<16x32xf32>
    %c1_200 = arith.constant 1 : index
    %c0_201 = arith.constant 0 : index
    %c0_202 = arith.constant 0 : index
    %390 = vector.load %arg18[%c1_200, %c0_201, %c0_202] : memref<2x1x32xf32, #tpu.memory_space<vmem>>, vector<1x1x32xf32>
    %391 = vector.shape_cast %390 : vector<1x1x32xf32> to vector<1x32xf32>
    %392 = vector.broadcast %391 : vector<1x32xf32> to vector<16x32xf32>
    %393 = arith.addf %389, %392 : vector<16x32xf32>
    %394 = arith.addf %366, %393 : vector<16x32xf32>
    %c1_203 = arith.constant 1 : index
    %c0_204 = arith.constant 0 : index
    %c0_205 = arith.constant 0 : index
    %395 = vector.load %arg19[%c1_203, %c0_204, %c0_205] : memref<2x1x32xf32, #tpu.memory_space<vmem>>, vector<1x1x32xf32>
    %396 = vector.shape_cast %395 : vector<1x1x32xf32> to vector<1x32xf32>
    %c1_206 = arith.constant 1 : index
    %c0_207 = arith.constant 0 : index
    %c0_208 = arith.constant 0 : index
    %397 = vector.load %arg20[%c1_206, %c0_207, %c0_208] : memref<2x1x32xf32, #tpu.memory_space<vmem>>, vector<1x1x32xf32>
    %398 = vector.shape_cast %397 : vector<1x1x32xf32> to vector<1x32xf32>
    %cst_209 = arith.constant dense<0.000000e+00> : vector<16xf32>
    %399 = vector.multi_reduction <add>, %394, %cst_209 [1] : vector<16x32xf32> to vector<16xf32>
    %400 = vector.shape_cast %399 : vector<16xf32> to vector<16x1xf32>
    %cst_210 = arith.constant 3.200000e+01 : f32
    %401 = vector.broadcast %cst_210 : f32 to vector<16x1xf32>
    %402 = arith.divf %400, %401 : vector<16x1xf32>
    %403 = vector.broadcast %402 : vector<16x1xf32> to vector<16x32xf32>
    %404 = arith.subf %394, %403 : vector<16x32xf32>
    %405 = arith.mulf %404, %404 : vector<16x32xf32>
    %cst_211 = arith.constant dense<0.000000e+00> : vector<16xf32>
    %406 = vector.multi_reduction <add>, %405, %cst_211 [1] : vector<16x32xf32> to vector<16xf32>
    %407 = vector.shape_cast %406 : vector<16xf32> to vector<16x1xf32>
    %cst_212 = arith.constant 3.200000e+01 : f32
    %408 = vector.broadcast %cst_212 : f32 to vector<16x1xf32>
    %409 = arith.divf %407, %408 : vector<16x1xf32>
    %410 = vector.broadcast %402 : vector<16x1xf32> to vector<16x32xf32>
    %411 = arith.subf %394, %410 : vector<16x32xf32>
    %cst_213 = arith.constant 9.99999996E-13 : f32
    %412 = vector.broadcast %cst_213 : f32 to vector<16x1xf32>
    %413 = arith.addf %409, %412 : vector<16x1xf32>
    %414 = math.rsqrt %413 : vector<16x1xf32>
    %415 = vector.broadcast %414 : vector<16x1xf32> to vector<16x32xf32>
    %416 = arith.mulf %411, %415 : vector<16x32xf32>
    %417 = vector.broadcast %396 : vector<1x32xf32> to vector<16x32xf32>
    %418 = arith.mulf %416, %417 : vector<16x32xf32>
    %419 = vector.broadcast %398 : vector<1x32xf32> to vector<16x32xf32>
    %420 = arith.addf %418, %419 : vector<16x32xf32>
    %421 = vector.extract_strided_slice %420 {offsets = [0, 0], sizes = [1, 32], strides = [1, 1]} : vector<16x32xf32> to vector<1x32xf32>
    %422 = vector.extract_strided_slice %420 {offsets = [8, 0], sizes = [1, 32], strides = [1, 1]} : vector<16x32xf32> to vector<1x32xf32>
    %423 = tpu.concatenate %421, %422 in 0 : vector<1x32xf32>, vector<1x32xf32> -> vector<2x32xf32>
    %c0_214 = arith.constant 0 : index
    %c0_215 = arith.constant 0 : index
    %424 = vector.load %arg21[%c0_214, %c0_215] : memref<32x32xf32, #tpu.memory_space<vmem>>, vector<32x32xf32>
    %cst_216 = arith.constant dense<0.000000e+00> : vector<2x32xf32>
    %425 = tpu.matmul %423, %424, %cst_216 {dimension_numbers = #tpu.dot_dimension_numbers<[1], [0], [0], [1], [0, 0, 1, 1], [], []>} : vector<2x32xf32>, vector<32x32xf32>, vector<2x32xf32> -> vector<2x32xf32>
    %c0_217 = arith.constant 0 : index
    %c0_218 = arith.constant 0 : index
    %426 = vector.load %arg22[%c0_217, %c0_218] : memref<1x32xf32, #tpu.memory_space<vmem>>, vector<1x32xf32>
    %427 = vector.broadcast %426 : vector<1x32xf32> to vector<2x32xf32>
    %428 = arith.addf %425, %427 : vector<2x32xf32>
    %429 = math.tanh %428 : vector<2x32xf32>
    %c0_219 = arith.constant 0 : index
    %c0_220 = arith.constant 0 : index
    %430 = vector.load %arg23[%c0_219, %c0_220] : memref<32x2xf32, #tpu.memory_space<vmem>>, vector<32x2xf32>
    %cst_221 = arith.constant dense<0.000000e+00> : vector<2x2xf32>
    %431 = tpu.matmul %429, %430, %cst_221 {dimension_numbers = #tpu.dot_dimension_numbers<[1], [0], [0], [1], [0, 0, 1, 1], [], []>} : vector<2x32xf32>, vector<32x2xf32>, vector<2x2xf32> -> vector<2x2xf32>
    %c0_222 = arith.constant 0 : index
    %c0_223 = arith.constant 0 : index
    %432 = vector.load %arg24[%c0_222, %c0_223] : memref<1x2xf32, #tpu.memory_space<vmem>>, vector<1x2xf32>
    %433 = vector.broadcast %432 : vector<1x2xf32> to vector<2x2xf32>
    %434 = arith.addf %431, %433 : vector<2x2xf32>
    %c0_224 = arith.constant 0 : index
    %c0_225 = arith.constant 0 : index
    %435 = vector.load %arg25[%c0_224, %c0_225] : memref<2x2xf32, #tpu.memory_space<vmem>>, vector<2x2xf32>
    tpu.vector_store %arg25[%c0_224, %c0_225], %434 {strides = array<i32>} : memref<2x2xf32, #tpu.memory_space<vmem>>, vector<2x2xf32>,
    return
  }
  func.func @transform_0(%arg0: i32) -> (i32, i32) {
    %c0_i32 = arith.constant 0 : i32
    %c0_i32_0 = arith.constant 0 : i32
    %c0_i32_1 = arith.constant 0 : i32
    return %c0_i32, %c0_i32_0 : i32, i32
  }
  func.func @transform_1(%arg0: i32) -> (i32, i32, i32) {
    %c0_i32 = arith.constant 0 : i32
    %c0_i32_0 = arith.constant 0 : i32
    %c0_i32_1 = arith.constant 0 : i32
    %c0_i32_2 = arith.constant 0 : i32
    return %c0_i32, %c0_i32_0, %c0_i32_1 : i32, i32, i32
  }
  func.func @transform_2(%arg0: i32) -> (i32, i32) {
    %c0_i32 = arith.constant 0 : i32
    %c0_i32_0 = arith.constant 0 : i32
    %c0_i32_1 = arith.constant 0 : i32
    return %c0_i32, %c0_i32_0 : i32, i32
  }
  func.func @transform_3(%arg0: i32) -> (i32, i32) {
    %c0_i32 = arith.constant 0 : i32
    %c0_i32_0 = arith.constant 0 : i32
    %c0_i32_1 = arith.constant 0 : i32
    return %c0_i32, %c0_i32_0 : i32, i32
  }
  func.func @transform_4(%arg0: i32) -> (i32, i32, i32) {
    %c0_i32 = arith.constant 0 : i32
    %c0_i32_0 = arith.constant 0 : i32
    %c0_i32_1 = arith.constant 0 : i32
    %c0_i32_2 = arith.constant 0 : i32
    return %c0_i32, %c0_i32_0, %c0_i32_1 : i32, i32, i32
  }
  func.func @transform_5(%arg0: i32) -> (i32, i32, i32) {
    %c0_i32 = arith.constant 0 : i32
    %c0_i32_0 = arith.constant 0 : i32
    %c0_i32_1 = arith.constant 0 : i32
    %c0_i32_2 = arith.constant 0 : i32
    return %c0_i32, %c0_i32_0, %c0_i32_1 : i32, i32, i32
  }
  func.func @transform_6(%arg0: i32) -> (i32, i32, i32) {
    %c0_i32 = arith.constant 0 : i32
    %c0_i32_0 = arith.constant 0 : i32
    %c0_i32_1 = arith.constant 0 : i32
    %c0_i32_2 = arith.constant 0 : i32
    return %c0_i32, %c0_i32_0, %c0_i32_1 : i32, i32, i32
  }
  func.func @transform_7(%arg0: i32) -> (i32, i32, i32) {
    %c0_i32 = arith.constant 0 : i32
    %c0_i32_0 = arith.constant 0 : i32
    %c0_i32_1 = arith.constant 0 : i32
    %c0_i32_2 = arith.constant 0 : i32
    return %c0_i32, %c0_i32_0, %c0_i32_1 : i32, i32, i32
  }
  func.func @transform_8(%arg0: i32) -> (i32, i32, i32) {
    %c0_i32 = arith.constant 0 : i32
    %c0_i32_0 = arith.constant 0 : i32
    %c0_i32_1 = arith.constant 0 : i32
    %c0_i32_2 = arith.constant 0 : i32
    return %c0_i32, %c0_i32_0, %c0_i32_1 : i32, i32, i32
  }
  func.func @transform_9(%arg0: i32) -> (i32, i32, i32) {
    %c0_i32 = arith.constant 0 : i32
    %c0_i32_0 = arith.constant 0 : i32
    %c0_i32_1 = arith.constant 0 : i32
    %c0_i32_2 = arith.constant 0 : i32
    return %c0_i32, %c0_i32_0, %c0_i32_1 : i32, i32, i32
  }
  func.func @transform_10(%arg0: i32) -> (i32, i32, i32) {
    %c0_i32 = arith.constant 0 : i32
    %c0_i32_0 = arith.constant 0 : i32
    %c0_i32_1 = arith.constant 0 : i32
    %c0_i32_2 = arith.constant 0 : i32
    return %c0_i32, %c0_i32_0, %c0_i32_1 : i32, i32, i32
  }
  func.func @transform_11(%arg0: i32) -> (i32, i32, i32) {
    %c0_i32 = arith.constant 0 : i32
    %c0_i32_0 = arith.constant 0 : i32
    %c0_i32_1 = arith.constant 0 : i32
    %c0_i32_2 = arith.constant 0 : i32
    return %c0_i32, %c0_i32_0, %c0_i32_1 : i32, i32, i32
  }
  func.func @transform_12(%arg0: i32) -> (i32, i32, i32) {
    %c0_i32 = arith.constant 0 : i32
    %c0_i32_0 = arith.constant 0 : i32
    %c0_i32_1 = arith.constant 0 : i32
    %c0_i32_2 = arith.constant 0 : i32
    return %c0_i32, %c0_i32_0, %c0_i32_1 : i32, i32, i32
  }
  func.func @transform_13(%arg0: i32) -> (i32, i32, i32) {
    %c0_i32 = arith.constant 0 : i32
    %c0_i32_0 = arith.constant 0 : i32
    %c0_i32_1 = arith.constant 0 : i32
    %c0_i32_2 = arith.constant 0 : i32
    return %c0_i32, %c0_i32_0, %c0_i32_1 : i32, i32, i32
  }
  func.func @transform_14(%arg0: i32) -> (i32, i32, i32) {
    %c0_i32 = arith.constant 0 : i32
    %c0_i32_0 = arith.constant 0 : i32
    %c0_i32_1 = arith.constant 0 : i32
    %c0_i32_2 = arith.constant 0 : i32
    return %c0_i32, %c0_i32_0, %c0_i32_1 : i32, i32, i32
  }
  func.func @transform_15(%arg0: i32) -> (i32, i32, i32) {
    %c0_i32 = arith.constant 0 : i32
    %c0_i32_0 = arith.constant 0 : i32
    %c0_i32_1 = arith.constant 0 : i32
    %c0_i32_2 = arith.constant 0 : i32
    return %c0_i32, %c0_i32_0, %c0_i32_1 : i32, i32, i32
  }
  func.func @transform_16(%arg0: i32) -> (i32, i32, i32) {
    %c0_i32 = arith.constant 0 : i32
    %c0_i32_0 = arith.constant 0 : i32
    %c0_i32_1 = arith.constant 0 : i32
    %c0_i32_2 = arith.constant 0 : i32
    return %c0_i32, %c0_i32_0, %c0_i32_1 : i32, i32, i32
  }
  func.func @transform_17(%arg0: i32) -> (i32, i32, i32) {
    %c0_i32 = arith.constant 0 : i32
    %c0_i32_0 = arith.constant 0 : i32
    %c0_i32_1 = arith.constant 0 : i32
    %c0_i32_2 = arith.constant 0 : i32
    return %c0_i32, %c0_i32_0, %c0_i32_1 : i32, i32, i32
  }
  func.func @transform_18(%arg0: i32) -> (i32, i32, i32) {
    %c0_i32 = arith.constant 0 : i32
    %c0_i32_0 = arith.constant 0 : i32
    %c0_i32_1 = arith.constant 0 : i32
    %c0_i32_2 = arith.constant 0 : i32
    return %c0_i32, %c0_i32_0, %c0_i32_1 : i32, i32, i32
  }
  func.func @transform_19(%arg0: i32) -> (i32, i32, i32) {
    %c0_i32 = arith.constant 0 : i32
    %c0_i32_0 = arith.constant 0 : i32
    %c0_i32_1 = arith.constant 0 : i32
    %c0_i32_2 = arith.constant 0 : i32
    return %c0_i32, %c0_i32_0, %c0_i32_1 : i32, i32, i32
  }
  func.func @transform_20(%arg0: i32) -> (i32, i32) {
    %c0_i32 = arith.constant 0 : i32
    %c0_i32_0 = arith.constant 0 : i32
    %c0_i32_1 = arith.constant 0 : i32
    return %c0_i32, %c0_i32_0 : i32, i32
  }
  func.func @transform_21(%arg0: i32) -> (i32, i32) {
    %c0_i32 = arith.constant 0 : i32
    %c0_i32_0 = arith.constant 0 : i32
    %c0_i32_1 = arith.constant 0 : i32
    return %c0_i32, %c0_i32_0 : i32, i32
  }
  func.func @transform_22(%arg0: i32) -> (i32, i32) {
    %c0_i32 = arith.constant 0 : i32
    %c0_i32_0 = arith.constant 0 : i32
    %c0_i32_1 = arith.constant 0 : i32
    return %c0_i32, %c0_i32_0 : i32, i32
  }
  func.func @transform_23(%arg0: i32) -> (i32, i32) {
    %c0_i32 = arith.constant 0 : i32
    %c0_i32_0 = arith.constant 0 : i32
    %c0_i32_1 = arith.constant 0 : i32
    return %c0_i32, %c0_i32_0 : i32, i32
  }
  func.func @transform_24(%arg0: i32) -> (i32, i32) {
    %c0_i32 = arith.constant 0 : i32
    %c0_i32_0 = arith.constant 0 : i32
    %c0_i32_1 = arith.constant 0 : i32
    return %c0_i32, %c0_i32_0 : i32, i32
  }
}

</mosaic_0001>

<llo_original>
// kernel: bert_classifier_forward.1
$region0: #{bert_classifier_forward.1}
  #allocation0 [shape = 'u32[]', space=smem, size = 0x4, offset = 0x4, fixed_abs, tag = 'smem constant byte address 0x4 - core index']
  #allocation1 [shape = 'u32[144,128]{1,0:T(1,128)}', space=vmem, size = 0x12000, scoped, tag = 'internal scratch']
  #allocation2 [shape = 'f32[16,32]{1,0:T(8,128)}', space=vmem, size = 0x2000, scoped, tag = 'scratch operand']
  %s0 = inlined_call_operand.vmem [shape: f32[16,32], index: 0, kind: input, shape index: {}]
  %s1 = inlined_call_operand.vmem [shape: f32[2,1,8], index: 1, kind: input, shape index: {}]
  %s2 = inlined_call_operand.vmem [shape: f32[1,32], index: 2, kind: input, shape index: {}]
  %s3 = inlined_call_operand.vmem [shape: f32[1,32], index: 3, kind: input, shape index: {}]
  %s4 = inlined_call_operand.vmem [shape: f32[2,32,32], index: 4, kind: input, shape index: {}]
  %s5 = inlined_call_operand.vmem [shape: f32[2,1,32], index: 5, kind: input, shape index: {}]
  %s6 = inlined_call_operand.vmem [shape: f32[2,32,32], index: 6, kind: input, shape index: {}]
  %s7 = inlined_call_operand.vmem [shape: f32[2,1,32], index: 7, kind: input, shape index: {}]
  %s8 = inlined_call_operand.vmem [shape: f32[2,32,32], index: 8, kind: input, shape index: {}]
  %s9 = inlined_call_operand.vmem [shape: f32[2,1,32], index: 9, kind: input, shape index: {}]
  %s10 = inlined_call_operand.vmem [shape: f32[2,32,32], index: 10, kind: input, shape index: {}]
  %s11 = inlined_call_operand.vmem [shape: f32[2,1,32], index: 11, kind: input, shape index: {}]
  %s12 = inlined_call_operand.vmem [shape: f32[2,1,32], index: 12, kind: input, shape index: {}]
  %s13 = inlined_call_operand.vmem [shape: f32[2,1,32], index: 13, kind: input, shape index: {}]
  %s14 = inlined_call_operand.vmem [shape: f32[2,32,64], index: 14, kind: input, shape index: {}]
  %s15 = inlined_call_operand.vmem [shape: f32[2,1,64], index: 15, kind: input, shape index: {}]
  %s16 = inlined_call_operand.vmem [shape: f32[2,64,32], index: 16, kind: input, shape index: {}]
  %s17 = inlined_call_operand.vmem [shape: f32[2,1,32], index: 17, kind: input, shape index: {}]
  %s18 = inlined_call_operand.vmem [shape: f32[2,1,32], index: 18, kind: input, shape index: {}]
  %s19 = inlined_call_operand.vmem [shape: f32[2,1,32], index: 19, kind: input, shape index: {}]
  %s20 = inlined_call_operand.vmem [shape: f32[32,32], index: 20, kind: input, shape index: {}]
  %s21 = inlined_call_operand.vmem [shape: f32[1,32], index: 21, kind: input, shape index: {}]
  %s22 = inlined_call_operand.vmem [shape: f32[32,2], index: 22, kind: input, shape index: {}]
  %s23 = inlined_call_operand.vmem [shape: f32[1,2], index: 23, kind: input, shape index: {}]
  %s24 = inlined_call_operand.hbm [shape: f32[2,2], index: 24, kind: output, shape index: {}]
  %s25 = sld [smem:[#allocation0]]
  $region106: #{bert_classifier_forward.1} parent=0
    _
  %s27 = ssub.s32 1, %s25
  %s28 = scalar_select 0, %s27, %s25
  $region1: #{bert_classifier_forward.1} parent=0
    #allocation3 [shape = 'u8[1024]{0}', space=vmem, size = 0x400, scoped, tag = 'output window, operand 0, single buffered']
    #allocation4 [shape = 's32[1]{0}', space=sflag, size = 0x4, scoped, tag = 'scoped memory for bert_classifier_forward.1']
    %29 = vsyncpa [#allocation4], 0
    // Predicated region
    $region2: #{bert_classifier_forward.1} parent=1 // pred_check
      _
    $region3: #{bert_classifier_forward.1} parent=1 // pred_check_branch
      %31 = sbr.rel (0) target = $region5
    $region4: #{bert_classifier_forward.1} parent=1 // pred_region
      _
    $region5: #{bert_classifier_forward.1} parent=1 // pred_fallthru
      _
    // Predicated region
    $region6: #{bert_classifier_forward.1} parent=1 // pred_check
      _
    $region7: #{bert_classifier_forward.1} parent=1 // pred_check_branch
      %33 = sbr.rel (0) target = $region9
    $region8: #{bert_classifier_forward.1} parent=1 // pred_region
      _
    $region9: #{bert_classifier_forward.1} parent=1 // pred_fallthru
      _
    // Predicated region
    $region10: #{bert_classifier_forward.1} parent=1 // pred_check
      _
    $region11: #{bert_classifier_forward.1} parent=1 // pred_check_branch
      %35 = sbr.rel (0) target = $region13
    $region12: #{bert_classifier_forward.1} parent=1 // pred_region
      _
    $region13: #{bert_classifier_forward.1} parent=1 // pred_fallthru
      _
    // Predicated region
    $region14: #{bert_classifier_forward.1} parent=1 // pred_check
      _
    $region15: #{bert_classifier_forward.1} parent=1 // pred_check_branch
      %37 = sbr.rel (0) target = $region17
    $region16: #{bert_classifier_forward.1} parent=1 // pred_region
      _
    $region17: #{bert_classifier_forward.1} parent=1 // pred_fallthru
      _
    // Predicated region
    $region18: #{bert_classifier_forward.1} parent=1 // pred_check
      _
    $region19: #{bert_classifier_forward.1} parent=1 // pred_check_branch
      %39 = sbr.rel (0) target = $region21
    $region20: #{bert_classifier_forward.1} parent=1 // pred_region
      _
    $region21: #{bert_classifier_forward.1} parent=1 // pred_fallthru
      _
    // Predicated region
    $region22: #{bert_classifier_forward.1} parent=1 // pred_check
      _
    $region23: #{bert_classifier_forward.1} parent=1 // pred_check_branch
      %41 = sbr.rel (0) target = $region25
    $region24: #{bert_classifier_forward.1} parent=1 // pred_region
      _
    $region25: #{bert_classifier_forward.1} parent=1 // pred_fallthru
      _
    // Predicated region
    $region26: #{bert_classifier_forward.1} parent=1 // pred_check
      _
    $region27: #{bert_classifier_forward.1} parent=1 // pred_check_branch
      %43 = sbr.rel (0) target = $region29
    $region28: #{bert_classifier_forward.1} parent=1 // pred_region
      _
    $region29: #{bert_classifier_forward.1} parent=1 // pred_fallthru
      _
    // Predicated region
    $region30: #{bert_classifier_forward.1} parent=1 // pred_check
      _
    $region31: #{bert_classifier_forward.1} parent=1 // pred_check_branch
      %45 = sbr.rel (0) target = $region33
    $region32: #{bert_classifier_forward.1} parent=1 // pred_region
      _
    $region33: #{bert_classifier_forward.1} parent=1 // pred_fallthru
      _
    // Predicated region
    $region34: #{bert_classifier_forward.1} parent=1 // pred_check
      _
    $region35: #{bert_classifier_forward.1} parent=1 // pred_check_branch
      %47 = sbr.rel (0) target = $region37
    $region36: #{bert_classifier_forward.1} parent=1 // pred_region
      _
    $region37: #{bert_classifier_forward.1} parent=1 // pred_fallthru
      _
    // Predicated region
    $region38: #{bert_classifier_forward.1} parent=1 // pred_check
      _
    $region39: #{bert_classifier_forward.1} parent=1 // pred_check_branch
      %49 = sbr.rel (0) target = $region41
    $region40: #{bert_classifier_forward.1} parent=1 // pred_region
      _
    $region41: #{bert_classifier_forward.1} parent=1 // pred_fallthru
      _
    // Predicated region
    $region42: #{bert_classifier_forward.1} parent=1 // pred_check
      _
    $region43: #{bert_classifier_forward.1} parent=1 // pred_check_branch
      %51 = sbr.rel (0) target = $region45
    $region44: #{bert_classifier_forward.1} parent=1 // pred_region
      _
    $region45: #{bert_classifier_forward.1} parent=1 // pred_fallthru
      _
    // Predicated region
    $region46: #{bert_classifier_forward.1} parent=1 // pred_check
      _
    $region47: #{bert_classifier_forward.1} parent=1 // pred_check_branch
      %53 = sbr.rel (0) target = $region49
    $region48: #{bert_classifier_forward.1} parent=1 // pred_region
      _
    $region49: #{bert_classifier_forward.1} parent=1 // pred_fallthru
      _
    // Predicated region
    $region50: #{bert_classifier_forward.1} parent=1 // pred_check
      _
    $region51: #{bert_classifier_forward.1} parent=1 // pred_check_branch
      %55 = sbr.rel (0) target = $region53
    $region52: #{bert_classifier_forward.1} parent=1 // pred_region
      _
    $region53: #{bert_classifier_forward.1} parent=1 // pred_fallthru
      _
    // Predicated region
    $region54: #{bert_classifier_forward.1} parent=1 // pred_check
      _
    $region55: #{bert_classifier_forward.1} parent=1 // pred_check_branch
      %57 = sbr.rel (0) target = $region57
    $region56: #{bert_classifier_forward.1} parent=1 // pred_region
      _
    $region57: #{bert_classifier_forward.1} parent=1 // pred_fallthru
      _
    // Predicated region
    $region58: #{bert_classifier_forward.1} parent=1 // pred_check
      _
    $region59: #{bert_classifier_forward.1} parent=1 // pred_check_branch
      %59 = sbr.rel (0) target = $region61
    $region60: #{bert_classifier_forward.1} parent=1 // pred_region
      _
    $region61: #{bert_classifier_forward.1} parent=1 // pred_fallthru
      _
    // Predicated region
    $region62: #{bert_classifier_forward.1} parent=1 // pred_check
      _
    $region63: #{bert_classifier_forward.1} parent=1 // pred_check_branch
      %61 = sbr.rel (0) target = $region65
    $region64: #{bert_classifier_forward.1} parent=1 // pred_region
      _
    $region65: #{bert_classifier_forward.1} parent=1 // pred_fallthru
      _
    // Predicated region
    $region66: #{bert_classifier_forward.1} parent=1 // pred_check
      _
    $region67: #{bert_classifier_forward.1} parent=1 // pred_check_branch
      %63 = sbr.rel (0) target = $region69
    $region68: #{bert_classifier_forward.1} parent=1 // pred_region
      _
    $region69: #{bert_classifier_forward.1} parent=1 // pred_fallthru
      _
    // Predicated region
    $region70: #{bert_classifier_forward.1} parent=1 // pred_check
      _
    $region71: #{bert_classifier_forward.1} parent=1 // pred_check_branch
      %65 = sbr.rel (0) target = $region73
    $region72: #{bert_classifier_forward.1} parent=1 // pred_region
      _
    $region73: #{bert_classifier_forward.1} parent=1 // pred_fallthru
      _
    // Predicated region
    $region74: #{bert_classifier_forward.1} parent=1 // pred_check
      _
    $region75: #{bert_classifier_forward.1} parent=1 // pred_check_branch
      %67 = sbr.rel (0) target = $region77
    $region76: #{bert_classifier_forward.1} parent=1 // pred_region
      _
    $region77: #{bert_classifier_forward.1} parent=1 // pred_fallthru
      _
    // Predicated region
    $region78: #{bert_classifier_forward.1} parent=1 // pred_check
      _
    $region79: #{bert_classifier_forward.1} parent=1 // pred_check_branch
      %69 = sbr.rel (0) target = $region81
    $region80: #{bert_classifier_forward.1} parent=1 // pred_region
      _
    $region81: #{bert_classifier_forward.1} parent=1 // pred_fallthru
      _
    // Predicated region
    $region82: #{bert_classifier_forward.1} parent=1 // pred_check
      _
    $region83: #{bert_classifier_forward.1} parent=1 // pred_check_branch
      %71 = sbr.rel (0) target = $region85
    $region84: #{bert_classifier_forward.1} parent=1 // pred_region
      _
    $region85: #{bert_classifier_forward.1} parent=1 // pred_fallthru
      _
    // Predicated region
    $region86: #{bert_classifier_forward.1} parent=1 // pred_check
      _
    $region87: #{bert_classifier_forward.1} parent=1 // pred_check_branch
      %73 = sbr.rel (0) target = $region89
    $region88: #{bert_classifier_forward.1} parent=1 // pred_region
      _
    $region89: #{bert_classifier_forward.1} parent=1 // pred_fallthru
      _
    // Predicated region
    $region90: #{bert_classifier_forward.1} parent=1 // pred_check
      _
    $region91: #{bert_classifier_forward.1} parent=1 // pred_check_branch
      %75 = sbr.rel (0) target = $region93
    $region92: #{bert_classifier_forward.1} parent=1 // pred_region
      _
    $region93: #{bert_classifier_forward.1} parent=1 // pred_fallthru
      _
    // Predicated region
    $region94: #{bert_classifier_forward.1} parent=1 // pred_check
      _
    $region95: #{bert_classifier_forward.1} parent=1 // pred_check_branch
      %77 = sbr.rel (0) target = $region97
    $region96: #{bert_classifier_forward.1} parent=1 // pred_region
      _
    $region97: #{bert_classifier_forward.1} parent=1 // pred_fallthru
      _
    %v78 = vld [vmem:[%s0] sm:$0xff]
    %v79 = vld [vmem:[%s0 + $0x8] sm:$0xff]
    %v80 = vld [vmem:[%s2] sm:$0x1]
    %v81 = vld [vmem:[%s3] sm:$0x1]
    %vm82 = vcmask 261120
    %v83 = vsel %vm82, %v78, 0.0
    %84 = vadd.xlane.f32.xlu0 %v83
    %v85 = vpop.xlane.xlu0 %84
    %v86 = vsel %vm82, %v79, 0.0
    %87 = vadd.xlane.f32.xlu0 %v86
    %v88 = vpop.xlane.xlu0 %87
    %v89 = vrcp.pop 32.0
    %v90 = vmul.f32 %v85, %v89
    %v91 = vmul.f32 %v88, %v89
    %v92 = vsub.f32 %v78, %v90
    %v93 = vsub.f32 %v79, %v91
    %v94 = vmul.f32 %v92, %v92
    %v95 = vmul.f32 %v93, %v93
    %v96 = vsel %vm82, %v94, 0.0
    %97 = vadd.xlane.f32.xlu0 %v96
    %v98 = vpop.xlane.xlu0 %97
    %v99 = vsel %vm82, %v95, 0.0
    %100 = vadd.xlane.f32.xlu0 %v99
    %v101 = vpop.xlane.xlu0 %100
    %v102 = vmul.f32 %v98, %v89
    %v103 = vmul.f32 %v101, %v89
    %v104 = vadd.f32 %v102, 1e-12
    %v105 = vadd.f32 %v103, 1e-12
    %v106 = vrsqrt.pop %v104
    %v107 = vrsqrt.pop %v105
    %v108 = vmul.f32 %v92, %v106
    %v109 = vmul.f32 %v93, %v107
    %v111 = vlaneseq
    %v112 = vshrl.u32 %v111, 7
    %v113 = vsub.s32 0, %v112
    %v114 = vrot.slane %v80, %v113
    %v116 = vmul.f32 %v108, %v114
    %v117 = vmul.f32 %v109, %v114
    %v119 = vlaneseq
    %v120 = vshrl.u32 %v119, 7
    %v121 = vsub.s32 0, %v120
    %v122 = vrot.slane %v81, %v121
    %v124 = vadd.f32 %v116, %v122
    %v125 = vadd.f32 %v117, %v122
    %v126 = vld [vmem:[%s4] sm:$0xff]
    %v127 = vld [vmem:[%s4 + $0x8] sm:$0xff]
    %v128 = vld [vmem:[%s4 + $0x10] sm:$0xff]
    %v129 = vld [vmem:[%s4 + $0x18] sm:$0xff]
    %v130 = vld [vmem:[%s5] sm:$0x1]
    %v132 = vlaneseq
    %v133 = vshrl.u32 %v132, 7
    %v134 = vsub.s32 0, %v133
    %v135 = vrot.slane %v130, %v134
    %v138 = vsel %vm82, %v124, 0
    %v141 = vsel %vm82, %v125, 0
    %143 = vmatprep.subr.mxu0 0.0
    %144 = vmatpush1.msra.mxu0 0.0
    %145 = vmatprep.subr.mxu0 0.0
    %146 = vmatpush1.msra.mxu0 0.0
    %147 = vmatprep.subr.mxu0 0.0
    %148 = vmatpush1.msra.mxu0 0.0
    %149 = vmatprep.subr.mxu0 0.0
    %150 = vmatpush1.msra.mxu0 0.0
    %151 = vmatprep.subr.mxu0 0.0
    %152 = vmatpush1.msra.mxu0 0.0
    %153 = vmatprep.subr.mxu0 0.0
    %154 = vmatpush1.msra.mxu0 0.0
    %155 = vmatprep.subr.mxu0 0.0
    %156 = vmatpush1.msra.mxu0 0.0
    %157 = vmatprep.subr.mxu0 0.0
    %158 = vmatpush1.msra.mxu0 0.0
    %159 = vmatprep.subr.mxu0 0.0
    %160 = vmatpush1.msra.mxu0 0.0
    %161 = vmatprep.subr.mxu0 0.0
    %162 = vmatpush1.msra.mxu0 0.0
    %163 = vmatprep.subr.mxu0 0.0
    %164 = vmatpush1.msra.mxu0 0.0
    %165 = vmatprep.subr.mxu0 0.0
    %166 = vmatpush1.msra.mxu0 0.0
    %167 = vmatprep.subr.mxu0 0.0
    %168 = vmatpush1.msra.mxu0 %v129
    %169 = vmatprep.subr.mxu0 0.0
    %170 = vmatpush1.msra.mxu0 %v128
    %171 = vmatprep.subr.mxu0 0.0
    %172 = vmatpush1.msra.mxu0 %v127
    %173 = vmatprep.subr.mxu0 0.0
    %174 = vmatpush1.msra.mxu0 %v126
    %175 = vmatprep.subr.mxu0 0.0
    %176 = vmatpush2.msra.mxu0 0.0
    %177 = vmatprep.subr.mxu0 0.0
    %178 = vmatpush2.msra.mxu0 0.0
    %179 = vmatprep.subr.mxu0 0.0
    %180 = vmatpush2.msra.mxu0 0.0
    %181 = vmatprep.subr.mxu0 0.0
    %182 = vmatpush2.msra.mxu0 0.0
    %183 = vmatprep.subr.mxu0 0.0
    %184 = vmatpush2.msra.mxu0 0.0
    %185 = vmatprep.subr.mxu0 0.0
    %186 = vmatpush2.msra.mxu0 0.0
    %187 = vmatprep.subr.mxu0 0.0
    %188 = vmatpush2.msra.mxu0 0.0
    %189 = vmatprep.subr.mxu0 0.0
    %190 = vmatpush2.msra.mxu0 0.0
    %191 = vmatprep.subr.mxu0 0.0
    %192 = vmatpush2.msra.mxu0 0.0
    %193 = vmatprep.subr.mxu0 0.0
    %194 = vmatpush2.msra.mxu0 0.0
    %195 = vmatprep.subr.mxu0 0.0
    %196 = vmatpush2.msra.mxu0 0.0
    %197 = vmatprep.subr.mxu0 0.0
    %198 = vmatpush2.msra.mxu0 0.0
    %199 = vmatprep.subr.mxu0 0.0
    %200 = vmatpush2.msra.mxu0 0.0
    %201 = vmatprep.subr.mxu0 0.0
    %202 = vmatpush2.msra.mxu0 0.0
    %203 = vmatprep.subr.mxu0 0.0
    %204 = vmatpush2.msra.mxu0 0.0
    %205 = vmatprep.subr.mxu0 0.0
    %206 = vmatpush2.msra.mxu0 0.0
    %207 = vmatprep.mubr.f32.mxu0 0.0
    %208 = vmatmul.mubr.f32.gmra.mxu0 %v138
    %v209 = vpop.f32.mrf.mxu0
    %v210 = vadd.f32 %v135, %v209
    %v211 = vpop.f32.mrf.mxu0
    %212 = vmatprep.mubr.f32.mxu0 0.0
    %213 = vmatmul.mubr.f32.gmra.mxu0 %v141
    %v214 = vpop.f32.mrf.mxu0
    %v215 = vadd.f32 %v135, %v214
    %v216 = vpop.f32.mrf.mxu0
    %217 = vdwg.mxu0
    %v218 = vld [vmem:[%s6] sm:$0xff]
    %v219 = vld [vmem:[%s6 + $0x8] sm:$0xff]
    %v220 = vld [vmem:[%s6 + $0x10] sm:$0xff]
    %v221 = vld [vmem:[%s6 + $0x18] sm:$0xff]
    %v222 = vld [vmem:[%s7] sm:$0x1]
    %v224 = vlaneseq
    %v225 = vshrl.u32 %v224, 7
    %v226 = vsub.s32 0, %v225
    %v227 = vrot.slane %v222, %v226
    %229 = vmatprep.subr.mxu0 0.0
    %230 = vmatpush1.msra.mxu0 0.0
    %231 = vmatprep.subr.mxu0 0.0
    %232 = vmatpush1.msra.mxu0 0.0
    %233 = vmatprep.subr.mxu0 0.0
    %234 = vmatpush1.msra.mxu0 0.0
    %235 = vmatprep.subr.mxu0 0.0
    %236 = vmatpush1.msra.mxu0 0.0
    %237 = vmatprep.subr.mxu0 0.0
    %238 = vmatpush1.msra.mxu0 0.0
    %239 = vmatprep.subr.mxu0 0.0
    %240 = vmatpush1.msra.mxu0 0.0
    %241 = vmatprep.subr.mxu0 0.0
    %242 = vmatpush1.msra.mxu0 0.0
    %243 = vmatprep.subr.mxu0 0.0
    %244 = vmatpush1.msra.mxu0 0.0
    %245 = vmatprep.subr.mxu0 0.0
    %246 = vmatpush1.msra.mxu0 0.0
    %247 = vmatprep.subr.mxu0 0.0
    %248 = vmatpush1.msra.mxu0 0.0
    %249 = vmatprep.subr.mxu0 0.0
    %250 = vmatpush1.msra.mxu0 0.0
    %251 = vmatprep.subr.mxu0 0.0
    %252 = vmatpush1.msra.mxu0 0.0
    %253 = vmatprep.subr.mxu0 0.0
    %254 = vmatpush1.msra.mxu0 %v221
    %255 = vmatprep.subr.mxu0 0.0
    %256 = vmatpush1.msra.mxu0 %v220
    %257 = vmatprep.subr.mxu0 0.0
    %258 = vmatpush1.msra.mxu0 %v219
    %259 = vmatprep.subr.mxu0 0.0
    %260 = vmatpush1.msra.mxu0 %v218
    %261 = vmatprep.subr.mxu0 0.0
    %262 = vmatpush2.msra.mxu0 0.0
    %263 = vmatprep.subr.mxu0 0.0
    %264 = vmatpush2.msra.mxu0 0.0
    %265 = vmatprep.subr.mxu0 0.0
    %266 = vmatpush2.msra.mxu0 0.0
    %267 = vmatprep.subr.mxu0 0.0
    %268 = vmatpush2.msra.mxu0 0.0
    %269 = vmatprep.subr.mxu0 0.0
    %270 = vmatpush2.msra.mxu0 0.0
    %271 = vmatprep.subr.mxu0 0.0
    %272 = vmatpush2.msra.mxu0 0.0
    %273 = vmatprep.subr.mxu0 0.0
    %274 = vmatpush2.msra.mxu0 0.0
    %275 = vmatprep.subr.mxu0 0.0
    %276 = vmatpush2.msra.mxu0 0.0
    %277 = vmatprep.subr.mxu0 0.0
    %278 = vmatpush2.msra.mxu0 0.0
    %279 = vmatprep.subr.mxu0 0.0
    %280 = vmatpush2.msra.mxu0 0.0
    %281 = vmatprep.subr.mxu0 0.0
    %282 = vmatpush2.msra.mxu0 0.0
    %283 = vmatprep.subr.mxu0 0.0
    %284 = vmatpush2.msra.mxu0 0.0
    %285 = vmatprep.subr.mxu0 0.0
    %286 = vmatpush2.msra.mxu0 0.0
    %287 = vmatprep.subr.mxu0 0.0
    %288 = vmatpush2.msra.mxu0 0.0
    %289 = vmatprep.subr.mxu0 0.0
    %290 = vmatpush2.msra.mxu0 0.0
    %291 = vmatprep.subr.mxu0 0.0
    %292 = vmatpush2.msra.mxu0 0.0
    %293 = vmatprep.mubr.f32.mxu0 0.0
    %294 = vmatmul.mubr.f32.gmra.mxu0 %v138
    %v295 = vpop.f32.mrf.mxu0
    %v296 = vadd.f32 %v227, %v295
    %v297 = vpop.f32.mrf.mxu0
    %298 = vmatprep.mubr.f32.mxu0 0.0
    %299 = vmatmul.mubr.f32.gmra.mxu0 %v141
    %v300 = vpop.f32.mrf.mxu0
    %v301 = vadd.f32 %v227, %v300
    %v302 = vpop.f32.mrf.mxu0
    %303 = vdwg.mxu0
    %v304 = vld [vmem:[%s8] sm:$0xff]
    %v305 = vld [vmem:[%s8 + $0x8] sm:$0xff]
    %v306 = vld [vmem:[%s8 + $0x10] sm:$0xff]
    %v307 = vld [vmem:[%s8 + $0x18] sm:$0xff]
    %v308 = vld [vmem:[%s9] sm:$0x1]
    %v310 = vlaneseq
    %v311 = vshrl.u32 %v310, 7
    %v312 = vsub.s32 0, %v311
    %v313 = vrot.slane %v308, %v312
    %315 = vmatprep.subr.mxu0 0.0
    %316 = vmatpush1.msra.mxu0 0.0
    %317 = vmatprep.subr.mxu0 0.0
    %318 = vmatpush1.msra.mxu0 0.0
    %319 = vmatprep.subr.mxu0 0.0
    %320 = vmatpush1.msra.mxu0 0.0
    %321 = vmatprep.subr.mxu0 0.0
    %322 = vmatpush1.msra.mxu0 0.0
    %323 = vmatprep.subr.mxu0 0.0
    %324 = vmatpush1.msra.mxu0 0.0
    %325 = vmatprep.subr.mxu0 0.0
    %326 = vmatpush1.msra.mxu0 0.0
    %327 = vmatprep.subr.mxu0 0.0
    %328 = vmatpush1.msra.mxu0 0.0
    %329 = vmatprep.subr.mxu0 0.0
    %330 = vmatpush1.msra.mxu0 0.0
    %331 = vmatprep.subr.mxu0 0.0
    %332 = vmatpush1.msra.mxu0 0.0
    %333 = vmatprep.subr.mxu0 0.0
    %334 = vmatpush1.msra.mxu0 0.0
    %335 = vmatprep.subr.mxu0 0.0
    %336 = vmatpush1.msra.mxu0 0.0
    %337 = vmatprep.subr.mxu0 0.0
    %338 = vmatpush1.msra.mxu0 0.0
    %339 = vmatprep.subr.mxu0 0.0
    %340 = vmatpush1.msra.mxu0 %v307
    %341 = vmatprep.subr.mxu0 0.0
    %342 = vmatpush1.msra.mxu0 %v306
    %343 = vmatprep.subr.mxu0 0.0
    %344 = vmatpush1.msra.mxu0 %v305
    %345 = vmatprep.subr.mxu0 0.0
    %346 = vmatpush1.msra.mxu0 %v304
    %347 = vmatprep.subr.mxu0 0.0
    %348 = vmatpush2.msra.mxu0 0.0
    %349 = vmatprep.subr.mxu0 0.0
    %350 = vmatpush2.msra.mxu0 0.0
    %351 = vmatprep.subr.mxu0 0.0
    %352 = vmatpush2.msra.mxu0 0.0
    %353 = vmatprep.subr.mxu0 0.0
    %354 = vmatpush2.msra.mxu0 0.0
    %355 = vmatprep.subr.mxu0 0.0
    %356 = vmatpush2.msra.mxu0 0.0
    %357 = vmatprep.subr.mxu0 0.0
    %358 = vmatpush2.msra.mxu0 0.0
    %359 = vmatprep.subr.mxu0 0.0
    %360 = vmatpush2.msra.mxu0 0.0
    %361 = vmatprep.subr.mxu0 0.0
    %362 = vmatpush2.msra.mxu0 0.0
    %363 = vmatprep.subr.mxu0 0.0
    %364 = vmatpush2.msra.mxu0 0.0
    %365 = vmatprep.subr.mxu0 0.0
    %366 = vmatpush2.msra.mxu0 0.0
    %367 = vmatprep.subr.mxu0 0.0
    %368 = vmatpush2.msra.mxu0 0.0
    %369 = vmatprep.subr.mxu0 0.0
    %370 = vmatpush2.msra.mxu0 0.0
    %371 = vmatprep.subr.mxu0 0.0
    %372 = vmatpush2.msra.mxu0 0.0
    %373 = vmatprep.subr.mxu0 0.0
    %374 = vmatpush2.msra.mxu0 0.0
    %375 = vmatprep.subr.mxu0 0.0
    %376 = vmatpush2.msra.mxu0 0.0
    %377 = vmatprep.subr.mxu0 0.0
    %378 = vmatpush2.msra.mxu0 0.0
    %379 = vmatprep.mubr.f32.mxu0 0.0
    %380 = vmatmul.mubr.f32.gmra.mxu0 %v138
    %v381 = vpop.f32.mrf.mxu0
    %v382 = vadd.f32 %v313, %v381
    %v383 = vpop.f32.mrf.mxu0
    %384 = vmatprep.mubr.f32.mxu0 0.0
    %385 = vmatmul.mubr.f32.gmra.mxu0 %v141
    %v386 = vpop.f32.mrf.mxu0
    %v387 = vadd.f32 %v313, %v386
    %v388 = vpop.f32.mrf.mxu0
    %389 = vdwg.mxu0
    %v390 = vld [vmem:[%s1] sm:$0x1]
    %vm391 = vcmask 130048
    %v393 = vsel %vm391, %v210, 0
    %v396 = vsel %vm391, %v296, 0
    %398 = vmatprep.subr.mxu0 0.0
    %399 = vmatpush1.xpose.msra.mxu0 0.0
    %400 = vmatprep.subr.mxu0 0.0
    %401 = vmatpush1.xpose.msra.mxu0 0.0
    %402 = vmatprep.subr.mxu0 0.0
    %403 = vmatpush1.xpose.msra.mxu0 0.0
    %404 = vmatprep.subr.mxu0 0.0
    %405 = vmatpush1.xpose.msra.mxu0 0.0
    %406 = vmatprep.subr.mxu0 0.0
    %407 = vmatpush1.xpose.msra.mxu0 0.0
    %408 = vmatprep.subr.mxu0 0.0
    %409 = vmatpush1.xpose.msra.mxu0 0.0
    %410 = vmatprep.subr.mxu0 0.0
    %411 = vmatpush1.xpose.msra.mxu0 0.0
    %412 = vmatprep.subr.mxu0 0.0
    %413 = vmatpush1.xpose.msra.mxu0 0.0
    %414 = vmatprep.subr.mxu0 0.0
    %415 = vmatpush1.xpose.msra.mxu0 0.0
    %416 = vmatprep.subr.mxu0 0.0
    %417 = vmatpush1.xpose.msra.mxu0 0.0
    %418 = vmatprep.subr.mxu0 0.0
    %419 = vmatpush1.xpose.msra.mxu0 0.0
    %420 = vmatprep.subr.mxu0 0.0
    %421 = vmatpush1.xpose.msra.mxu0 0.0
    %422 = vmatprep.subr.mxu0 0.0
    %423 = vmatpush1.xpose.msra.mxu0 0.0
    %424 = vmatprep.subr.mxu0 0.0
    %425 = vmatpush1.xpose.msra.mxu0 0.0
    %426 = vmatprep.subr.mxu0 0.0
    %427 = vmatpush1.xpose.msra.mxu0 0.0
    %428 = vmatprep.subr.mxu0 0.0
    %429 = vmatpush1.xpose.msra.mxu0 %v396
    %430 = vmatprep.subr.mxu0 0.0
    %431 = vmatpush2.xpose.msra.mxu0 0.0
    %432 = vmatprep.subr.mxu0 0.0
    %433 = vmatpush2.xpose.msra.mxu0 0.0
    %434 = vmatprep.subr.mxu0 0.0
    %435 = vmatpush2.xpose.msra.mxu0 0.0
    %436 = vmatprep.subr.mxu0 0.0
    %437 = vmatpush2.xpose.msra.mxu0 0.0
    %438 = vmatprep.subr.mxu0 0.0
    %439 = vmatpush2.xpose.msra.mxu0 0.0
    %440 = vmatprep.subr.mxu0 0.0
    %441 = vmatpush2.xpose.msra.mxu0 0.0
    %442 = vmatprep.subr.mxu0 0.0
    %443 = vmatpush2.xpose.msra.mxu0 0.0
    %444 = vmatprep.subr.mxu0 0.0
    %445 = vmatpush2.xpose.msra.mxu0 0.0
    %446 = vmatprep.subr.mxu0 0.0
    %447 = vmatpush2.xpose.msra.mxu0 0.0
    %448 = vmatprep.subr.mxu0 0.0
    %449 = vmatpush2.xpose.msra.mxu0 0.0
    %450 = vmatprep.subr.mxu0 0.0
    %451 = vmatpush2.xpose.msra.mxu0 0.0
    %452 = vmatprep.subr.mxu0 0.0
    %453 = vmatpush2.xpose.msra.mxu0 0.0
    %454 = vmatprep.subr.mxu0 0.0
    %455 = vmatpush2.xpose.msra.mxu0 0.0
    %456 = vmatprep.subr.mxu0 0.0
    %457 = vmatpush2.xpose.msra.mxu0 0.0
    %458 = vmatprep.subr.mxu0 0.0
    %459 = vmatpush2.xpose.msra.mxu0 0.0
    %460 = vmatprep.subr.mxu0 0.0
    %461 = vmatpush2.xpose.msra.mxu0 0.0
    %462 = vmatprep.mubr.f32.mxu0 0.0
    %463 = vmatmul.mubr.f32.gmra.mxu0 %v393
    %v464 = vpop.f32.mrf.mxu0
    %v465 = vadd.f32 0.0, %v464
    %v466 = vpop.f32.mrf.mxu0
    %467 = vdwg.mxu0
    %v468 = vmul.f32 %v465, 0.25
    %v470 = vlaneseq
    %v471 = vshrl.u32 %v470, 7
    %v472 = vsub.s32 0, %v471
    %v473 = vrot.slane %v390, %v472
    %v475 = vadd.f32 %v468, %v473
    %vm476 = vcmask 64512
    %v477 = vsel %vm476, %v475, -inf
    %478 = vmax.xlane.f32.xlu0 %v477
    %v479 = vpop.xlane.xlu0 %478
    %v480 = vsub.f32 %v475, %v479
    %v481 = vmul.f32 %v480, 1.442695
    %v482 = vpow.pop %v481
    %v483 = vsel %vm476, %v482, 0.0
    %484 = vadd.xlane.f32.xlu0 %v483
    %v485 = vpop.xlane.xlu0 %484
    %v486 = vrcp.pop %v485
    %v487 = vmul.f32 %v482, %v486
    %v489 = vsel %vm476, %v487, 0
    %491 = vmatprep.subr.mxu0 0.0
    %492 = vmatpush1.msra.mxu0 0.0
    %493 = vmatprep.subr.mxu0 0.0
    %494 = vmatpush1.msra.mxu0 0.0
    %495 = vmatprep.subr.mxu0 0.0
    %496 = vmatpush1.msra.mxu0 0.0
    %497 = vmatprep.subr.mxu0 0.0
    %498 = vmatpush1.msra.mxu0 0.0
    %499 = vmatprep.subr.mxu0 0.0
    %500 = vmatpush1.msra.mxu0 0.0
    %501 = vmatprep.subr.mxu0 0.0
    %502 = vmatpush1.msra.mxu0 0.0
    %503 = vmatprep.subr.mxu0 0.0
    %504 = vmatpush1.msra.mxu0 0.0
    %505 = vmatprep.subr.mxu0 0.0
    %506 = vmatpush1.msra.mxu0 0.0
    %507 = vmatprep.subr.mxu0 0.0
    %508 = vmatpush1.msra.mxu0 0.0
    %509 = vmatprep.subr.mxu0 0.0
    %510 = vmatpush1.msra.mxu0 0.0
    %511 = vmatprep.subr.mxu0 0.0
    %512 = vmatpush1.msra.mxu0 0.0
    %513 = vmatprep.subr.mxu0 0.0
    %514 = vmatpush1.msra.mxu0 0.0
    %515 = vmatprep.subr.mxu0 0.0
    %516 = vmatpush1.msra.mxu0 0.0
    %517 = vmatprep.subr.mxu0 0.0
    %518 = vmatpush1.msra.mxu0 0.0
    %519 = vmatprep.subr.mxu0 0.0
    %520 = vmatpush1.msra.mxu0 0.0
    %521 = vmatprep.subr.mxu0 0.0
    %522 = vmatpush1.msra.mxu0 %v382
    %523 = vmatprep.subr.mxu0 0.0
    %524 = vmatpush2.msra.mxu0 0.0
    %525 = vmatprep.subr.mxu0 0.0
    %526 = vmatpush2.msra.mxu0 0.0
    %527 = vmatprep.subr.mxu0 0.0
    %528 = vmatpush2.msra.mxu0 0.0
    %529 = vmatprep.subr.mxu0 0.0
    %530 = vmatpush2.msra.mxu0 0.0
    %531 = vmatprep.subr.mxu0 0.0
    %532 = vmatpush2.msra.mxu0 0.0
    %533 = vmatprep.subr.mxu0 0.0
    %534 = vmatpush2.msra.mxu0 0.0
    %535 = vmatprep.subr.mxu0 0.0
    %536 = vmatpush2.msra.mxu0 0.0
    %537 = vmatprep.subr.mxu0 0.0
    %538 = vmatpush2.msra.mxu0 0.0
    %539 = vmatprep.subr.mxu0 0.0
    %540 = vmatpush2.msra.mxu0 0.0
    %541 = vmatprep.subr.mxu0 0.0
    %542 = vmatpush2.msra.mxu0 0.0
    %543 = vmatprep.subr.mxu0 0.0
    %544 = vmatpush2.msra.mxu0 0.0
    %545 = vmatprep.subr.mxu0 0.0
    %546 = vmatpush2.msra.mxu0 0.0
    %547 = vmatprep.subr.mxu0 0.0
    %548 = vmatpush2.msra.mxu0 0.0
    %549 = vmatprep.subr.mxu0 0.0
    %550 = vmatpush2.msra.mxu0 0.0
    %551 = vmatprep.subr.mxu0 0.0
    %552 = vmatpush2.msra.mxu0 0.0
    %553 = vmatprep.subr.mxu0 0.0
    %554 = vmatpush2.msra.mxu0 0.0
    %555 = vmatprep.mubr.f32.mxu0 0.0
    %556 = vmatmul.mubr.f32.gmra.mxu0 %v489
    %v557 = vpop.f32.mrf.mxu0
    %v558 = vadd.f32 0.0, %v557
    %v559 = vpop.f32.mrf.mxu0
    %560 = vdwg.mxu0
    %561 = vst.msk [vmem:[#allocation2] sm:$0xff] %vm391, %v558
    %562 = vrot.lane.b32.xlu0 %v210, 112
    %v563 = vpop.permute.xlu0 %562
    %564 = vrot.lane.b32.xlu0 %v296, 112
    %v565 = vpop.permute.xlu0 %564
    %v566 = vsel %vm391, %v563, 0
    %v568 = vsel %vm391, %v565, 0
    %570 = vmatprep.subr.mxu0 0.0
    %571 = vmatpush1.xpose.msra.mxu0 0.0
    %572 = vmatprep.subr.mxu0 0.0
    %573 = vmatpush1.xpose.msra.mxu0 0.0
    %574 = vmatprep.subr.mxu0 0.0
    %575 = vmatpush1.xpose.msra.mxu0 0.0
    %576 = vmatprep.subr.mxu0 0.0
    %577 = vmatpush1.xpose.msra.mxu0 0.0
    %578 = vmatprep.subr.mxu0 0.0
    %579 = vmatpush1.xpose.msra.mxu0 0.0
    %580 = vmatprep.subr.mxu0 0.0
    %581 = vmatpush1.xpose.msra.mxu0 0.0
    %582 = vmatprep.subr.mxu0 0.0
    %583 = vmatpush1.xpose.msra.mxu0 0.0
    %584 = vmatprep.subr.mxu0 0.0
    %585 = vmatpush1.xpose.msra.mxu0 0.0
    %586 = vmatprep.subr.mxu0 0.0
    %587 = vmatpush1.xpose.msra.mxu0 0.0
    %588 = vmatprep.subr.mxu0 0.0
    %589 = vmatpush1.xpose.msra.mxu0 0.0
    %590 = vmatprep.subr.mxu0 0.0
    %591 = vmatpush1.xpose.msra.mxu0 0.0
    %592 = vmatprep.subr.mxu0 0.0
    %593 = vmatpush1.xpose.msra.mxu0 0.0
    %594 = vmatprep.subr.mxu0 0.0
    %595 = vmatpush1.xpose.msra.mxu0 0.0
    %596 = vmatprep.subr.mxu0 0.0
    %597 = vmatpush1.xpose.msra.mxu0 0.0
    %598 = vmatprep.subr.mxu0 0.0
    %599 = vmatpush1.xpose.msra.mxu0 0.0
    %600 = vmatprep.subr.mxu0 0.0
    %601 = vmatpush1.xpose.msra.mxu0 %v568
    %602 = vmatprep.subr.mxu0 0.0
    %603 = vmatpush2.xpose.msra.mxu0 0.0
    %604 = vmatprep.subr.mxu0 0.0
    %605 = vmatpush2.xpose.msra.mxu0 0.0
    %606 = vmatprep.subr.mxu0 0.0
    %607 = vmatpush2.xpose.msra.mxu0 0.0
    %608 = vmatprep.subr.mxu0 0.0
    %609 = vmatpush2.xpose.msra.mxu0 0.0
    %610 = vmatprep.subr.mxu0 0.0
    %611 = vmatpush2.xpose.msra.mxu0 0.0
    %612 = vmatprep.subr.mxu0 0.0
    %613 = vmatpush2.xpose.msra.mxu0 0.0
    %614 = vmatprep.subr.mxu0 0.0
    %615 = vmatpush2.xpose.msra.mxu0 0.0
    %616 = vmatprep.subr.mxu0 0.0
    %617 = vmatpush2.xpose.msra.mxu0 0.0
    %618 = vmatprep.subr.mxu0 0.0
    %619 = vmatpush2.xpose.msra.mxu0 0.0
    %620 = vmatprep.subr.mxu0 0.0
    %621 = vmatpush2.xpose.msra.mxu0 0.0
    %622 = vmatprep.subr.mxu0 0.0
    %623 = vmatpush2.xpose.msra.mxu0 0.0
    %624 = vmatprep.subr.mxu0 0.0
    %625 = vmatpush2.xpose.msra.mxu0 0.0
    %626 = vmatprep.subr.mxu0 0.0
    %627 = vmatpush2.xpose.msra.mxu0 0.0
    %628 = vmatprep.subr.mxu0 0.0
    %629 = vmatpush2.xpose.msra.mxu0 0.0
    %630 = vmatprep.subr.mxu0 0.0
    %631 = vmatpush2.xpose.msra.mxu0 0.0
    %632 = vmatprep.subr.mxu0 0.0
    %633 = vmatpush2.xpose.msra.mxu0 0.0
    %634 = vmatprep.mubr.f32.mxu0 0.0
    %635 = vmatmul.mubr.f32.gmra.mxu0 %v566
    %v636 = vpop.f32.mrf.mxu0
    %v637 = vadd.f32 0.0, %v636
    %v638 = vpop.f32.mrf.mxu0
    %639 = vdwg.mxu0
    %v640 = vmul.f32 %v637, 0.25
    %v641 = vadd.f32 %v640, %v473
    %v642 = vsel %vm476, %v641, -inf
    %643 = vmax.xlane.f32.xlu0 %v642
    %v644 = vpop.xlane.xlu0 %643
    %v645 = vsub.f32 %v641, %v644
    %v646 = vmul.f32 %v645, 1.442695
    %v647 = vpow.pop %v646
    %v648 = vsel %vm476, %v647, 0.0
    %649 = vadd.xlane.f32.xlu0 %v648
    %v650 = vpop.xlane.xlu0 %649
    %v651 = vrcp.pop %v650
    %v652 = vmul.f32 %v647, %v651
    %654 = vrot.lane.b32.xlu0 %v382, 112
    %v655 = vpop.permute.xlu0 %654
    %v658 = vsel %vm476, %v652, 0
    %660 = vmatprep.subr.mxu0 0.0
    %661 = vmatpush1.msra.mxu0 0.0
    %662 = vmatprep.subr.mxu0 0.0
    %663 = vmatpush1.msra.mxu0 0.0
    %664 = vmatprep.subr.mxu0 0.0
    %665 = vmatpush1.msra.mxu0 0.0
    %666 = vmatprep.subr.mxu0 0.0
    %667 = vmatpush1.msra.mxu0 0.0
    %668 = vmatprep.subr.mxu0 0.0
    %669 = vmatpush1.msra.mxu0 0.0
    %670 = vmatprep.subr.mxu0 0.0
    %671 = vmatpush1.msra.mxu0 0.0
    %672 = vmatprep.subr.mxu0 0.0
    %673 = vmatpush1.msra.mxu0 0.0
    %674 = vmatprep.subr.mxu0 0.0
    %675 = vmatpush1.msra.mxu0 0.0
    %676 = vmatprep.subr.mxu0 0.0
    %677 = vmatpush1.msra.mxu0 0.0
    %678 = vmatprep.subr.mxu0 0.0
    %679 = vmatpush1.msra.mxu0 0.0
    %680 = vmatprep.subr.mxu0 0.0
    %681 = vmatpush1.msra.mxu0 0.0
    %682 = vmatprep.subr.mxu0 0.0
    %683 = vmatpush1.msra.mxu0 0.0
    %684 = vmatprep.subr.mxu0 0.0
    %685 = vmatpush1.msra.mxu0 0.0
    %686 = vmatprep.subr.mxu0 0.0
    %687 = vmatpush1.msra.mxu0 0.0
    %688 = vmatprep.subr.mxu0 0.0
    %689 = vmatpush1.msra.mxu0 0.0
    %690 = vmatprep.subr.mxu0 0.0
    %691 = vmatpush1.msra.mxu0 %v655
    %692 = vmatprep.subr.mxu0 0.0
    %693 = vmatpush2.msra.mxu0 0.0
    %694 = vmatprep.subr.mxu0 0.0
    %695 = vmatpush2.msra.mxu0 0.0
    %696 = vmatprep.subr.mxu0 0.0
    %697 = vmatpush2.msra.mxu0 0.0
    %698 = vmatprep.subr.mxu0 0.0
    %699 = vmatpush2.msra.mxu0 0.0
    %700 = vmatprep.subr.mxu0 0.0
    %701 = vmatpush2.msra.mxu0 0.0
    %702 = vmatprep.subr.mxu0 0.0
    %703 = vmatpush2.msra.mxu0 0.0
    %704 = vmatprep.subr.mxu0 0.0
    %705 = vmatpush2.msra.mxu0 0.0
    %706 = vmatprep.subr.mxu0 0.0
    %707 = vmatpush2.msra.mxu0 0.0
    %708 = vmatprep.subr.mxu0 0.0
    %709 = vmatpush2.msra.mxu0 0.0
    %710 = vmatprep.subr.mxu0 0.0
    %711 = vmatpush2.msra.mxu0 0.0
    %712 = vmatprep.subr.mxu0 0.0
    %713 = vmatpush2.msra.mxu0 0.0
    %714 = vmatprep.subr.mxu0 0.0
    %715 = vmatpush2.msra.mxu0 0.0
    %716 = vmatprep.subr.mxu0 0.0
    %717 = vmatpush2.msra.mxu0 0.0
    %718 = vmatprep.subr.mxu0 0.0
    %719 = vmatpush2.msra.mxu0 0.0
    %720 = vmatprep.subr.mxu0 0.0
    %721 = vmatpush2.msra.mxu0 0.0
    %722 = vmatprep.subr.mxu0 0.0
    %723 = vmatpush2.msra.mxu0 0.0
    %724 = vmatprep.mubr.f32.mxu0 0.0
    %725 = vmatmul.mubr.f32.gmra.mxu0 %v658
    %v726 = vpop.f32.mrf.mxu0
    %v727 = vadd.f32 0.0, %v726
    %v728 = vpop.f32.mrf.mxu0
    %729 = vdwg.mxu0
    %731 = vrot.lane.b32.xlu0 %v727, 16
    %v732 = vpop.permute.xlu0 %731
    %vm734 = vcmask 261248
    %735 = vst.msk [vmem:[#allocation2] sm:$0xff] %vm734, %v732
    %s736 = scalar_lea.vmem %s1, 1
    %v737 = vld [vmem:[%s736] sm:$0x1]
    %v739 = vsel %vm391, %v215, 0
    %v742 = vsel %vm391, %v301, 0
    %744 = vmatprep.subr.mxu0 0.0
    %745 = vmatpush1.xpose.msra.mxu0 0.0
    %746 = vmatprep.subr.mxu0 0.0
    %747 = vmatpush1.xpose.msra.mxu0 0.0
    %748 = vmatprep.subr.mxu0 0.0
    %749 = vmatpush1.xpose.msra.mxu0 0.0
    %750 = vmatprep.subr.mxu0 0.0
    %751 = vmatpush1.xpose.msra.mxu0 0.0
    %752 = vmatprep.subr.mxu0 0.0
    %753 = vmatpush1.xpose.msra.mxu0 0.0
    %754 = vmatprep.subr.mxu0 0.0
    %755 = vmatpush1.xpose.msra.mxu0 0.0
    %756 = vmatprep.subr.mxu0 0.0
    %757 = vmatpush1.xpose.msra.mxu0 0.0
    %758 = vmatprep.subr.mxu0 0.0
    %759 = vmatpush1.xpose.msra.mxu0 0.0
    %760 = vmatprep.subr.mxu0 0.0
    %761 = vmatpush1.xpose.msra.mxu0 0.0
    %762 = vmatprep.subr.mxu0 0.0
    %763 = vmatpush1.xpose.msra.mxu0 0.0
    %764 = vmatprep.subr.mxu0 0.0
    %765 = vmatpush1.xpose.msra.mxu0 0.0
    %766 = vmatprep.subr.mxu0 0.0
    %767 = vmatpush1.xpose.msra.mxu0 0.0
    %768 = vmatprep.subr.mxu0 0.0
    %769 = vmatpush1.xpose.msra.mxu0 0.0
    %770 = vmatprep.subr.mxu0 0.0
    %771 = vmatpush1.xpose.msra.mxu0 0.0
    %772 = vmatprep.subr.mxu0 0.0
    %773 = vmatpush1.xpose.msra.mxu0 0.0
    %774 = vmatprep.subr.mxu0 0.0
    %775 = vmatpush1.xpose.msra.mxu0 %v742
    %776 = vmatprep.subr.mxu0 0.0
    %777 = vmatpush2.xpose.msra.mxu0 0.0
    %778 = vmatprep.subr.mxu0 0.0
    %779 = vmatpush2.xpose.msra.mxu0 0.0
    %780 = vmatprep.subr.mxu0 0.0
    %781 = vmatpush2.xpose.msra.mxu0 0.0
    %782 = vmatprep.subr.mxu0 0.0
    %783 = vmatpush2.xpose.msra.mxu0 0.0
    %784 = vmatprep.subr.mxu0 0.0
    %785 = vmatpush2.xpose.msra.mxu0 0.0
    %786 = vmatprep.subr.mxu0 0.0
    %787 = vmatpush2.xpose.msra.mxu0 0.0
    %788 = vmatprep.subr.mxu0 0.0
    %789 = vmatpush2.xpose.msra.mxu0 0.0
    %790 = vmatprep.subr.mxu0 0.0
    %791 = vmatpush2.xpose.msra.mxu0 0.0
    %792 = vmatprep.subr.mxu0 0.0
    %793 = vmatpush2.xpose.msra.mxu0 0.0
    %794 = vmatprep.subr.mxu0 0.0
    %795 = vmatpush2.xpose.msra.mxu0 0.0
    %796 = vmatprep.subr.mxu0 0.0
    %797 = vmatpush2.xpose.msra.mxu0 0.0
    %798 = vmatprep.subr.mxu0 0.0
    %799 = vmatpush2.xpose.msra.mxu0 0.0
    %800 = vmatprep.subr.mxu0 0.0
    %801 = vmatpush2.xpose.msra.mxu0 0.0
    %802 = vmatprep.subr.mxu0 0.0
    %803 = vmatpush2.xpose.msra.mxu0 0.0
    %804 = vmatprep.subr.mxu0 0.0
    %805 = vmatpush2.xpose.msra.mxu0 0.0
    %806 = vmatprep.subr.mxu0 0.0
    %807 = vmatpush2.xpose.msra.mxu0 0.0
    %808 = vmatprep.mubr.f32.mxu0 0.0
    %809 = vmatmul.mubr.f32.gmra.mxu0 %v739
    %v810 = vpop.f32.mrf.mxu0
    %v811 = vadd.f32 0.0, %v810
    %v812 = vpop.f32.mrf.mxu0
    %813 = vdwg.mxu0
    %v814 = vmul.f32 %v811, 0.25
    %v816 = vlaneseq
    %v817 = vshrl.u32 %v816, 7
    %v818 = vsub.s32 0, %v817
    %v819 = vrot.slane %v737, %v818
    %v821 = vadd.f32 %v814, %v819
    %v822 = vsel %vm476, %v821, -inf
    %823 = vmax.xlane.f32.xlu0 %v822
    %v824 = vpop.xlane.xlu0 %823
    %v825 = vsub.f32 %v821, %v824
    %v826 = vmul.f32 %v825, 1.442695
    %v827 = vpow.pop %v826
    %v828 = vsel %vm476, %v827, 0.0
    %829 = vadd.xlane.f32.xlu0 %v828
    %v830 = vpop.xlane.xlu0 %829
    %v831 = vrcp.pop %v830
    %v832 = vmul.f32 %v827, %v831
    %v834 = vsel %vm476, %v832, 0
    %836 = vmatprep.subr.mxu0 0.0
    %837 = vmatpush1.msra.mxu0 0.0
    %838 = vmatprep.subr.mxu0 0.0
    %839 = vmatpush1.msra.mxu0 0.0
    %840 = vmatprep.subr.mxu0 0.0
    %841 = vmatpush1.msra.mxu0 0.0
    %842 = vmatprep.subr.mxu0 0.0
    %843 = vmatpush1.msra.mxu0 0.0
    %844 = vmatprep.subr.mxu0 0.0
    %845 = vmatpush1.msra.mxu0 0.0
    %846 = vmatprep.subr.mxu0 0.0
    %847 = vmatpush1.msra.mxu0 0.0
    %848 = vmatprep.subr.mxu0 0.0
    %849 = vmatpush1.msra.mxu0 0.0
    %850 = vmatprep.subr.mxu0 0.0
    %851 = vmatpush1.msra.mxu0 0.0
    %852 = vmatprep.subr.mxu0 0.0
    %853 = vmatpush1.msra.mxu0 0.0
    %854 = vmatprep.subr.mxu0 0.0
    %855 = vmatpush1.msra.mxu0 0.0
    %856 = vmatprep.subr.mxu0 0.0
    %857 = vmatpush1.msra.mxu0 0.0
    %858 = vmatprep.subr.mxu0 0.0
    %859 = vmatpush1.msra.mxu0 0.0
    %860 = vmatprep.subr.mxu0 0.0
    %861 = vmatpush1.msra.mxu0 0.0
    %862 = vmatprep.subr.mxu0 0.0
    %863 = vmatpush1.msra.mxu0 0.0
    %864 = vmatprep.subr.mxu0 0.0
    %865 = vmatpush1.msra.mxu0 0.0
    %866 = vmatprep.subr.mxu0 0.0
    %867 = vmatpush1.msra.mxu0 %v387
    %868 = vmatprep.subr.mxu0 0.0
    %869 = vmatpush2.msra.mxu0 0.0
    %870 = vmatprep.subr.mxu0 0.0
    %871 = vmatpush2.msra.mxu0 0.0
    %872 = vmatprep.subr.mxu0 0.0
    %873 = vmatpush2.msra.mxu0 0.0
    %874 = vmatprep.subr.mxu0 0.0
    %875 = vmatpush2.msra.mxu0 0.0
    %876 = vmatprep.subr.mxu0 0.0
    %877 = vmatpush2.msra.mxu0 0.0
    %878 = vmatprep.subr.mxu0 0.0
    %879 = vmatpush2.msra.mxu0 0.0
    %880 = vmatprep.subr.mxu0 0.0
    %881 = vmatpush2.msra.mxu0 0.0
    %882 = vmatprep.subr.mxu0 0.0
    %883 = vmatpush2.msra.mxu0 0.0
    %884 = vmatprep.subr.mxu0 0.0
    %885 = vmatpush2.msra.mxu0 0.0
    %886 = vmatprep.subr.mxu0 0.0
    %887 = vmatpush2.msra.mxu0 0.0
    %888 = vmatprep.subr.mxu0 0.0
    %889 = vmatpush2.msra.mxu0 0.0
    %890 = vmatprep.subr.mxu0 0.0
    %891 = vmatpush2.msra.mxu0 0.0
    %892 = vmatprep.subr.mxu0 0.0
    %893 = vmatpush2.msra.mxu0 0.0
    %894 = vmatprep.subr.mxu0 0.0
    %895 = vmatpush2.msra.mxu0 0.0
    %896 = vmatprep.subr.mxu0 0.0
    %897 = vmatpush2.msra.mxu0 0.0
    %898 = vmatprep.subr.mxu0 0.0
    %899 = vmatpush2.msra.mxu0 0.0
    %900 = vmatprep.mubr.f32.mxu0 0.0
    %901 = vmatmul.mubr.f32.gmra.mxu0 %v834
    %v902 = vpop.f32.mrf.mxu0
    %v903 = vadd.f32 0.0, %v902
    %v904 = vpop.f32.mrf.mxu0
    %905 = vdwg.mxu0
    %906 = vst.msk [vmem:[#allocation2 + $0x8] sm:$0xff] %vm391, %v903
    %907 = vrot.lane.b32.xlu0 %v215, 112
    %v908 = vpop.permute.xlu0 %907
    %909 = vrot.lane.b32.xlu0 %v301, 112
    %v910 = vpop.permute.xlu0 %909
    %v911 = vsel %vm391, %v908, 0
    %v913 = vsel %vm391, %v910, 0
    %915 = vmatprep.subr.mxu0 0.0
    %916 = vmatpush1.xpose.msra.mxu0 0.0
    %917 = vmatprep.subr.mxu0 0.0
    %918 = vmatpush1.xpose.msra.mxu0 0.0
    %919 = vmatprep.subr.mxu0 0.0
    %920 = vmatpush1.xpose.msra.mxu0 0.0
    %921 = vmatprep.subr.mxu0 0.0
    %922 = vmatpush1.xpose.msra.mxu0 0.0
    %923 = vmatprep.subr.mxu0 0.0
    %924 = vmatpush1.xpose.msra.mxu0 0.0
    %925 = vmatprep.subr.mxu0 0.0
    %926 = vmatpush1.xpose.msra.mxu0 0.0
    %927 = vmatprep.subr.mxu0 0.0
    %928 = vmatpush1.xpose.msra.mxu0 0.0
    %929 = vmatprep.subr.mxu0 0.0
    %930 = vmatpush1.xpose.msra.mxu0 0.0
    %931 = vmatprep.subr.mxu0 0.0
    %932 = vmatpush1.xpose.msra.mxu0 0.0
    %933 = vmatprep.subr.mxu0 0.0
    %934 = vmatpush1.xpose.msra.mxu0 0.0
    %935 = vmatprep.subr.mxu0 0.0
    %936 = vmatpush1.xpose.msra.mxu0 0.0
    %937 = vmatprep.subr.mxu0 0.0
    %938 = vmatpush1.xpose.msra.mxu0 0.0
    %939 = vmatprep.subr.mxu0 0.0
    %940 = vmatpush1.xpose.msra.mxu0 0.0
    %941 = vmatprep.subr.mxu0 0.0
    %942 = vmatpush1.xpose.msra.mxu0 0.0
    %943 = vmatprep.subr.mxu0 0.0
    %944 = vmatpush1.xpose.msra.mxu0 0.0
    %945 = vmatprep.subr.mxu0 0.0
    %946 = vmatpush1.xpose.msra.mxu0 %v913
    %947 = vmatprep.subr.mxu0 0.0
    %948 = vmatpush2.xpose.msra.mxu0 0.0
    %949 = vmatprep.subr.mxu0 0.0
    %950 = vmatpush2.xpose.msra.mxu0 0.0
    %951 = vmatprep.subr.mxu0 0.0
    %952 = vmatpush2.xpose.msra.mxu0 0.0
    %953 = vmatprep.subr.mxu0 0.0
    %954 = vmatpush2.xpose.msra.mxu0 0.0
    %955 = vmatprep.subr.mxu0 0.0
    %956 = vmatpush2.xpose.msra.mxu0 0.0
    %957 = vmatprep.subr.mxu0 0.0
    %958 = vmatpush2.xpose.msra.mxu0 0.0
    %959 = vmatprep.subr.mxu0 0.0
    %960 = vmatpush2.xpose.msra.mxu0 0.0
    %961 = vmatprep.subr.mxu0 0.0
    %962 = vmatpush2.xpose.msra.mxu0 0.0
    %963 = vmatprep.subr.mxu0 0.0
    %964 = vmatpush2.xpose.msra.mxu0 0.0
    %965 = vmatprep.subr.mxu0 0.0
    %966 = vmatpush2.xpose.msra.mxu0 0.0
    %967 = vmatprep.subr.mxu0 0.0
    %968 = vmatpush2.xpose.msra.mxu0 0.0
    %969 = vmatprep.subr.mxu0 0.0
    %970 = vmatpush2.xpose.msra.mxu0 0.0
    %971 = vmatprep.subr.mxu0 0.0
    %972 = vmatpush2.xpose.msra.mxu0 0.0
    %973 = vmatprep.subr.mxu0 0.0
    %974 = vmatpush2.xpose.msra.mxu0 0.0
    %975 = vmatprep.subr.mxu0 0.0
    %976 = vmatpush2.xpose.msra.mxu0 0.0
    %977 = vmatprep.subr.mxu0 0.0
    %978 = vmatpush2.xpose.msra.mxu0 0.0
    %979 = vmatprep.mubr.f32.mxu0 0.0
    %980 = vmatmul.mubr.f32.gmra.mxu0 %v911
    %v981 = vpop.f32.mrf.mxu0
    %v982 = vadd.f32 0.0, %v981
    %v983 = vpop.f32.mrf.mxu0
    %984 = vdwg.mxu0
    %v985 = vmul.f32 %v982, 0.25
    %v986 = vadd.f32 %v985, %v819
    %v987 = vsel %vm476, %v986, -inf
    %988 = vmax.xlane.f32.xlu0 %v987
    %v989 = vpop.xlane.xlu0 %988
    %v990 = vsub.f32 %v986, %v989
    %v991 = vmul.f32 %v990, 1.442695
    %v992 = vpow.pop %v991
    %v993 = vsel %vm476, %v992, 0.0
    %994 = vadd.xlane.f32.xlu0 %v993
    %v995 = vpop.xlane.xlu0 %994
    %v996 = vrcp.pop %v995
    %v997 = vmul.f32 %v992, %v996
    %999 = vrot.lane.b32.xlu0 %v387, 112
    %v1000 = vpop.permute.xlu0 %999
    %v1003 = vsel %vm476, %v997, 0
    %1005 = vmatprep.subr.mxu0 0.0
    %1006 = vmatpush1.msra.mxu0 0.0
    %1007 = vmatprep.subr.mxu0 0.0
    %1008 = vmatpush1.msra.mxu0 0.0
    %1009 = vmatprep.subr.mxu0 0.0
    %1010 = vmatpush1.msra.mxu0 0.0
    %1011 = vmatprep.subr.mxu0 0.0
    %1012 = vmatpush1.msra.mxu0 0.0
    %1013 = vmatprep.subr.mxu0 0.0
    %1014 = vmatpush1.msra.mxu0 0.0
    %1015 = vmatprep.subr.mxu0 0.0
    %1016 = vmatpush1.msra.mxu0 0.0
    %1017 = vmatprep.subr.mxu0 0.0
    %1018 = vmatpush1.msra.mxu0 0.0
    %1019 = vmatprep.subr.mxu0 0.0
    %1020 = vmatpush1.msra.mxu0 0.0
    %1021 = vmatprep.subr.mxu0 0.0
    %1022 = vmatpush1.msra.mxu0 0.0
    %1023 = vmatprep.subr.mxu0 0.0
    %1024 = vmatpush1.msra.mxu0 0.0
    %1025 = vmatprep.subr.mxu0 0.0
    %1026 = vmatpush1.msra.mxu0 0.0
    %1027 = vmatprep.subr.mxu0 0.0
    %1028 = vmatpush1.msra.mxu0 0.0
    %1029 = vmatprep.subr.mxu0 0.0
    %1030 = vmatpush1.msra.mxu0 0.0
    %1031 = vmatprep.subr.mxu0 0.0
    %1032 = vmatpush1.msra.mxu0 0.0
    %1033 = vmatprep.subr.mxu0 0.0
    %1034 = vmatpush1.msra.mxu0 0.0
    %1035 = vmatprep.subr.mxu0 0.0
    %1036 = vmatpush1.msra.mxu0 %v1000
    %1037 = vmatprep.subr.mxu0 0.0
    %1038 = vmatpush2.msra.mxu0 0.0
    %1039 = vmatprep.subr.mxu0 0.0
    %1040 = vmatpush2.msra.mxu0 0.0
    %1041 = vmatprep.subr.mxu0 0.0
    %1042 = vmatpush2.msra.mxu0 0.0
    %1043 = vmatprep.subr.mxu0 0.0
    %1044 = vmatpush2.msra.mxu0 0.0
    %1045 = vmatprep.subr.mxu0 0.0
    %1046 = vmatpush2.msra.mxu0 0.0
    %1047 = vmatprep.subr.mxu0 0.0
    %1048 = vmatpush2.msra.mxu0 0.0
    %1049 = vmatprep.subr.mxu0 0.0
    %1050 = vmatpush2.msra.mxu0 0.0
    %1051 = vmatprep.subr.mxu0 0.0
    %1052 = vmatpush2.msra.mxu0 0.0
    %1053 = vmatprep.subr.mxu0 0.0
    %1054 = vmatpush2.msra.mxu0 0.0
    %1055 = vmatprep.subr.mxu0 0.0
    %1056 = vmatpush2.msra.mxu0 0.0
    %1057 = vmatprep.subr.mxu0 0.0
    %1058 = vmatpush2.msra.mxu0 0.0
    %1059 = vmatprep.subr.mxu0 0.0
    %1060 = vmatpush2.msra.mxu0 0.0
    %1061 = vmatprep.subr.mxu0 0.0
    %1062 = vmatpush2.msra.mxu0 0.0
    %1063 = vmatprep.subr.mxu0 0.0
    %1064 = vmatpush2.msra.mxu0 0.0
    %1065 = vmatprep.subr.mxu0 0.0
    %1066 = vmatpush2.msra.mxu0 0.0
    %1067 = vmatprep.subr.mxu0 0.0
    %1068 = vmatpush2.msra.mxu0 0.0
    %1069 = vmatprep.mubr.f32.mxu0 0.0
    %1070 = vmatmul.mubr.f32.gmra.mxu0 %v1003
    %v1071 = vpop.f32.mrf.mxu0
    %v1072 = vadd.f32 0.0, %v1071
    %v1073 = vpop.f32.mrf.mxu0
    %1074 = vdwg.mxu0
    %1076 = vrot.lane.b32.xlu0 %v1072, 16
    %v1077 = vpop.permute.xlu0 %1076
    %1079 = vst.msk [vmem:[#allocation2 + $0x8] sm:$0xff] %vm734, %v1077
    %v1080 = vld [vmem:[#allocation2] sm:$0xff]
    %v1081 = vld [vmem:[#allocation2 + $0x8] sm:$0xff]
    %v1082 = vld [vmem:[%s10] sm:$0xff]
    %v1083 = vld [vmem:[%s10 + $0x8] sm:$0xff]
    %v1084 = vld [vmem:[%s10 + $0x10] sm:$0xff]
    %v1085 = vld [vmem:[%s10 + $0x18] sm:$0xff]
    %v1086 = vld [vmem:[%s11] sm:$0x1]
    %v1088 = vlaneseq
    %v1089 = vshrl.u32 %v1088, 7
    %v1090 = vsub.s32 0, %v1089
    %v1091 = vrot.slane %v1086, %v1090
    %v1094 = vsel %vm82, %v1080, 0
    %v1097 = vsel %vm82, %v1081, 0
    %1099 = vmatprep.subr.mxu0 0.0
    %1100 = vmatpush1.msra.mxu0 0.0
    %1101 = vmatprep.subr.mxu0 0.0
    %1102 = vmatpush1.msra.mxu0 0.0
    %1103 = vmatprep.subr.mxu0 0.0
    %1104 = vmatpush1.msra.mxu0 0.0
    %1105 = vmatprep.subr.mxu0 0.0
    %1106 = vmatpush1.msra.mxu0 0.0
    %1107 = vmatprep.subr.mxu0 0.0
    %1108 = vmatpush1.msra.mxu0 0.0
    %1109 = vmatprep.subr.mxu0 0.0
    %1110 = vmatpush1.msra.mxu0 0.0
    %1111 = vmatprep.subr.mxu0 0.0
    %1112 = vmatpush1.msra.mxu0 0.0
    %1113 = vmatprep.subr.mxu0 0.0
    %1114 = vmatpush1.msra.mxu0 0.0
    %1115 = vmatprep.subr.mxu0 0.0
    %1116 = vmatpush1.msra.mxu0 0.0
    %1117 = vmatprep.subr.mxu0 0.0
    %1118 = vmatpush1.msra.mxu0 0.0
    %1119 = vmatprep.subr.mxu0 0.0
    %1120 = vmatpush1.msra.mxu0 0.0
    %1121 = vmatprep.subr.mxu0 0.0
    %1122 = vmatpush1.msra.mxu0 0.0
    %1123 = vmatprep.subr.mxu0 0.0
    %1124 = vmatpush1.msra.mxu0 %v1085
    %1125 = vmatprep.subr.mxu0 0.0
    %1126 = vmatpush1.msra.mxu0 %v1084
    %1127 = vmatprep.subr.mxu0 0.0
    %1128 = vmatpush1.msra.mxu0 %v1083
    %1129 = vmatprep.subr.mxu0 0.0
    %1130 = vmatpush1.msra.mxu0 %v1082
    %1131 = vmatprep.subr.mxu0 0.0
    %1132 = vmatpush2.msra.mxu0 0.0
    %1133 = vmatprep.subr.mxu0 0.0
    %1134 = vmatpush2.msra.mxu0 0.0
    %1135 = vmatprep.subr.mxu0 0.0
    %1136 = vmatpush2.msra.mxu0 0.0
    %1137 = vmatprep.subr.mxu0 0.0
    %1138 = vmatpush2.msra.mxu0 0.0
    %1139 = vmatprep.subr.mxu0 0.0
    %1140 = vmatpush2.msra.mxu0 0.0
    %1141 = vmatprep.subr.mxu0 0.0
    %1142 = vmatpush2.msra.mxu0 0.0
    %1143 = vmatprep.subr.mxu0 0.0
    %1144 = vmatpush2.msra.mxu0 0.0
    %1145 = vmatprep.subr.mxu0 0.0
    %1146 = vmatpush2.msra.mxu0 0.0
    %1147 = vmatprep.subr.mxu0 0.0
    %1148 = vmatpush2.msra.mxu0 0.0
    %1149 = vmatprep.subr.mxu0 0.0
    %1150 = vmatpush2.msra.mxu0 0.0
    %1151 = vmatprep.subr.mxu0 0.0
    %1152 = vmatpush2.msra.mxu0 0.0
    %1153 = vmatprep.subr.mxu0 0.0
    %1154 = vmatpush2.msra.mxu0 0.0
    %1155 = vmatprep.subr.mxu0 0.0
    %1156 = vmatpush2.msra.mxu0 0.0
    %1157 = vmatprep.subr.mxu0 0.0
    %1158 = vmatpush2.msra.mxu0 0.0
    %1159 = vmatprep.subr.mxu0 0.0
    %1160 = vmatpush2.msra.mxu0 0.0
    %1161 = vmatprep.subr.mxu0 0.0
    %1162 = vmatpush2.msra.mxu0 0.0
    %1163 = vmatprep.mubr.f32.mxu0 0.0
    %1164 = vmatmul.mubr.f32.gmra.mxu0 %v1094
    %v1165 = vpop.f32.mrf.mxu0
    %v1166 = vadd.f32 %v1091, %v1165
    %v1167 = vpop.f32.mrf.mxu0
    %1168 = vmatprep.mubr.f32.mxu0 0.0
    %1169 = vmatmul.mubr.f32.gmra.mxu0 %v1097
    %v1170 = vpop.f32.mrf.mxu0
    %v1171 = vadd.f32 %v1091, %v1170
    %v1172 = vpop.f32.mrf.mxu0
    %1173 = vdwg.mxu0
    %v1174 = vadd.f32 %v124, %v1166
    %v1175 = vadd.f32 %v125, %v1171
    %v1176 = vld [vmem:[%s12] sm:$0x1]
    %v1177 = vld [vmem:[%s13] sm:$0x1]
    %v1178 = vsel %vm82, %v1174, 0.0
    %1179 = vadd.xlane.f32.xlu0 %v1178
    %v1180 = vpop.xlane.xlu0 %1179
    %v1181 = vsel %vm82, %v1175, 0.0
    %1182 = vadd.xlane.f32.xlu0 %v1181
    %v1183 = vpop.xlane.xlu0 %1182
    %v1184 = vmul.f32 %v1180, %v89
    %v1185 = vmul.f32 %v1183, %v89
    %v1186 = vsub.f32 %v1174, %v1184
    %v1187 = vsub.f32 %v1175, %v1185
    %v1188 = vmul.f32 %v1186, %v1186
    %v1189 = vmul.f32 %v1187, %v1187
    %v1190 = vsel %vm82, %v1188, 0.0
    %1191 = vadd.xlane.f32.xlu0 %v1190
    %v1192 = vpop.xlane.xlu0 %1191
    %v1193 = vsel %vm82, %v1189, 0.0
    %1194 = vadd.xlane.f32.xlu0 %v1193
    %v1195 = vpop.xlane.xlu0 %1194
    %v1196 = vmul.f32 %v1192, %v89
    %v1197 = vmul.f32 %v1195, %v89
    %v1198 = vadd.f32 %v1196, 1e-12
    %v1199 = vadd.f32 %v1197, 1e-12
    %v1200 = vrsqrt.pop %v1198
    %v1201 = vrsqrt.pop %v1199
    %v1202 = vmul.f32 %v1186, %v1200
    %v1203 = vmul.f32 %v1187, %v1201
    %v1205 = vlaneseq
    %v1206 = vshrl.u32 %v1205, 7
    %v1207 = vsub.s32 0, %v1206
    %v1208 = vrot.slane %v1176, %v1207
    %v1210 = vmul.f32 %v1202, %v1208
    %v1211 = vmul.f32 %v1203, %v1208
    %v1213 = vlaneseq
    %v1214 = vshrl.u32 %v1213, 7
    %v1215 = vsub.s32 0, %v1214
    %v1216 = vrot.slane %v1177, %v1215
    %v1218 = vadd.f32 %v1210, %v1216
    %v1219 = vadd.f32 %v1211, %v1216
    %v1220 = vld [vmem:[%s14] sm:$0xff]
    %v1221 = vld [vmem:[%s14 + $0x8] sm:$0xff]
    %v1222 = vld [vmem:[%s14 + $0x10] sm:$0xff]
    %v1223 = vld [vmem:[%s14 + $0x18] sm:$0xff]
    %v1224 = vld [vmem:[%s15] sm:$0x1]
    %v1226 = vlaneseq
    %v1227 = vshrl.u32 %v1226, 7
    %v1228 = vsub.s32 0, %v1227
    %v1229 = vrot.slane %v1224, %v1228
    %v1232 = vsel %vm82, %v1218, 0
    %v1235 = vsel %vm82, %v1219, 0
    %1237 = vmatprep.subr.mxu0 0.0
    %1238 = vmatpush1.msra.mxu0 0.0
    %1239 = vmatprep.subr.mxu0 0.0
    %1240 = vmatpush1.msra.mxu0 0.0
    %1241 = vmatprep.subr.mxu0 0.0
    %1242 = vmatpush1.msra.mxu0 0.0
    %1243 = vmatprep.subr.mxu0 0.0
    %1244 = vmatpush1.msra.mxu0 0.0
    %1245 = vmatprep.subr.mxu0 0.0
    %1246 = vmatpush1.msra.mxu0 0.0
    %1247 = vmatprep.subr.mxu0 0.0
    %1248 = vmatpush1.msra.mxu0 0.0
    %1249 = vmatprep.subr.mxu0 0.0
    %1250 = vmatpush1.msra.mxu0 0.0
    %1251 = vmatprep.subr.mxu0 0.0
    %1252 = vmatpush1.msra.mxu0 0.0
    %1253 = vmatprep.subr.mxu0 0.0
    %1254 = vmatpush1.msra.mxu0 0.0
    %1255 = vmatprep.subr.mxu0 0.0
    %1256 = vmatpush1.msra.mxu0 0.0
    %1257 = vmatprep.subr.mxu0 0.0
    %1258 = vmatpush1.msra.mxu0 0.0
    %1259 = vmatprep.subr.mxu0 0.0
    %1260 = vmatpush1.msra.mxu0 0.0
    %1261 = vmatprep.subr.mxu0 0.0
    %1262 = vmatpush1.msra.mxu0 %v1223
    %1263 = vmatprep.subr.mxu0 0.0
    %1264 = vmatpush1.msra.mxu0 %v1222
    %1265 = vmatprep.subr.mxu0 0.0
    %1266 = vmatpush1.msra.mxu0 %v1221
    %1267 = vmatprep.subr.mxu0 0.0
    %1268 = vmatpush1.msra.mxu0 %v1220
    %1269 = vmatprep.subr.mxu0 0.0
    %1270 = vmatpush2.msra.mxu0 0.0
    %1271 = vmatprep.subr.mxu0 0.0
    %1272 = vmatpush2.msra.mxu0 0.0
    %1273 = vmatprep.subr.mxu0 0.0
    %1274 = vmatpush2.msra.mxu0 0.0
    %1275 = vmatprep.subr.mxu0 0.0
    %1276 = vmatpush2.msra.mxu0 0.0
    %1277 = vmatprep.subr.mxu0 0.0
    %1278 = vmatpush2.msra.mxu0 0.0
    %1279 = vmatprep.subr.mxu0 0.0
    %1280 = vmatpush2.msra.mxu0 0.0
    %1281 = vmatprep.subr.mxu0 0.0
    %1282 = vmatpush2.msra.mxu0 0.0
    %1283 = vmatprep.subr.mxu0 0.0
    %1284 = vmatpush2.msra.mxu0 0.0
    %1285 = vmatprep.subr.mxu0 0.0
    %1286 = vmatpush2.msra.mxu0 0.0
    %1287 = vmatprep.subr.mxu0 0.0
    %1288 = vmatpush2.msra.mxu0 0.0
    %1289 = vmatprep.subr.mxu0 0.0
    %1290 = vmatpush2.msra.mxu0 0.0
    %1291 = vmatprep.subr.mxu0 0.0
    %1292 = vmatpush2.msra.mxu0 0.0
    %1293 = vmatprep.subr.mxu0 0.0
    %1294 = vmatpush2.msra.mxu0 0.0
    %1295 = vmatprep.subr.mxu0 0.0
    %1296 = vmatpush2.msra.mxu0 0.0
    %1297 = vmatprep.subr.mxu0 0.0
    %1298 = vmatpush2.msra.mxu0 0.0
    %1299 = vmatprep.subr.mxu0 0.0
    %1300 = vmatpush2.msra.mxu0 0.0
    %1301 = vmatprep.mubr.f32.mxu0 0.0
    %1302 = vmatmul.mubr.f32.gmra.mxu0 %v1232
    %v1303 = vpop.f32.mrf.mxu0
    %v1304 = vadd.f32 %v1229, %v1303
    %v1305 = vpop.f32.mrf.mxu0
    %1306 = vmatprep.mubr.f32.mxu0 0.0
    %1307 = vmatmul.mubr.f32.gmra.mxu0 %v1235
    %v1308 = vpop.f32.mrf.mxu0
    %v1309 = vadd.f32 %v1229, %v1308
    %v1310 = vpop.f32.mrf.mxu0
    %1311 = vdwg.mxu0
    %v1312 = vmul.f32 %v1304, %v1304
    %v1313 = vmul.f32 %v1309, %v1309
    %v1314 = vmul.f32 %v1304, %v1312
    %v1315 = vmul.f32 %v1309, %v1313
    %v1316 = vmul.f32 %v1314, 0.044715
    %v1317 = vmul.f32 %v1315, 0.044715
    %v1318 = vadd.f32 %v1304, %v1316
    %v1319 = vadd.f32 %v1309, %v1317
    %v1320 = vmul.f32 %v1318, 0.7978846
    %v1321 = vmul.f32 %v1319, 0.7978846
    %v1322 = vtanh.pop %v1320
    %v1323 = vtanh.pop %v1321
    %v1324 = vadd.f32 %v1322, 1.0
    %v1325 = vadd.f32 %v1323, 1.0
    %v1326 = vmul.f32 %v1324, 0.5
    %v1327 = vmul.f32 %v1325, 0.5
    %v1328 = vmul.f32 %v1304, %v1326
    %v1329 = vmul.f32 %v1309, %v1327
    %v1330 = vld [vmem:[%s16] sm:$0xff]
    %v1331 = vld [vmem:[%s16 + $0x8] sm:$0xff]
    %v1332 = vld [vmem:[%s16 + $0x10] sm:$0xff]
    %v1333 = vld [vmem:[%s16 + $0x18] sm:$0xff]
    %v1334 = vld [vmem:[%s16 + $0x20] sm:$0xff]
    %v1335 = vld [vmem:[%s16 + $0x28] sm:$0xff]
    %v1336 = vld [vmem:[%s16 + $0x30] sm:$0xff]
    %v1337 = vld [vmem:[%s16 + $0x38] sm:$0xff]
    %v1338 = vld [vmem:[%s17] sm:$0x1]
    %v1340 = vlaneseq
    %v1341 = vshrl.u32 %v1340, 7
    %v1342 = vsub.s32 0, %v1341
    %v1343 = vrot.slane %v1338, %v1342
    %vm1345 = vcmask 523264
    %v1347 = vsel %vm1345, %v1328, 0
    %v1350 = vsel %vm1345, %v1329, 0
    %1352 = vmatprep.subr.mxu0 0.0
    %1353 = vmatpush1.msra.mxu0 0.0
    %1354 = vmatprep.subr.mxu0 0.0
    %1355 = vmatpush1.msra.mxu0 0.0
    %1356 = vmatprep.subr.mxu0 0.0
    %1357 = vmatpush1.msra.mxu0 0.0
    %1358 = vmatprep.subr.mxu0 0.0
    %1359 = vmatpush1.msra.mxu0 0.0
    %1360 = vmatprep.subr.mxu0 0.0
    %1361 = vmatpush1.msra.mxu0 0.0
    %1362 = vmatprep.subr.mxu0 0.0
    %1363 = vmatpush1.msra.mxu0 0.0
    %1364 = vmatprep.subr.mxu0 0.0
    %1365 = vmatpush1.msra.mxu0 0.0
    %1366 = vmatprep.subr.mxu0 0.0
    %1367 = vmatpush1.msra.mxu0 0.0
    %1368 = vmatprep.subr.mxu0 0.0
    %1369 = vmatpush1.msra.mxu0 %v1337
    %1370 = vmatprep.subr.mxu0 0.0
    %1371 = vmatpush1.msra.mxu0 %v1336
    %1372 = vmatprep.subr.mxu0 0.0
    %1373 = vmatpush1.msra.mxu0 %v1335
    %1374 = vmatprep.subr.mxu0 0.0
    %1375 = vmatpush1.msra.mxu0 %v1334
    %1376 = vmatprep.subr.mxu0 0.0
    %1377 = vmatpush1.msra.mxu0 %v1333
    %1378 = vmatprep.subr.mxu0 0.0
    %1379 = vmatpush1.msra.mxu0 %v1332
    %1380 = vmatprep.subr.mxu0 0.0
    %1381 = vmatpush1.msra.mxu0 %v1331
    %1382 = vmatprep.subr.mxu0 0.0
    %1383 = vmatpush1.msra.mxu0 %v1330
    %1384 = vmatprep.subr.mxu0 0.0
    %1385 = vmatpush2.msra.mxu0 0.0
    %1386 = vmatprep.subr.mxu0 0.0
    %1387 = vmatpush2.msra.mxu0 0.0
    %1388 = vmatprep.subr.mxu0 0.0
    %1389 = vmatpush2.msra.mxu0 0.0
    %1390 = vmatprep.subr.mxu0 0.0
    %1391 = vmatpush2.msra.mxu0 0.0
    %1392 = vmatprep.subr.mxu0 0.0
    %1393 = vmatpush2.msra.mxu0 0.0
    %1394 = vmatprep.subr.mxu0 0.0
    %1395 = vmatpush2.msra.mxu0 0.0
    %1396 = vmatprep.subr.mxu0 0.0
    %1397 = vmatpush2.msra.mxu0 0.0
    %1398 = vmatprep.subr.mxu0 0.0
    %1399 = vmatpush2.msra.mxu0 0.0
    %1400 = vmatprep.subr.mxu0 0.0
    %1401 = vmatpush2.msra.mxu0 0.0
    %1402 = vmatprep.subr.mxu0 0.0
    %1403 = vmatpush2.msra.mxu0 0.0
    %1404 = vmatprep.subr.mxu0 0.0
    %1405 = vmatpush2.msra.mxu0 0.0
    %1406 = vmatprep.subr.mxu0 0.0
    %1407 = vmatpush2.msra.mxu0 0.0
    %1408 = vmatprep.subr.mxu0 0.0
    %1409 = vmatpush2.msra.mxu0 0.0
    %1410 = vmatprep.subr.mxu0 0.0
    %1411 = vmatpush2.msra.mxu0 0.0
    %1412 = vmatprep.subr.mxu0 0.0
    %1413 = vmatpush2.msra.mxu0 0.0
    %1414 = vmatprep.subr.mxu0 0.0
    %1415 = vmatpush2.msra.mxu0 0.0
    %1416 = vmatprep.mubr.f32.mxu0 0.0
    %1417 = vmatmul.mubr.f32.gmra.mxu0 %v1347
    %v1418 = vpop.f32.mrf.mxu0
    %v1419 = vadd.f32 %v1343, %v1418
    %v1420 = vpop.f32.mrf.mxu0
    %1421 = vmatprep.mubr.f32.mxu0 0.0
    %1422 = vmatmul.mubr.f32.gmra.mxu0 %v1350
    %v1423 = vpop.f32.mrf.mxu0
    %v1424 = vadd.f32 %v1343, %v1423
    %v1425 = vpop.f32.mrf.mxu0
    %1426 = vdwg.mxu0
    %v1427 = vadd.f32 %v1218, %v1419
    %v1428 = vadd.f32 %v1219, %v1424
    %v1429 = vld [vmem:[%s18] sm:$0x1]
    %v1430 = vld [vmem:[%s19] sm:$0x1]
    %v1431 = vsel %vm82, %v1427, 0.0
    %1432 = vadd.xlane.f32.xlu0 %v1431
    %v1433 = vpop.xlane.xlu0 %1432
    %v1434 = vsel %vm82, %v1428, 0.0
    %1435 = vadd.xlane.f32.xlu0 %v1434
    %v1436 = vpop.xlane.xlu0 %1435
    %v1437 = vmul.f32 %v1433, %v89
    %v1438 = vmul.f32 %v1436, %v89
    %v1439 = vsub.f32 %v1427, %v1437
    %v1440 = vsub.f32 %v1428, %v1438
    %v1441 = vmul.f32 %v1439, %v1439
    %v1442 = vmul.f32 %v1440, %v1440
    %v1443 = vsel %vm82, %v1441, 0.0
    %1444 = vadd.xlane.f32.xlu0 %v1443
    %v1445 = vpop.xlane.xlu0 %1444
    %v1446 = vsel %vm82, %v1442, 0.0
    %1447 = vadd.xlane.f32.xlu0 %v1446
    %v1448 = vpop.xlane.xlu0 %1447
    %v1449 = vmul.f32 %v1445, %v89
    %v1450 = vmul.f32 %v1448, %v89
    %v1451 = vadd.f32 %v1449, 1e-12
    %v1452 = vadd.f32 %v1450, 1e-12
    %v1453 = vrsqrt.pop %v1451
    %v1454 = vrsqrt.pop %v1452
    %v1455 = vmul.f32 %v1439, %v1453
    %v1456 = vmul.f32 %v1440, %v1454
    %v1458 = vlaneseq
    %v1459 = vshrl.u32 %v1458, 7
    %v1460 = vsub.s32 0, %v1459
    %v1461 = vrot.slane %v1429, %v1460
    %v1463 = vmul.f32 %v1455, %v1461
    %v1464 = vmul.f32 %v1456, %v1461
    %v1466 = vlaneseq
    %v1467 = vshrl.u32 %v1466, 7
    %v1468 = vsub.s32 0, %v1467
    %v1469 = vrot.slane %v1430, %v1468
    %v1471 = vadd.f32 %v1463, %v1469
    %v1472 = vadd.f32 %v1464, %v1469
    %s1473 = scalar_lea.vmem %s4, 32
    %v1474 = vld [vmem:[%s1473] sm:$0xff]
    %v1475 = vld [vmem:[%s1473 + $0x8] sm:$0xff]
    %v1476 = vld [vmem:[%s1473 + $0x10] sm:$0xff]
    %v1477 = vld [vmem:[%s1473 + $0x18] sm:$0xff]
    %s1478 = scalar_lea.vmem %s5, 1
    %v1479 = vld [vmem:[%s1478] sm:$0x1]
    %v1481 = vlaneseq
    %v1482 = vshrl.u32 %v1481, 7
    %v1483 = vsub.s32 0, %v1482
    %v1484 = vrot.slane %v1479, %v1483
    %v1487 = vsel %vm82, %v1471, 0
    %v1490 = vsel %vm82, %v1472, 0
    %1492 = vmatprep.subr.mxu0 0.0
    %1493 = vmatpush1.msra.mxu0 0.0
    %1494 = vmatprep.subr.mxu0 0.0
    %1495 = vmatpush1.msra.mxu0 0.0
    %1496 = vmatprep.subr.mxu0 0.0
    %1497 = vmatpush1.msra.mxu0 0.0
    %1498 = vmatprep.subr.mxu0 0.0
    %1499 = vmatpush1.msra.mxu0 0.0
    %1500 = vmatprep.subr.mxu0 0.0
    %1501 = vmatpush1.msra.mxu0 0.0
    %1502 = vmatprep.subr.mxu0 0.0
    %1503 = vmatpush1.msra.mxu0 0.0
    %1504 = vmatprep.subr.mxu0 0.0
    %1505 = vmatpush1.msra.mxu0 0.0
    %1506 = vmatprep.subr.mxu0 0.0
    %1507 = vmatpush1.msra.mxu0 0.0
    %1508 = vmatprep.subr.mxu0 0.0
    %1509 = vmatpush1.msra.mxu0 0.0
    %1510 = vmatprep.subr.mxu0 0.0
    %1511 = vmatpush1.msra.mxu0 0.0
    %1512 = vmatprep.subr.mxu0 0.0
    %1513 = vmatpush1.msra.mxu0 0.0
    %1514 = vmatprep.subr.mxu0 0.0
    %1515 = vmatpush1.msra.mxu0 0.0
    %1516 = vmatprep.subr.mxu0 0.0
    %1517 = vmatpush1.msra.mxu0 %v1477
    %1518 = vmatprep.subr.mxu0 0.0
    %1519 = vmatpush1.msra.mxu0 %v1476
    %1520 = vmatprep.subr.mxu0 0.0
    %1521 = vmatpush1.msra.mxu0 %v1475
    %1522 = vmatprep.subr.mxu0 0.0
    %1523 = vmatpush1.msra.mxu0 %v1474
    %1524 = vmatprep.subr.mxu0 0.0
    %1525 = vmatpush2.msra.mxu0 0.0
    %1526 = vmatprep.subr.mxu0 0.0
    %1527 = vmatpush2.msra.mxu0 0.0
    %1528 = vmatprep.subr.mxu0 0.0
    %1529 = vmatpush2.msra.mxu0 0.0
    %1530 = vmatprep.subr.mxu0 0.0
    %1531 = vmatpush2.msra.mxu0 0.0
    %1532 = vmatprep.subr.mxu0 0.0
    %1533 = vmatpush2.msra.mxu0 0.0
    %1534 = vmatprep.subr.mxu0 0.0
    %1535 = vmatpush2.msra.mxu0 0.0
    %1536 = vmatprep.subr.mxu0 0.0
    %1537 = vmatpush2.msra.mxu0 0.0
    %1538 = vmatprep.subr.mxu0 0.0
    %1539 = vmatpush2.msra.mxu0 0.0
    %1540 = vmatprep.subr.mxu0 0.0
    %1541 = vmatpush2.msra.mxu0 0.0
    %1542 = vmatprep.subr.mxu0 0.0
    %1543 = vmatpush2.msra.mxu0 0.0
    %1544 = vmatprep.subr.mxu0 0.0
    %1545 = vmatpush2.msra.mxu0 0.0
    %1546 = vmatprep.subr.mxu0 0.0
    %1547 = vmatpush2.msra.mxu0 0.0
    %1548 = vmatprep.subr.mxu0 0.0
    %1549 = vmatpush2.msra.mxu0 0.0
    %1550 = vmatprep.subr.mxu0 0.0
    %1551 = vmatpush2.msra.mxu0 0.0
    %1552 = vmatprep.subr.mxu0 0.0
    %1553 = vmatpush2.msra.mxu0 0.0
    %1554 = vmatprep.subr.mxu0 0.0
    %1555 = vmatpush2.msra.mxu0 0.0
    %1556 = vmatprep.mubr.f32.mxu0 0.0
    %1557 = vmatmul.mubr.f32.gmra.mxu0 %v1487
    %v1558 = vpop.f32.mrf.mxu0
    %v1559 = vadd.f32 %v1484, %v1558
    %v1560 = vpop.f32.mrf.mxu0
    %1561 = vmatprep.mubr.f32.mxu0 0.0
    %1562 = vmatmul.mubr.f32.gmra.mxu0 %v1490
    %v1563 = vpop.f32.mrf.mxu0
    %v1564 = vadd.f32 %v1484, %v1563
    %v1565 = vpop.f32.mrf.mxu0
    %1566 = vdwg.mxu0
    %s1567 = scalar_lea.vmem %s6, 32
    %v1568 = vld [vmem:[%s1567] sm:$0xff]
    %v1569 = vld [vmem:[%s1567 + $0x8] sm:$0xff]
    %v1570 = vld [vmem:[%s1567 + $0x10] sm:$0xff]
    %v1571 = vld [vmem:[%s1567 + $0x18] sm:$0xff]
    %s1572 = scalar_lea.vmem %s7, 1
    %v1573 = vld [vmem:[%s1572] sm:$0x1]
    %v1575 = vlaneseq
    %v1576 = vshrl.u32 %v1575, 7
    %v1577 = vsub.s32 0, %v1576
    %v1578 = vrot.slane %v1573, %v1577
    %1580 = vmatprep.subr.mxu0 0.0
    %1581 = vmatpush1.msra.mxu0 0.0
    %1582 = vmatprep.subr.mxu0 0.0
    %1583 = vmatpush1.msra.mxu0 0.0
    %1584 = vmatprep.subr.mxu0 0.0
    %1585 = vmatpush1.msra.mxu0 0.0
    %1586 = vmatprep.subr.mxu0 0.0
    %1587 = vmatpush1.msra.mxu0 0.0
    %1588 = vmatprep.subr.mxu0 0.0
    %1589 = vmatpush1.msra.mxu0 0.0
    %1590 = vmatprep.subr.mxu0 0.0
    %1591 = vmatpush1.msra.mxu0 0.0
    %1592 = vmatprep.subr.mxu0 0.0
    %1593 = vmatpush1.msra.mxu0 0.0
    %1594 = vmatprep.subr.mxu0 0.0
    %1595 = vmatpush1.msra.mxu0 0.0
    %1596 = vmatprep.subr.mxu0 0.0
    %1597 = vmatpush1.msra.mxu0 0.0
    %1598 = vmatprep.subr.mxu0 0.0
    %1599 = vmatpush1.msra.mxu0 0.0
    %1600 = vmatprep.subr.mxu0 0.0
    %1601 = vmatpush1.msra.mxu0 0.0
    %1602 = vmatprep.subr.mxu0 0.0
    %1603 = vmatpush1.msra.mxu0 0.0
    %1604 = vmatprep.subr.mxu0 0.0
    %1605 = vmatpush1.msra.mxu0 %v1571
    %1606 = vmatprep.subr.mxu0 0.0
    %1607 = vmatpush1.msra.mxu0 %v1570
    %1608 = vmatprep.subr.mxu0 0.0
    %1609 = vmatpush1.msra.mxu0 %v1569
    %1610 = vmatprep.subr.mxu0 0.0
    %1611 = vmatpush1.msra.mxu0 %v1568
    %1612 = vmatprep.subr.mxu0 0.0
    %1613 = vmatpush2.msra.mxu0 0.0
    %1614 = vmatprep.subr.mxu0 0.0
    %1615 = vmatpush2.msra.mxu0 0.0
    %1616 = vmatprep.subr.mxu0 0.0
    %1617 = vmatpush2.msra.mxu0 0.0
    %1618 = vmatprep.subr.mxu0 0.0
    %1619 = vmatpush2.msra.mxu0 0.0
    %1620 = vmatprep.subr.mxu0 0.0
    %1621 = vmatpush2.msra.mxu0 0.0
    %1622 = vmatprep.subr.mxu0 0.0
    %1623 = vmatpush2.msra.mxu0 0.0
    %1624 = vmatprep.subr.mxu0 0.0
    %1625 = vmatpush2.msra.mxu0 0.0
    %1626 = vmatprep.subr.mxu0 0.0
    %1627 = vmatpush2.msra.mxu0 0.0
    %1628 = vmatprep.subr.mxu0 0.0
    %1629 = vmatpush2.msra.mxu0 0.0
    %1630 = vmatprep.subr.mxu0 0.0
    %1631 = vmatpush2.msra.mxu0 0.0
    %1632 = vmatprep.subr.mxu0 0.0
    %1633 = vmatpush2.msra.mxu0 0.0
    %1634 = vmatprep.subr.mxu0 0.0
    %1635 = vmatpush2.msra.mxu0 0.0
    %1636 = vmatprep.subr.mxu0 0.0
    %1637 = vmatpush2.msra.mxu0 0.0
    %1638 = vmatprep.subr.mxu0 0.0
    %1639 = vmatpush2.msra.mxu0 0.0
    %1640 = vmatprep.subr.mxu0 0.0
    %1641 = vmatpush2.msra.mxu0 0.0
    %1642 = vmatprep.subr.mxu0 0.0
    %1643 = vmatpush2.msra.mxu0 0.0
    %1644 = vmatprep.mubr.f32.mxu0 0.0
    %1645 = vmatmul.mubr.f32.gmra.mxu0 %v1487
    %v1646 = vpop.f32.mrf.mxu0
    %v1647 = vadd.f32 %v1578, %v1646
    %v1648 = vpop.f32.mrf.mxu0
    %1649 = vmatprep.mubr.f32.mxu0 0.0
    %1650 = vmatmul.mubr.f32.gmra.mxu0 %v1490
    %v1651 = vpop.f32.mrf.mxu0
    %v1652 = vadd.f32 %v1578, %v1651
    %v1653 = vpop.f32.mrf.mxu0
    %1654 = vdwg.mxu0
    %s1655 = scalar_lea.vmem %s8, 32
    %v1656 = vld [vmem:[%s1655] sm:$0xff]
    %v1657 = vld [vmem:[%s1655 + $0x8] sm:$0xff]
    %v1658 = vld [vmem:[%s1655 + $0x10] sm:$0xff]
    %v1659 = vld [vmem:[%s1655 + $0x18] sm:$0xff]
    %s1660 = scalar_lea.vmem %s9, 1
    %v1661 = vld [vmem:[%s1660] sm:$0x1]
    %v1663 = vlaneseq
    %v1664 = vshrl.u32 %v1663, 7
    %v1665 = vsub.s32 0, %v1664
    %v1666 = vrot.slane %v1661, %v1665
    %1668 = vmatprep.subr.mxu0 0.0
    %1669 = vmatpush1.msra.mxu0 0.0
    %1670 = vmatprep.subr.mxu0 0.0
    %1671 = vmatpush1.msra.mxu0 0.0
    %1672 = vmatprep.subr.mxu0 0.0
    %1673 = vmatpush1.msra.mxu0 0.0
    %1674 = vmatprep.subr.mxu0 0.0
    %1675 = vmatpush1.msra.mxu0 0.0
    %1676 = vmatprep.subr.mxu0 0.0
    %1677 = vmatpush1.msra.mxu0 0.0
    %1678 = vmatprep.subr.mxu0 0.0
    %1679 = vmatpush1.msra.mxu0 0.0
    %1680 = vmatprep.subr.mxu0 0.0
    %1681 = vmatpush1.msra.mxu0 0.0
    %1682 = vmatprep.subr.mxu0 0.0
    %1683 = vmatpush1.msra.mxu0 0.0
    %1684 = vmatprep.subr.mxu0 0.0
    %1685 = vmatpush1.msra.mxu0 0.0
    %1686 = vmatprep.subr.mxu0 0.0
    %1687 = vmatpush1.msra.mxu0 0.0
    %1688 = vmatprep.subr.mxu0 0.0
    %1689 = vmatpush1.msra.mxu0 0.0
    %1690 = vmatprep.subr.mxu0 0.0
    %1691 = vmatpush1.msra.mxu0 0.0
    %1692 = vmatprep.subr.mxu0 0.0
    %1693 = vmatpush1.msra.mxu0 %v1659
    %1694 = vmatprep.subr.mxu0 0.0
    %1695 = vmatpush1.msra.mxu0 %v1658
    %1696 = vmatprep.subr.mxu0 0.0
    %1697 = vmatpush1.msra.mxu0 %v1657
    %1698 = vmatprep.subr.mxu0 0.0
    %1699 = vmatpush1.msra.mxu0 %v1656
    %1700 = vmatprep.subr.mxu0 0.0
    %1701 = vmatpush2.msra.mxu0 0.0
    %1702 = vmatprep.subr.mxu0 0.0
    %1703 = vmatpush2.msra.mxu0 0.0
    %1704 = vmatprep.subr.mxu0 0.0
    %1705 = vmatpush2.msra.mxu0 0.0
    %1706 = vmatprep.subr.mxu0 0.0
    %1707 = vmatpush2.msra.mxu0 0.0
    %1708 = vmatprep.subr.mxu0 0.0
    %1709 = vmatpush2.msra.mxu0 0.0
    %1710 = vmatprep.subr.mxu0 0.0
    %1711 = vmatpush2.msra.mxu0 0.0
    %1712 = vmatprep.subr.mxu0 0.0
    %1713 = vmatpush2.msra.mxu0 0.0
    %1714 = vmatprep.subr.mxu0 0.0
    %1715 = vmatpush2.msra.mxu0 0.0
    %1716 = vmatprep.subr.mxu0 0.0
    %1717 = vmatpush2.msra.mxu0 0.0
    %1718 = vmatprep.subr.mxu0 0.0
    %1719 = vmatpush2.msra.mxu0 0.0
    %1720 = vmatprep.subr.mxu0 0.0
    %1721 = vmatpush2.msra.mxu0 0.0
    %1722 = vmatprep.subr.mxu0 0.0
    %1723 = vmatpush2.msra.mxu0 0.0
    %1724 = vmatprep.subr.mxu0 0.0
    %1725 = vmatpush2.msra.mxu0 0.0
    %1726 = vmatprep.subr.mxu0 0.0
    %1727 = vmatpush2.msra.mxu0 0.0
    %1728 = vmatprep.subr.mxu0 0.0
    %1729 = vmatpush2.msra.mxu0 0.0
    %1730 = vmatprep.subr.mxu0 0.0
    %1731 = vmatpush2.msra.mxu0 0.0
    %1732 = vmatprep.mubr.f32.mxu0 0.0
    %1733 = vmatmul.mubr.f32.gmra.mxu0 %v1487
    %v1734 = vpop.f32.mrf.mxu0
    %v1735 = vadd.f32 %v1666, %v1734
    %v1736 = vpop.f32.mrf.mxu0
    %1737 = vmatprep.mubr.f32.mxu0 0.0
    %1738 = vmatmul.mubr.f32.gmra.mxu0 %v1490
    %v1739 = vpop.f32.mrf.mxu0
    %v1740 = vadd.f32 %v1666, %v1739
    %v1741 = vpop.f32.mrf.mxu0
    %1742 = vdwg.mxu0
    %v1743 = vld [vmem:[%s1] sm:$0x1]
    %v1745 = vsel %vm391, %v1559, 0
    %v1748 = vsel %vm391, %v1647, 0
    %1750 = vmatprep.subr.mxu0 0.0
    %1751 = vmatpush1.xpose.msra.mxu0 0.0
    %1752 = vmatprep.subr.mxu0 0.0
    %1753 = vmatpush1.xpose.msra.mxu0 0.0
    %1754 = vmatprep.subr.mxu0 0.0
    %1755 = vmatpush1.xpose.msra.mxu0 0.0
    %1756 = vmatprep.subr.mxu0 0.0
    %1757 = vmatpush1.xpose.msra.mxu0 0.0
    %1758 = vmatprep.subr.mxu0 0.0
    %1759 = vmatpush1.xpose.msra.mxu0 0.0
    %1760 = vmatprep.subr.mxu0 0.0
    %1761 = vmatpush1.xpose.msra.mxu0 0.0
    %1762 = vmatprep.subr.mxu0 0.0
    %1763 = vmatpush1.xpose.msra.mxu0 0.0
    %1764 = vmatprep.subr.mxu0 0.0
    %1765 = vmatpush1.xpose.msra.mxu0 0.0
    %1766 = vmatprep.subr.mxu0 0.0
    %1767 = vmatpush1.xpose.msra.mxu0 0.0
    %1768 = vmatprep.subr.mxu0 0.0
    %1769 = vmatpush1.xpose.msra.mxu0 0.0
    %1770 = vmatprep.subr.mxu0 0.0
    %1771 = vmatpush1.xpose.msra.mxu0 0.0
    %1772 = vmatprep.subr.mxu0 0.0
    %1773 = vmatpush1.xpose.msra.mxu0 0.0
    %1774 = vmatprep.subr.mxu0 0.0
    %1775 = vmatpush1.xpose.msra.mxu0 0.0
    %1776 = vmatprep.subr.mxu0 0.0
    %1777 = vmatpush1.xpose.msra.mxu0 0.0
    %1778 = vmatprep.subr.mxu0 0.0
    %1779 = vmatpush1.xpose.msra.mxu0 0.0
    %1780 = vmatprep.subr.mxu0 0.0
    %1781 = vmatpush1.xpose.msra.mxu0 %v1748
    %1782 = vmatprep.subr.mxu0 0.0
    %1783 = vmatpush2.xpose.msra.mxu0 0.0
    %1784 = vmatprep.subr.mxu0 0.0
    %1785 = vmatpush2.xpose.msra.mxu0 0.0
    %1786 = vmatprep.subr.mxu0 0.0
    %1787 = vmatpush2.xpose.msra.mxu0 0.0
    %1788 = vmatprep.subr.mxu0 0.0
    %1789 = vmatpush2.xpose.msra.mxu0 0.0
    %1790 = vmatprep.subr.mxu0 0.0
    %1791 = vmatpush2.xpose.msra.mxu0 0.0
    %1792 = vmatprep.subr.mxu0 0.0
    %1793 = vmatpush2.xpose.msra.mxu0 0.0
    %1794 = vmatprep.subr.mxu0 0.0
    %1795 = vmatpush2.xpose.msra.mxu0 0.0
    %1796 = vmatprep.subr.mxu0 0.0
    %1797 = vmatpush2.xpose.msra.mxu0 0.0
    %1798 = vmatprep.subr.mxu0 0.0
    %1799 = vmatpush2.xpose.msra.mxu0 0.0
    %1800 = vmatprep.subr.mxu0 0.0
    %1801 = vmatpush2.xpose.msra.mxu0 0.0
    %1802 = vmatprep.subr.mxu0 0.0
    %1803 = vmatpush2.xpose.msra.mxu0 0.0
    %1804 = vmatprep.subr.mxu0 0.0
    %1805 = vmatpush2.xpose.msra.mxu0 0.0
    %1806 = vmatprep.subr.mxu0 0.0
    %1807 = vmatpush2.xpose.msra.mxu0 0.0
    %1808 = vmatprep.subr.mxu0 0.0
    %1809 = vmatpush2.xpose.msra.mxu0 0.0
    %1810 = vmatprep.subr.mxu0 0.0
    %1811 = vmatpush2.xpose.msra.mxu0 0.0
    %1812 = vmatprep.subr.mxu0 0.0
    %1813 = vmatpush2.xpose.msra.mxu0 0.0
    %1814 = vmatprep.mubr.f32.mxu0 0.0
    %1815 = vmatmul.mubr.f32.gmra.mxu0 %v1745
    %v1816 = vpop.f32.mrf.mxu0
    %v1817 = vadd.f32 0.0, %v1816
    %v1818 = vpop.f32.mrf.mxu0
    %1819 = vdwg.mxu0
    %v1820 = vmul.f32 %v1817, 0.25
    %v1822 = vlaneseq
    %v1823 = vshrl.u32 %v1822, 7
    %v1824 = vsub.s32 0, %v1823
    %v1825 = vrot.slane %v1743, %v1824
    %v1827 = vadd.f32 %v1820, %v1825
    %v1828 = vsel %vm476, %v1827, -inf
    %1829 = vmax.xlane.f32.xlu0 %v1828
    %v1830 = vpop.xlane.xlu0 %1829
    %v1831 = vsub.f32 %v1827, %v1830
    %v1832 = vmul.f32 %v1831, 1.442695
    %v1833 = vpow.pop %v1832
    %v1834 = vsel %vm476, %v1833, 0.0
    %1835 = vadd.xlane.f32.xlu0 %v1834
    %v1836 = vpop.xlane.xlu0 %1835
    %v1837 = vrcp.pop %v1836
    %v1838 = vmul.f32 %v1833, %v1837
    %v1840 = vsel %vm476, %v1838, 0
    %1842 = vmatprep.subr.mxu0 0.0
    %1843 = vmatpush1.msra.mxu0 0.0
    %1844 = vmatprep.subr.mxu0 0.0
    %1845 = vmatpush1.msra.mxu0 0.0
    %1846 = vmatprep.subr.mxu0 0.0
    %1847 = vmatpush1.msra.mxu0 0.0
    %1848 = vmatprep.subr.mxu0 0.0
    %1849 = vmatpush1.msra.mxu0 0.0
    %1850 = vmatprep.subr.mxu0 0.0
    %1851 = vmatpush1.msra.mxu0 0.0
    %1852 = vmatprep.subr.mxu0 0.0
    %1853 = vmatpush1.msra.mxu0 0.0
    %1854 = vmatprep.subr.mxu0 0.0
    %1855 = vmatpush1.msra.mxu0 0.0
    %1856 = vmatprep.subr.mxu0 0.0
    %1857 = vmatpush1.msra.mxu0 0.0
    %1858 = vmatprep.subr.mxu0 0.0
    %1859 = vmatpush1.msra.mxu0 0.0
    %1860 = vmatprep.subr.mxu0 0.0
    %1861 = vmatpush1.msra.mxu0 0.0
    %1862 = vmatprep.subr.mxu0 0.0
    %1863 = vmatpush1.msra.mxu0 0.0
    %1864 = vmatprep.subr.mxu0 0.0
    %1865 = vmatpush1.msra.mxu0 0.0
    %1866 = vmatprep.subr.mxu0 0.0
    %1867 = vmatpush1.msra.mxu0 0.0
    %1868 = vmatprep.subr.mxu0 0.0
    %1869 = vmatpush1.msra.mxu0 0.0
    %1870 = vmatprep.subr.mxu0 0.0
    %1871 = vmatpush1.msra.mxu0 0.0
    %1872 = vmatprep.subr.mxu0 0.0
    %1873 = vmatpush1.msra.mxu0 %v1735
    %1874 = vmatprep.subr.mxu0 0.0
    %1875 = vmatpush2.msra.mxu0 0.0
    %1876 = vmatprep.subr.mxu0 0.0
    %1877 = vmatpush2.msra.mxu0 0.0
    %1878 = vmatprep.subr.mxu0 0.0
    %1879 = vmatpush2.msra.mxu0 0.0
    %1880 = vmatprep.subr.mxu0 0.0
    %1881 = vmatpush2.msra.mxu0 0.0
    %1882 = vmatprep.subr.mxu0 0.0
    %1883 = vmatpush2.msra.mxu0 0.0
    %1884 = vmatprep.subr.mxu0 0.0
    %1885 = vmatpush2.msra.mxu0 0.0
    %1886 = vmatprep.subr.mxu0 0.0
    %1887 = vmatpush2.msra.mxu0 0.0
    %1888 = vmatprep.subr.mxu0 0.0
    %1889 = vmatpush2.msra.mxu0 0.0
    %1890 = vmatprep.subr.mxu0 0.0
    %1891 = vmatpush2.msra.mxu0 0.0
    %1892 = vmatprep.subr.mxu0 0.0
    %1893 = vmatpush2.msra.mxu0 0.0
    %1894 = vmatprep.subr.mxu0 0.0
    %1895 = vmatpush2.msra.mxu0 0.0
    %1896 = vmatprep.subr.mxu0 0.0
    %1897 = vmatpush2.msra.mxu0 0.0
    %1898 = vmatprep.subr.mxu0 0.0
    %1899 = vmatpush2.msra.mxu0 0.0
    %1900 = vmatprep.subr.mxu0 0.0
    %1901 = vmatpush2.msra.mxu0 0.0
    %1902 = vmatprep.subr.mxu0 0.0
    %1903 = vmatpush2.msra.mxu0 0.0
    %1904 = vmatprep.subr.mxu0 0.0
    %1905 = vmatpush2.msra.mxu0 0.0
    %1906 = vmatprep.mubr.f32.mxu0 0.0
    %1907 = vmatmul.mubr.f32.gmra.mxu0 %v1840
    %v1908 = vpop.f32.mrf.mxu0
    %v1909 = vadd.f32 0.0, %v1908
    %v1910 = vpop.f32.mrf.mxu0
    %1911 = vdwg.mxu0
    %1912 = vst.msk [vmem:[#allocation2] sm:$0xff] %vm391, %v1909
    %1913 = vrot.lane.b32.xlu0 %v1559, 112
    %v1914 = vpop.permute.xlu0 %1913
    %1915 = vrot.lane.b32.xlu0 %v1647, 112
    %v1916 = vpop.permute.xlu0 %1915
    %v1917 = vsel %vm391, %v1914, 0
    %v1919 = vsel %vm391, %v1916, 0
    %1921 = vmatprep.subr.mxu0 0.0
    %1922 = vmatpush1.xpose.msra.mxu0 0.0
    %1923 = vmatprep.subr.mxu0 0.0
    %1924 = vmatpush1.xpose.msra.mxu0 0.0
    %1925 = vmatprep.subr.mxu0 0.0
    %1926 = vmatpush1.xpose.msra.mxu0 0.0
    %1927 = vmatprep.subr.mxu0 0.0
    %1928 = vmatpush1.xpose.msra.mxu0 0.0
    %1929 = vmatprep.subr.mxu0 0.0
    %1930 = vmatpush1.xpose.msra.mxu0 0.0
    %1931 = vmatprep.subr.mxu0 0.0
    %1932 = vmatpush1.xpose.msra.mxu0 0.0
    %1933 = vmatprep.subr.mxu0 0.0
    %1934 = vmatpush1.xpose.msra.mxu0 0.0
    %1935 = vmatprep.subr.mxu0 0.0
    %1936 = vmatpush1.xpose.msra.mxu0 0.0
    %1937 = vmatprep.subr.mxu0 0.0
    %1938 = vmatpush1.xpose.msra.mxu0 0.0
    %1939 = vmatprep.subr.mxu0 0.0
    %1940 = vmatpush1.xpose.msra.mxu0 0.0
    %1941 = vmatprep.subr.mxu0 0.0
    %1942 = vmatpush1.xpose.msra.mxu0 0.0
    %1943 = vmatprep.subr.mxu0 0.0
    %1944 = vmatpush1.xpose.msra.mxu0 0.0
    %1945 = vmatprep.subr.mxu0 0.0
    %1946 = vmatpush1.xpose.msra.mxu0 0.0
    %1947 = vmatprep.subr.mxu0 0.0
    %1948 = vmatpush1.xpose.msra.mxu0 0.0
    %1949 = vmatprep.subr.mxu0 0.0
    %1950 = vmatpush1.xpose.msra.mxu0 0.0
    %1951 = vmatprep.subr.mxu0 0.0
    %1952 = vmatpush1.xpose.msra.mxu0 %v1919
    %1953 = vmatprep.subr.mxu0 0.0
    %1954 = vmatpush2.xpose.msra.mxu0 0.0
    %1955 = vmatprep.subr.mxu0 0.0
    %1956 = vmatpush2.xpose.msra.mxu0 0.0
    %1957 = vmatprep.subr.mxu0 0.0
    %1958 = vmatpush2.xpose.msra.mxu0 0.0
    %1959 = vmatprep.subr.mxu0 0.0
    %1960 = vmatpush2.xpose.msra.mxu0 0.0
    %1961 = vmatprep.subr.mxu0 0.0
    %1962 = vmatpush2.xpose.msra.mxu0 0.0
    %1963 = vmatprep.subr.mxu0 0.0
    %1964 = vmatpush2.xpose.msra.mxu0 0.0
    %1965 = vmatprep.subr.mxu0 0.0
    %1966 = vmatpush2.xpose.msra.mxu0 0.0
    %1967 = vmatprep.subr.mxu0 0.0
    %1968 = vmatpush2.xpose.msra.mxu0 0.0
    %1969 = vmatprep.subr.mxu0 0.0
    %1970 = vmatpush2.xpose.msra.mxu0 0.0
    %1971 = vmatprep.subr.mxu0 0.0
    %1972 = vmatpush2.xpose.msra.mxu0 0.0
    %1973 = vmatprep.subr.mxu0 0.0
    %1974 = vmatpush2.xpose.msra.mxu0 0.0
    %1975 = vmatprep.subr.mxu0 0.0
    %1976 = vmatpush2.xpose.msra.mxu0 0.0
    %1977 = vmatprep.subr.mxu0 0.0
    %1978 = vmatpush2.xpose.msra.mxu0 0.0
    %1979 = vmatprep.subr.mxu0 0.0
    %1980 = vmatpush2.xpose.msra.mxu0 0.0
    %1981 = vmatprep.subr.mxu0 0.0
    %1982 = vmatpush2.xpose.msra.mxu0 0.0
    %1983 = vmatprep.subr.mxu0 0.0
    %1984 = vmatpush2.xpose.msra.mxu0 0.0
    %1985 = vmatprep.mubr.f32.mxu0 0.0
    %1986 = vmatmul.mubr.f32.gmra.mxu0 %v1917
    %v1987 = vpop.f32.mrf.mxu0
    %v1988 = vadd.f32 0.0, %v1987
    %v1989 = vpop.f32.mrf.mxu0
    %1990 = vdwg.mxu0
    %v1991 = vmul.f32 %v1988, 0.25
    %v1992 = vadd.f32 %v1991, %v1825
    %v1993 = vsel %vm476, %v1992, -inf
    %1994 = vmax.xlane.f32.xlu0 %v1993
    %v1995 = vpop.xlane.xlu0 %1994
    %v1996 = vsub.f32 %v1992, %v1995
    %v1997 = vmul.f32 %v1996, 1.442695
    %v1998 = vpow.pop %v1997
    %v1999 = vsel %vm476, %v1998, 0.0
    %2000 = vadd.xlane.f32.xlu0 %v1999
    %v2001 = vpop.xlane.xlu0 %2000
    %v2002 = vrcp.pop %v2001
    %v2003 = vmul.f32 %v1998, %v2002
    %2005 = vrot.lane.b32.xlu0 %v1735, 112
    %v2006 = vpop.permute.xlu0 %2005
    %v2009 = vsel %vm476, %v2003, 0
    %2011 = vmatprep.subr.mxu0 0.0
    %2012 = vmatpush1.msra.mxu0 0.0
    %2013 = vmatprep.subr.mxu0 0.0
    %2014 = vmatpush1.msra.mxu0 0.0
    %2015 = vmatprep.subr.mxu0 0.0
    %2016 = vmatpush1.msra.mxu0 0.0
    %2017 = vmatprep.subr.mxu0 0.0
    %2018 = vmatpush1.msra.mxu0 0.0
    %2019 = vmatprep.subr.mxu0 0.0
    %2020 = vmatpush1.msra.mxu0 0.0
    %2021 = vmatprep.subr.mxu0 0.0
    %2022 = vmatpush1.msra.mxu0 0.0
    %2023 = vmatprep.subr.mxu0 0.0
    %2024 = vmatpush1.msra.mxu0 0.0
    %2025 = vmatprep.subr.mxu0 0.0
    %2026 = vmatpush1.msra.mxu0 0.0
    %2027 = vmatprep.subr.mxu0 0.0
    %2028 = vmatpush1.msra.mxu0 0.0
    %2029 = vmatprep.subr.mxu0 0.0
    %2030 = vmatpush1.msra.mxu0 0.0
    %2031 = vmatprep.subr.mxu0 0.0
    %2032 = vmatpush1.msra.mxu0 0.0
    %2033 = vmatprep.subr.mxu0 0.0
    %2034 = vmatpush1.msra.mxu0 0.0
    %2035 = vmatprep.subr.mxu0 0.0
    %2036 = vmatpush1.msra.mxu0 0.0
    %2037 = vmatprep.subr.mxu0 0.0
    %2038 = vmatpush1.msra.mxu0 0.0
    %2039 = vmatprep.subr.mxu0 0.0
    %2040 = vmatpush1.msra.mxu0 0.0
    %2041 = vmatprep.subr.mxu0 0.0
    %2042 = vmatpush1.msra.mxu0 %v2006
    %2043 = vmatprep.subr.mxu0 0.0
    %2044 = vmatpush2.msra.mxu0 0.0
    %2045 = vmatprep.subr.mxu0 0.0
    %2046 = vmatpush2.msra.mxu0 0.0
    %2047 = vmatprep.subr.mxu0 0.0
    %2048 = vmatpush2.msra.mxu0 0.0
    %2049 = vmatprep.subr.mxu0 0.0
    %2050 = vmatpush2.msra.mxu0 0.0
    %2051 = vmatprep.subr.mxu0 0.0
    %2052 = vmatpush2.msra.mxu0 0.0
    %2053 = vmatprep.subr.mxu0 0.0
    %2054 = vmatpush2.msra.mxu0 0.0
    %2055 = vmatprep.subr.mxu0 0.0
    %2056 = vmatpush2.msra.mxu0 0.0
    %2057 = vmatprep.subr.mxu0 0.0
    %2058 = vmatpush2.msra.mxu0 0.0
    %2059 = vmatprep.subr.mxu0 0.0
    %2060 = vmatpush2.msra.mxu0 0.0
    %2061 = vmatprep.subr.mxu0 0.0
    %2062 = vmatpush2.msra.mxu0 0.0
    %2063 = vmatprep.subr.mxu0 0.0
    %2064 = vmatpush2.msra.mxu0 0.0
    %2065 = vmatprep.subr.mxu0 0.0
    %2066 = vmatpush2.msra.mxu0 0.0
    %2067 = vmatprep.subr.mxu0 0.0
    %2068 = vmatpush2.msra.mxu0 0.0
    %2069 = vmatprep.subr.mxu0 0.0
    %2070 = vmatpush2.msra.mxu0 0.0
    %2071 = vmatprep.subr.mxu0 0.0
    %2072 = vmatpush2.msra.mxu0 0.0
    %2073 = vmatprep.subr.mxu0 0.0
    %2074 = vmatpush2.msra.mxu0 0.0
    %2075 = vmatprep.mubr.f32.mxu0 0.0
    %2076 = vmatmul.mubr.f32.gmra.mxu0 %v2009
    %v2077 = vpop.f32.mrf.mxu0
    %v2078 = vadd.f32 0.0, %v2077
    %v2079 = vpop.f32.mrf.mxu0
    %2080 = vdwg.mxu0
    %2082 = vrot.lane.b32.xlu0 %v2078, 16
    %v2083 = vpop.permute.xlu0 %2082
    %2085 = vst.msk [vmem:[#allocation2] sm:$0xff] %vm734, %v2083
    %v2086 = vld [vmem:[%s736] sm:$0x1]
    %v2088 = vsel %vm391, %v1564, 0
    %v2091 = vsel %vm391, %v1652, 0
    %2093 = vmatprep.subr.mxu0 0.0
    %2094 = vmatpush1.xpose.msra.mxu0 0.0
    %2095 = vmatprep.subr.mxu0 0.0
    %2096 = vmatpush1.xpose.msra.mxu0 0.0
    %2097 = vmatprep.subr.mxu0 0.0
    %2098 = vmatpush1.xpose.msra.mxu0 0.0
    %2099 = vmatprep.subr.mxu0 0.0
    %2100 = vmatpush1.xpose.msra.mxu0 0.0
    %2101 = vmatprep.subr.mxu0 0.0
    %2102 = vmatpush1.xpose.msra.mxu0 0.0
    %2103 = vmatprep.subr.mxu0 0.0
    %2104 = vmatpush1.xpose.msra.mxu0 0.0
    %2105 = vmatprep.subr.mxu0 0.0
    %2106 = vmatpush1.xpose.msra.mxu0 0.0
    %2107 = vmatprep.subr.mxu0 0.0
    %2108 = vmatpush1.xpose.msra.mxu0 0.0
    %2109 = vmatprep.subr.mxu0 0.0
    %2110 = vmatpush1.xpose.msra.mxu0 0.0
    %2111 = vmatprep.subr.mxu0 0.0
    %2112 = vmatpush1.xpose.msra.mxu0 0.0
    %2113 = vmatprep.subr.mxu0 0.0
    %2114 = vmatpush1.xpose.msra.mxu0 0.0
    %2115 = vmatprep.subr.mxu0 0.0
    %2116 = vmatpush1.xpose.msra.mxu0 0.0
    %2117 = vmatprep.subr.mxu0 0.0
    %2118 = vmatpush1.xpose.msra.mxu0 0.0
    %2119 = vmatprep.subr.mxu0 0.0
    %2120 = vmatpush1.xpose.msra.mxu0 0.0
    %2121 = vmatprep.subr.mxu0 0.0
    %2122 = vmatpush1.xpose.msra.mxu0 0.0
    %2123 = vmatprep.subr.mxu0 0.0
    %2124 = vmatpush1.xpose.msra.mxu0 %v2091
    %2125 = vmatprep.subr.mxu0 0.0
    %2126 = vmatpush2.xpose.msra.mxu0 0.0
    %2127 = vmatprep.subr.mxu0 0.0
    %2128 = vmatpush2.xpose.msra.mxu0 0.0
    %2129 = vmatprep.subr.mxu0 0.0
    %2130 = vmatpush2.xpose.msra.mxu0 0.0
    %2131 = vmatprep.subr.mxu0 0.0
    %2132 = vmatpush2.xpose.msra.mxu0 0.0
    %2133 = vmatprep.subr.mxu0 0.0
    %2134 = vmatpush2.xpose.msra.mxu0 0.0
    %2135 = vmatprep.subr.mxu0 0.0
    %2136 = vmatpush2.xpose.msra.mxu0 0.0
    %2137 = vmatprep.subr.mxu0 0.0
    %2138 = vmatpush2.xpose.msra.mxu0 0.0
    %2139 = vmatprep.subr.mxu0 0.0
    %2140 = vmatpush2.xpose.msra.mxu0 0.0
    %2141 = vmatprep.subr.mxu0 0.0
    %2142 = vmatpush2.xpose.msra.mxu0 0.0
    %2143 = vmatprep.subr.mxu0 0.0
    %2144 = vmatpush2.xpose.msra.mxu0 0.0
    %2145 = vmatprep.subr.mxu0 0.0
    %2146 = vmatpush2.xpose.msra.mxu0 0.0
    %2147 = vmatprep.subr.mxu0 0.0
    %2148 = vmatpush2.xpose.msra.mxu0 0.0
    %2149 = vmatprep.subr.mxu0 0.0
    %2150 = vmatpush2.xpose.msra.mxu0 0.0
    %2151 = vmatprep.subr.mxu0 0.0
    %2152 = vmatpush2.xpose.msra.mxu0 0.0
    %2153 = vmatprep.subr.mxu0 0.0
    %2154 = vmatpush2.xpose.msra.mxu0 0.0
    %2155 = vmatprep.subr.mxu0 0.0
    %2156 = vmatpush2.xpose.msra.mxu0 0.0
    %2157 = vmatprep.mubr.f32.mxu0 0.0
    %2158 = vmatmul.mubr.f32.gmra.mxu0 %v2088
    %v2159 = vpop.f32.mrf.mxu0
    %v2160 = vadd.f32 0.0, %v2159
    %v2161 = vpop.f32.mrf.mxu0
    %2162 = vdwg.mxu0
    %v2163 = vmul.f32 %v2160, 0.25
    %v2165 = vlaneseq
    %v2166 = vshrl.u32 %v2165, 7
    %v2167 = vsub.s32 0, %v2166
    %v2168 = vrot.slane %v2086, %v2167
    %v2170 = vadd.f32 %v2163, %v2168
    %v2171 = vsel %vm476, %v2170, -inf
    %2172 = vmax.xlane.f32.xlu0 %v2171
    %v2173 = vpop.xlane.xlu0 %2172
    %v2174 = vsub.f32 %v2170, %v2173
    %v2175 = vmul.f32 %v2174, 1.442695
    %v2176 = vpow.pop %v2175
    %v2177 = vsel %vm476, %v2176, 0.0
    %2178 = vadd.xlane.f32.xlu0 %v2177
    %v2179 = vpop.xlane.xlu0 %2178
    %v2180 = vrcp.pop %v2179
    %v2181 = vmul.f32 %v2176, %v2180
    %v2183 = vsel %vm476, %v2181, 0
    %2185 = vmatprep.subr.mxu0 0.0
    %2186 = vmatpush1.msra.mxu0 0.0
    %2187 = vmatprep.subr.mxu0 0.0
    %2188 = vmatpush1.msra.mxu0 0.0
    %2189 = vmatprep.subr.mxu0 0.0
    %2190 = vmatpush1.msra.mxu0 0.0
    %2191 = vmatprep.subr.mxu0 0.0
    %2192 = vmatpush1.msra.mxu0 0.0
    %2193 = vmatprep.subr.mxu0 0.0
    %2194 = vmatpush1.msra.mxu0 0.0
    %2195 = vmatprep.subr.mxu0 0.0
    %2196 = vmatpush1.msra.mxu0 0.0
    %2197 = vmatprep.subr.mxu0 0.0
    %2198 = vmatpush1.msra.mxu0 0.0
    %2199 = vmatprep.subr.mxu0 0.0
    %2200 = vmatpush1.msra.mxu0 0.0
    %2201 = vmatprep.subr.mxu0 0.0
    %2202 = vmatpush1.msra.mxu0 0.0
    %2203 = vmatprep.subr.mxu0 0.0
    %2204 = vmatpush1.msra.mxu0 0.0
    %2205 = vmatprep.subr.mxu0 0.0
    %2206 = vmatpush1.msra.mxu0 0.0
    %2207 = vmatprep.subr.mxu0 0.0
    %2208 = vmatpush1.msra.mxu0 0.0
    %2209 = vmatprep.subr.mxu0 0.0
    %2210 = vmatpush1.msra.mxu0 0.0
    %2211 = vmatprep.subr.mxu0 0.0
    %2212 = vmatpush1.msra.mxu0 0.0
    %2213 = vmatprep.subr.mxu0 0.0
    %2214 = vmatpush1.msra.mxu0 0.0
    %2215 = vmatprep.subr.mxu0 0.0
    %2216 = vmatpush1.msra.mxu0 %v1740
    %2217 = vmatprep.subr.mxu0 0.0
    %2218 = vmatpush2.msra.mxu0 0.0
    %2219 = vmatprep.subr.mxu0 0.0
    %2220 = vmatpush2.msra.mxu0 0.0
    %2221 = vmatprep.subr.mxu0 0.0
    %2222 = vmatpush2.msra.mxu0 0.0
    %2223 = vmatprep.subr.mxu0 0.0
    %2224 = vmatpush2.msra.mxu0 0.0
    %2225 = vmatprep.subr.mxu0 0.0
    %2226 = vmatpush2.msra.mxu0 0.0
    %2227 = vmatprep.subr.mxu0 0.0
    %2228 = vmatpush2.msra.mxu0 0.0
    %2229 = vmatprep.subr.mxu0 0.0
    %2230 = vmatpush2.msra.mxu0 0.0
    %2231 = vmatprep.subr.mxu0 0.0
    %2232 = vmatpush2.msra.mxu0 0.0
    %2233 = vmatprep.subr.mxu0 0.0
    %2234 = vmatpush2.msra.mxu0 0.0
    %2235 = vmatprep.subr.mxu0 0.0
    %2236 = vmatpush2.msra.mxu0 0.0
    %2237 = vmatprep.subr.mxu0 0.0
    %2238 = vmatpush2.msra.mxu0 0.0
    %2239 = vmatprep.subr.mxu0 0.0
    %2240 = vmatpush2.msra.mxu0 0.0
    %2241 = vmatprep.subr.mxu0 0.0
    %2242 = vmatpush2.msra.mxu0 0.0
    %2243 = vmatprep.subr.mxu0 0.0
    %2244 = vmatpush2.msra.mxu0 0.0
    %2245 = vmatprep.subr.mxu0 0.0
    %2246 = vmatpush2.msra.mxu0 0.0
    %2247 = vmatprep.subr.mxu0 0.0
    %2248 = vmatpush2.msra.mxu0 0.0
    %2249 = vmatprep.mubr.f32.mxu0 0.0
    %2250 = vmatmul.mubr.f32.gmra.mxu0 %v2183
    %v2251 = vpop.f32.mrf.mxu0
    %v2252 = vadd.f32 0.0, %v2251
    %v2253 = vpop.f32.mrf.mxu0
    %2254 = vdwg.mxu0
    %2255 = vst.msk [vmem:[#allocation2 + $0x8] sm:$0xff] %vm391, %v2252
    %2256 = vrot.lane.b32.xlu0 %v1564, 112
    %v2257 = vpop.permute.xlu0 %2256
    %2258 = vrot.lane.b32.xlu0 %v1652, 112
    %v2259 = vpop.permute.xlu0 %2258
    %v2260 = vsel %vm391, %v2257, 0
    %v2262 = vsel %vm391, %v2259, 0
    %2264 = vmatprep.subr.mxu0 0.0
    %2265 = vmatpush1.xpose.msra.mxu0 0.0
    %2266 = vmatprep.subr.mxu0 0.0
    %2267 = vmatpush1.xpose.msra.mxu0 0.0
    %2268 = vmatprep.subr.mxu0 0.0
    %2269 = vmatpush1.xpose.msra.mxu0 0.0
    %2270 = vmatprep.subr.mxu0 0.0
    %2271 = vmatpush1.xpose.msra.mxu0 0.0
    %2272 = vmatprep.subr.mxu0 0.0
    %2273 = vmatpush1.xpose.msra.mxu0 0.0
    %2274 = vmatprep.subr.mxu0 0.0
    %2275 = vmatpush1.xpose.msra.mxu0 0.0
    %2276 = vmatprep.subr.mxu0 0.0
    %2277 = vmatpush1.xpose.msra.mxu0 0.0
    %2278 = vmatprep.subr.mxu0 0.0
    %2279 = vmatpush1.xpose.msra.mxu0 0.0
    %2280 = vmatprep.subr.mxu0 0.0
    %2281 = vmatpush1.xpose.msra.mxu0 0.0
    %2282 = vmatprep.subr.mxu0 0.0
    %2283 = vmatpush1.xpose.msra.mxu0 0.0
    %2284 = vmatprep.subr.mxu0 0.0
    %2285 = vmatpush1.xpose.msra.mxu0 0.0
    %2286 = vmatprep.subr.mxu0 0.0
    %2287 = vmatpush1.xpose.msra.mxu0 0.0
    %2288 = vmatprep.subr.mxu0 0.0
    %2289 = vmatpush1.xpose.msra.mxu0 0.0
    %2290 = vmatprep.subr.mxu0 0.0
    %2291 = vmatpush1.xpose.msra.mxu0 0.0
    %2292 = vmatprep.subr.mxu0 0.0
    %2293 = vmatpush1.xpose.msra.mxu0 0.0
    %2294 = vmatprep.subr.mxu0 0.0
    %2295 = vmatpush1.xpose.msra.mxu0 %v2262
    %2296 = vmatprep.subr.mxu0 0.0
    %2297 = vmatpush2.xpose.msra.mxu0 0.0
    %2298 = vmatprep.subr.mxu0 0.0
    %2299 = vmatpush2.xpose.msra.mxu0 0.0
    %2300 = vmatprep.subr.mxu0 0.0
    %2301 = vmatpush2.xpose.msra.mxu0 0.0
    %2302 = vmatprep.subr.mxu0 0.0
    %2303 = vmatpush2.xpose.msra.mxu0 0.0
    %2304 = vmatprep.subr.mxu0 0.0
    %2305 = vmatpush2.xpose.msra.mxu0 0.0
    %2306 = vmatprep.subr.mxu0 0.0
    %2307 = vmatpush2.xpose.msra.mxu0 0.0
    %2308 = vmatprep.subr.mxu0 0.0
    %2309 = vmatpush2.xpose.msra.mxu0 0.0
    %2310 = vmatprep.subr.mxu0 0.0
    %2311 = vmatpush2.xpose.msra.mxu0 0.0
    %2312 = vmatprep.subr.mxu0 0.0
    %2313 = vmatpush2.xpose.msra.mxu0 0.0
    %2314 = vmatprep.subr.mxu0 0.0
    %2315 = vmatpush2.xpose.msra.mxu0 0.0
    %2316 = vmatprep.subr.mxu0 0.0
    %2317 = vmatpush2.xpose.msra.mxu0 0.0
    %2318 = vmatprep.subr.mxu0 0.0
    %2319 = vmatpush2.xpose.msra.mxu0 0.0
    %2320 = vmatprep.subr.mxu0 0.0
    %2321 = vmatpush2.xpose.msra.mxu0 0.0
    %2322 = vmatprep.subr.mxu0 0.0
    %2323 = vmatpush2.xpose.msra.mxu0 0.0
    %2324 = vmatprep.subr.mxu0 0.0
    %2325 = vmatpush2.xpose.msra.mxu0 0.0
    %2326 = vmatprep.subr.mxu0 0.0
    %2327 = vmatpush2.xpose.msra.mxu0 0.0
    %2328 = vmatprep.mubr.f32.mxu0 0.0
    %2329 = vmatmul.mubr.f32.gmra.mxu0 %v2260
    %v2330 = vpop.f32.mrf.mxu0
    %v2331 = vadd.f32 0.0, %v2330
    %v2332 = vpop.f32.mrf.mxu0
    %2333 = vdwg.mxu0
    %v2334 = vmul.f32 %v2331, 0.25
    %v2335 = vadd.f32 %v2334, %v2168
    %v2336 = vsel %vm476, %v2335, -inf
    %2337 = vmax.xlane.f32.xlu0 %v2336
    %v2338 = vpop.xlane.xlu0 %2337
    %v2339 = vsub.f32 %v2335, %v2338
    %v2340 = vmul.f32 %v2339, 1.442695
    %v2341 = vpow.pop %v2340
    %v2342 = vsel %vm476, %v2341, 0.0
    %2343 = vadd.xlane.f32.xlu0 %v2342
    %v2344 = vpop.xlane.xlu0 %2343
    %v2345 = vrcp.pop %v2344
    %v2346 = vmul.f32 %v2341, %v2345
    %2348 = vrot.lane.b32.xlu0 %v1740, 112
    %v2349 = vpop.permute.xlu0 %2348
    %v2352 = vsel %vm476, %v2346, 0
    %2354 = vmatprep.subr.mxu0 0.0
    %2355 = vmatpush1.msra.mxu0 0.0
    %2356 = vmatprep.subr.mxu0 0.0
    %2357 = vmatpush1.msra.mxu0 0.0
    %2358 = vmatprep.subr.mxu0 0.0
    %2359 = vmatpush1.msra.mxu0 0.0
    %2360 = vmatprep.subr.mxu0 0.0
    %2361 = vmatpush1.msra.mxu0 0.0
    %2362 = vmatprep.subr.mxu0 0.0
    %2363 = vmatpush1.msra.mxu0 0.0
    %2364 = vmatprep.subr.mxu0 0.0
    %2365 = vmatpush1.msra.mxu0 0.0
    %2366 = vmatprep.subr.mxu0 0.0
    %2367 = vmatpush1.msra.mxu0 0.0
    %2368 = vmatprep.subr.mxu0 0.0
    %2369 = vmatpush1.msra.mxu0 0.0
    %2370 = vmatprep.subr.mxu0 0.0
    %2371 = vmatpush1.msra.mxu0 0.0
    %2372 = vmatprep.subr.mxu0 0.0
    %2373 = vmatpush1.msra.mxu0 0.0
    %2374 = vmatprep.subr.mxu0 0.0
    %2375 = vmatpush1.msra.mxu0 0.0
    %2376 = vmatprep.subr.mxu0 0.0
    %2377 = vmatpush1.msra.mxu0 0.0
    %2378 = vmatprep.subr.mxu0 0.0
    %2379 = vmatpush1.msra.mxu0 0.0
    %2380 = vmatprep.subr.mxu0 0.0
    %2381 = vmatpush1.msra.mxu0 0.0
    %2382 = vmatprep.subr.mxu0 0.0
    %2383 = vmatpush1.msra.mxu0 0.0
    %2384 = vmatprep.subr.mxu0 0.0
    %2385 = vmatpush1.msra.mxu0 %v2349
    %2386 = vmatprep.subr.mxu0 0.0
    %2387 = vmatpush2.msra.mxu0 0.0
    %2388 = vmatprep.subr.mxu0 0.0
    %2389 = vmatpush2.msra.mxu0 0.0
    %2390 = vmatprep.subr.mxu0 0.0
    %2391 = vmatpush2.msra.mxu0 0.0
    %2392 = vmatprep.subr.mxu0 0.0
    %2393 = vmatpush2.msra.mxu0 0.0
    %2394 = vmatprep.subr.mxu0 0.0
    %2395 = vmatpush2.msra.mxu0 0.0
    %2396 = vmatprep.subr.mxu0 0.0
    %2397 = vmatpush2.msra.mxu0 0.0
    %2398 = vmatprep.subr.mxu0 0.0
    %2399 = vmatpush2.msra.mxu0 0.0
    %2400 = vmatprep.subr.mxu0 0.0
    %2401 = vmatpush2.msra.mxu0 0.0
    %2402 = vmatprep.subr.mxu0 0.0
    %2403 = vmatpush2.msra.mxu0 0.0
    %2404 = vmatprep.subr.mxu0 0.0
    %2405 = vmatpush2.msra.mxu0 0.0
    %2406 = vmatprep.subr.mxu0 0.0
    %2407 = vmatpush2.msra.mxu0 0.0
    %2408 = vmatprep.subr.mxu0 0.0
    %2409 = vmatpush2.msra.mxu0 0.0
    %2410 = vmatprep.subr.mxu0 0.0
    %2411 = vmatpush2.msra.mxu0 0.0
    %2412 = vmatprep.subr.mxu0 0.0
    %2413 = vmatpush2.msra.mxu0 0.0
    %2414 = vmatprep.subr.mxu0 0.0
    %2415 = vmatpush2.msra.mxu0 0.0
    %2416 = vmatprep.subr.mxu0 0.0
    %2417 = vmatpush2.msra.mxu0 0.0
    %2418 = vmatprep.mubr.f32.mxu0 0.0
    %2419 = vmatmul.mubr.f32.gmra.mxu0 %v2352
    %v2420 = vpop.f32.mrf.mxu0
    %v2421 = vadd.f32 0.0, %v2420
    %v2422 = vpop.f32.mrf.mxu0
    %2423 = vdwg.mxu0
    %2425 = vrot.lane.b32.xlu0 %v2421, 16
    %v2426 = vpop.permute.xlu0 %2425
    %2428 = vst.msk [vmem:[#allocation2 + $0x8] sm:$0xff] %vm734, %v2426
    %v2429 = vld [vmem:[#allocation2] sm:$0xff]
    %v2430 = vld [vmem:[#allocation2 + $0x8] sm:$0xff]
    %s2431 = scalar_lea.vmem %s10, 32
    %v2432 = vld [vmem:[%s2431] sm:$0xff]
    %v2433 = vld [vmem:[%s2431 + $0x8] sm:$0xff]
    %v2434 = vld [vmem:[%s2431 + $0x10] sm:$0xff]
    %v2435 = vld [vmem:[%s2431 + $0x18] sm:$0xff]
    %s2436 = scalar_lea.vmem %s11, 1
    %v2437 = vld [vmem:[%s2436] sm:$0x1]
    %v2439 = vlaneseq
    %v2440 = vshrl.u32 %v2439, 7
    %v2441 = vsub.s32 0, %v2440
    %v2442 = vrot.slane %v2437, %v2441
    %v2445 = vsel %vm82, %v2429, 0
    %v2448 = vsel %vm82, %v2430, 0
    %2450 = vmatprep.subr.mxu0 0.0
    %2451 = vmatpush1.msra.mxu0 0.0
    %2452 = vmatprep.subr.mxu0 0.0
    %2453 = vmatpush1.msra.mxu0 0.0
    %2454 = vmatprep.subr.mxu0 0.0
    %2455 = vmatpush1.msra.mxu0 0.0
    %2456 = vmatprep.subr.mxu0 0.0
    %2457 = vmatpush1.msra.mxu0 0.0
    %2458 = vmatprep.subr.mxu0 0.0
    %2459 = vmatpush1.msra.mxu0 0.0
    %2460 = vmatprep.subr.mxu0 0.0
    %2461 = vmatpush1.msra.mxu0 0.0
    %2462 = vmatprep.subr.mxu0 0.0
    %2463 = vmatpush1.msra.mxu0 0.0
    %2464 = vmatprep.subr.mxu0 0.0
    %2465 = vmatpush1.msra.mxu0 0.0
    %2466 = vmatprep.subr.mxu0 0.0
    %2467 = vmatpush1.msra.mxu0 0.0
    %2468 = vmatprep.subr.mxu0 0.0
    %2469 = vmatpush1.msra.mxu0 0.0
    %2470 = vmatprep.subr.mxu0 0.0
    %2471 = vmatpush1.msra.mxu0 0.0
    %2472 = vmatprep.subr.mxu0 0.0
    %2473 = vmatpush1.msra.mxu0 0.0
    %2474 = vmatprep.subr.mxu0 0.0
    %2475 = vmatpush1.msra.mxu0 %v2435
    %2476 = vmatprep.subr.mxu0 0.0
    %2477 = vmatpush1.msra.mxu0 %v2434
    %2478 = vmatprep.subr.mxu0 0.0
    %2479 = vmatpush1.msra.mxu0 %v2433
    %2480 = vmatprep.subr.mxu0 0.0
    %2481 = vmatpush1.msra.mxu0 %v2432
    %2482 = vmatprep.subr.mxu0 0.0
    %2483 = vmatpush2.msra.mxu0 0.0
    %2484 = vmatprep.subr.mxu0 0.0
    %2485 = vmatpush2.msra.mxu0 0.0
    %2486 = vmatprep.subr.mxu0 0.0
    %2487 = vmatpush2.msra.mxu0 0.0
    %2488 = vmatprep.subr.mxu0 0.0
    %2489 = vmatpush2.msra.mxu0 0.0
    %2490 = vmatprep.subr.mxu0 0.0
    %2491 = vmatpush2.msra.mxu0 0.0
    %2492 = vmatprep.subr.mxu0 0.0
    %2493 = vmatpush2.msra.mxu0 0.0
    %2494 = vmatprep.subr.mxu0 0.0
    %2495 = vmatpush2.msra.mxu0 0.0
    %2496 = vmatprep.subr.mxu0 0.0
    %2497 = vmatpush2.msra.mxu0 0.0
    %2498 = vmatprep.subr.mxu0 0.0
    %2499 = vmatpush2.msra.mxu0 0.0
    %2500 = vmatprep.subr.mxu0 0.0
    %2501 = vmatpush2.msra.mxu0 0.0
    %2502 = vmatprep.subr.mxu0 0.0
    %2503 = vmatpush2.msra.mxu0 0.0
    %2504 = vmatprep.subr.mxu0 0.0
    %2505 = vmatpush2.msra.mxu0 0.0
    %2506 = vmatprep.subr.mxu0 0.0
    %2507 = vmatpush2.msra.mxu0 0.0
    %2508 = vmatprep.subr.mxu0 0.0
    %2509 = vmatpush2.msra.mxu0 0.0
    %2510 = vmatprep.subr.mxu0 0.0
    %2511 = vmatpush2.msra.mxu0 0.0
    %2512 = vmatprep.subr.mxu0 0.0
    %2513 = vmatpush2.msra.mxu0 0.0
    %2514 = vmatprep.mubr.f32.mxu0 0.0
    %2515 = vmatmul.mubr.f32.gmra.mxu0 %v2445
    %v2516 = vpop.f32.mrf.mxu0
    %v2517 = vadd.f32 %v2442, %v2516
    %v2518 = vpop.f32.mrf.mxu0
    %2519 = vmatprep.mubr.f32.mxu0 0.0
    %2520 = vmatmul.mubr.f32.gmra.mxu0 %v2448
    %v2521 = vpop.f32.mrf.mxu0
    %v2522 = vadd.f32 %v2442, %v2521
    %v2523 = vpop.f32.mrf.mxu0
    %2524 = vdwg.mxu0
    %v2525 = vadd.f32 %v1471, %v2517
    %v2526 = vadd.f32 %v1472, %v2522
    %s2527 = scalar_lea.vmem %s12, 1
    %v2528 = vld [vmem:[%s2527] sm:$0x1]
    %s2529 = scalar_lea.vmem %s13, 1
    %v2530 = vld [vmem:[%s2529] sm:$0x1]
    %v2531 = vsel %vm82, %v2525, 0.0
    %2532 = vadd.xlane.f32.xlu0 %v2531
    %v2533 = vpop.xlane.xlu0 %2532
    %v2534 = vsel %vm82, %v2526, 0.0
    %2535 = vadd.xlane.f32.xlu0 %v2534
    %v2536 = vpop.xlane.xlu0 %2535
    %v2537 = vmul.f32 %v2533, %v89
    %v2538 = vmul.f32 %v2536, %v89
    %v2539 = vsub.f32 %v2525, %v2537
    %v2540 = vsub.f32 %v2526, %v2538
    %v2541 = vmul.f32 %v2539, %v2539
    %v2542 = vmul.f32 %v2540, %v2540
    %v2543 = vsel %vm82, %v2541, 0.0
    %2544 = vadd.xlane.f32.xlu0 %v2543
    %v2545 = vpop.xlane.xlu0 %2544
    %v2546 = vsel %vm82, %v2542, 0.0
    %2547 = vadd.xlane.f32.xlu0 %v2546
    %v2548 = vpop.xlane.xlu0 %2547
    %v2549 = vmul.f32 %v2545, %v89
    %v2550 = vmul.f32 %v2548, %v89
    %v2551 = vadd.f32 %v2549, 1e-12
    %v2552 = vadd.f32 %v2550, 1e-12
    %v2553 = vrsqrt.pop %v2551
    %v2554 = vrsqrt.pop %v2552
    %v2555 = vmul.f32 %v2539, %v2553
    %v2556 = vmul.f32 %v2540, %v2554
    %v2558 = vlaneseq
    %v2559 = vshrl.u32 %v2558, 7
    %v2560 = vsub.s32 0, %v2559
    %v2561 = vrot.slane %v2528, %v2560
    %v2563 = vmul.f32 %v2555, %v2561
    %v2564 = vmul.f32 %v2556, %v2561
    %v2566 = vlaneseq
    %v2567 = vshrl.u32 %v2566, 7
    %v2568 = vsub.s32 0, %v2567
    %v2569 = vrot.slane %v2530, %v2568
    %v2571 = vadd.f32 %v2563, %v2569
    %v2572 = vadd.f32 %v2564, %v2569
    %s2573 = scalar_lea.vmem %s14, 32
    %v2574 = vld [vmem:[%s2573] sm:$0xff]
    %v2575 = vld [vmem:[%s2573 + $0x8] sm:$0xff]
    %v2576 = vld [vmem:[%s2573 + $0x10] sm:$0xff]
    %v2577 = vld [vmem:[%s2573 + $0x18] sm:$0xff]
    %s2578 = scalar_lea.vmem %s15, 1
    %v2579 = vld [vmem:[%s2578] sm:$0x1]
    %v2581 = vlaneseq
    %v2582 = vshrl.u32 %v2581, 7
    %v2583 = vsub.s32 0, %v2582
    %v2584 = vrot.slane %v2579, %v2583
    %v2587 = vsel %vm82, %v2571, 0
    %v2590 = vsel %vm82, %v2572, 0
    %2592 = vmatprep.subr.mxu0 0.0
    %2593 = vmatpush1.msra.mxu0 0.0
    %2594 = vmatprep.subr.mxu0 0.0
    %2595 = vmatpush1.msra.mxu0 0.0
    %2596 = vmatprep.subr.mxu0 0.0
    %2597 = vmatpush1.msra.mxu0 0.0
    %2598 = vmatprep.subr.mxu0 0.0
    %2599 = vmatpush1.msra.mxu0 0.0
    %2600 = vmatprep.subr.mxu0 0.0
    %2601 = vmatpush1.msra.mxu0 0.0
    %2602 = vmatprep.subr.mxu0 0.0
    %2603 = vmatpush1.msra.mxu0 0.0
    %2604 = vmatprep.subr.mxu0 0.0
    %2605 = vmatpush1.msra.mxu0 0.0
    %2606 = vmatprep.subr.mxu0 0.0
    %2607 = vmatpush1.msra.mxu0 0.0
    %2608 = vmatprep.subr.mxu0 0.0
    %2609 = vmatpush1.msra.mxu0 0.0
    %2610 = vmatprep.subr.mxu0 0.0
    %2611 = vmatpush1.msra.mxu0 0.0
    %2612 = vmatprep.subr.mxu0 0.0
    %2613 = vmatpush1.msra.mxu0 0.0
    %2614 = vmatprep.subr.mxu0 0.0
    %2615 = vmatpush1.msra.mxu0 0.0
    %2616 = vmatprep.subr.mxu0 0.0
    %2617 = vmatpush1.msra.mxu0 %v2577
    %2618 = vmatprep.subr.mxu0 0.0
    %2619 = vmatpush1.msra.mxu0 %v2576
    %2620 = vmatprep.subr.mxu0 0.0
    %2621 = vmatpush1.msra.mxu0 %v2575
    %2622 = vmatprep.subr.mxu0 0.0
    %2623 = vmatpush1.msra.mxu0 %v2574
    %2624 = vmatprep.subr.mxu0 0.0
    %2625 = vmatpush2.msra.mxu0 0.0
    %2626 = vmatprep.subr.mxu0 0.0
    %2627 = vmatpush2.msra.mxu0 0.0
    %2628 = vmatprep.subr.mxu0 0.0
    %2629 = vmatpush2.msra.mxu0 0.0
    %2630 = vmatprep.subr.mxu0 0.0
    %2631 = vmatpush2.msra.mxu0 0.0
    %2632 = vmatprep.subr.mxu0 0.0
    %2633 = vmatpush2.msra.mxu0 0.0
    %2634 = vmatprep.subr.mxu0 0.0
    %2635 = vmatpush2.msra.mxu0 0.0
    %2636 = vmatprep.subr.mxu0 0.0
    %2637 = vmatpush2.msra.mxu0 0.0
    %2638 = vmatprep.subr.mxu0 0.0
    %2639 = vmatpush2.msra.mxu0 0.0
    %2640 = vmatprep.subr.mxu0 0.0
    %2641 = vmatpush2.msra.mxu0 0.0
    %2642 = vmatprep.subr.mxu0 0.0
    %2643 = vmatpush2.msra.mxu0 0.0
    %2644 = vmatprep.subr.mxu0 0.0
    %2645 = vmatpush2.msra.mxu0 0.0
    %2646 = vmatprep.subr.mxu0 0.0
    %2647 = vmatpush2.msra.mxu0 0.0
    %2648 = vmatprep.subr.mxu0 0.0
    %2649 = vmatpush2.msra.mxu0 0.0
    %2650 = vmatprep.subr.mxu0 0.0
    %2651 = vmatpush2.msra.mxu0 0.0
    %2652 = vmatprep.subr.mxu0 0.0
    %2653 = vmatpush2.msra.mxu0 0.0
    %2654 = vmatprep.subr.mxu0 0.0
    %2655 = vmatpush2.msra.mxu0 0.0
    %2656 = vmatprep.mubr.f32.mxu0 0.0
    %2657 = vmatmul.mubr.f32.gmra.mxu0 %v2587
    %v2658 = vpop.f32.mrf.mxu0
    %v2659 = vadd.f32 %v2584, %v2658
    %v2660 = vpop.f32.mrf.mxu0
    %2661 = vmatprep.mubr.f32.mxu0 0.0
    %2662 = vmatmul.mubr.f32.gmra.mxu0 %v2590
    %v2663 = vpop.f32.mrf.mxu0
    %v2664 = vadd.f32 %v2584, %v2663
    %v2665 = vpop.f32.mrf.mxu0
    %2666 = vdwg.mxu0
    %v2667 = vmul.f32 %v2659, %v2659
    %v2668 = vmul.f32 %v2664, %v2664
    %v2669 = vmul.f32 %v2659, %v2667
    %v2670 = vmul.f32 %v2664, %v2668
    %v2671 = vmul.f32 %v2669, 0.044715
    %v2672 = vmul.f32 %v2670, 0.044715
    %v2673 = vadd.f32 %v2659, %v2671
    %v2674 = vadd.f32 %v2664, %v2672
    %v2675 = vmul.f32 %v2673, 0.7978846
    %v2676 = vmul.f32 %v2674, 0.7978846
    %v2677 = vtanh.pop %v2675
    %v2678 = vtanh.pop %v2676
    %v2679 = vadd.f32 %v2677, 1.0
    %v2680 = vadd.f32 %v2678, 1.0
    %v2681 = vmul.f32 %v2679, 0.5
    %v2682 = vmul.f32 %v2680, 0.5
    %v2683 = vmul.f32 %v2659, %v2681
    %v2684 = vmul.f32 %v2664, %v2682
    %s2685 = scalar_lea.vmem %s16, 64
    %v2686 = vld [vmem:[%s2685] sm:$0xff]
    %v2687 = vld [vmem:[%s2685 + $0x8] sm:$0xff]
    %v2688 = vld [vmem:[%s2685 + $0x10] sm:$0xff]
    %v2689 = vld [vmem:[%s2685 + $0x18] sm:$0xff]
    %v2690 = vld [vmem:[%s2685 + $0x20] sm:$0xff]
    %v2691 = vld [vmem:[%s2685 + $0x28] sm:$0xff]
    %v2692 = vld [vmem:[%s2685 + $0x30] sm:$0xff]
    %v2693 = vld [vmem:[%s2685 + $0x38] sm:$0xff]
    %s2694 = scalar_lea.vmem %s17, 1
    %v2695 = vld [vmem:[%s2694] sm:$0x1]
    %v2697 = vlaneseq
    %v2698 = vshrl.u32 %v2697, 7
    %v2699 = vsub.s32 0, %v2698
    %v2700 = vrot.slane %v2695, %v2699
    %v2703 = vsel %vm1345, %v2683, 0
    %v2706 = vsel %vm1345, %v2684, 0
    %2708 = vmatprep.subr.mxu0 0.0
    %2709 = vmatpush1.msra.mxu0 0.0
    %2710 = vmatprep.subr.mxu0 0.0
    %2711 = vmatpush1.msra.mxu0 0.0
    %2712 = vmatprep.subr.mxu0 0.0
    %2713 = vmatpush1.msra.mxu0 0.0
    %2714 = vmatprep.subr.mxu0 0.0
    %2715 = vmatpush1.msra.mxu0 0.0
    %2716 = vmatprep.subr.mxu0 0.0
    %2717 = vmatpush1.msra.mxu0 0.0
    %2718 = vmatprep.subr.mxu0 0.0
    %2719 = vmatpush1.msra.mxu0 0.0
    %2720 = vmatprep.subr.mxu0 0.0
    %2721 = vmatpush1.msra.mxu0 0.0
    %2722 = vmatprep.subr.mxu0 0.0
    %2723 = vmatpush1.msra.mxu0 0.0
    %2724 = vmatprep.subr.mxu0 0.0
    %2725 = vmatpush1.msra.mxu0 %v2693
    %2726 = vmatprep.subr.mxu0 0.0
    %2727 = vmatpush1.msra.mxu0 %v2692
    %2728 = vmatprep.subr.mxu0 0.0
    %2729 = vmatpush1.msra.mxu0 %v2691
    %2730 = vmatprep.subr.mxu0 0.0
    %2731 = vmatpush1.msra.mxu0 %v2690
    %2732 = vmatprep.subr.mxu0 0.0
    %2733 = vmatpush1.msra.mxu0 %v2689
    %2734 = vmatprep.subr.mxu0 0.0
    %2735 = vmatpush1.msra.mxu0 %v2688
    %2736 = vmatprep.subr.mxu0 0.0
    %2737 = vmatpush1.msra.mxu0 %v2687
    %2738 = vmatprep.subr.mxu0 0.0
    %2739 = vmatpush1.msra.mxu0 %v2686
    %2740 = vmatprep.subr.mxu0 0.0
    %2741 = vmatpush2.msra.mxu0 0.0
    %2742 = vmatprep.subr.mxu0 0.0
    %2743 = vmatpush2.msra.mxu0 0.0
    %2744 = vmatprep.subr.mxu0 0.0
    %2745 = vmatpush2.msra.mxu0 0.0
    %2746 = vmatprep.subr.mxu0 0.0
    %2747 = vmatpush2.msra.mxu0 0.0
    %2748 = vmatprep.subr.mxu0 0.0
    %2749 = vmatpush2.msra.mxu0 0.0
    %2750 = vmatprep.subr.mxu0 0.0
    %2751 = vmatpush2.msra.mxu0 0.0
    %2752 = vmatprep.subr.mxu0 0.0
    %2753 = vmatpush2.msra.mxu0 0.0
    %2754 = vmatprep.subr.mxu0 0.0
    %2755 = vmatpush2.msra.mxu0 0.0
    %2756 = vmatprep.subr.mxu0 0.0
    %2757 = vmatpush2.msra.mxu0 0.0
    %2758 = vmatprep.subr.mxu0 0.0
    %2759 = vmatpush2.msra.mxu0 0.0
    %2760 = vmatprep.subr.mxu0 0.0
    %2761 = vmatpush2.msra.mxu0 0.0
    %2762 = vmatprep.subr.mxu0 0.0
    %2763 = vmatpush2.msra.mxu0 0.0
    %2764 = vmatprep.subr.mxu0 0.0
    %2765 = vmatpush2.msra.mxu0 0.0
    %2766 = vmatprep.subr.mxu0 0.0
    %2767 = vmatpush2.msra.mxu0 0.0
    %2768 = vmatprep.subr.mxu0 0.0
    %2769 = vmatpush2.msra.mxu0 0.0
    %2770 = vmatprep.subr.mxu0 0.0
    %2771 = vmatpush2.msra.mxu0 0.0
    %2772 = vmatprep.mubr.f32.mxu0 0.0
    %2773 = vmatmul.mubr.f32.gmra.mxu0 %v2703
    %v2774 = vpop.f32.mrf.mxu0
    %v2775 = vadd.f32 %v2700, %v2774
    %v2776 = vpop.f32.mrf.mxu0
    %2777 = vmatprep.mubr.f32.mxu0 0.0
    %2778 = vmatmul.mubr.f32.gmra.mxu0 %v2706
    %v2779 = vpop.f32.mrf.mxu0
    %v2780 = vadd.f32 %v2700, %v2779
    %v2781 = vpop.f32.mrf.mxu0
    %2782 = vdwg.mxu0
    %v2783 = vadd.f32 %v2571, %v2775
    %v2784 = vadd.f32 %v2572, %v2780
    %s2785 = scalar_lea.vmem %s18, 1
    %v2786 = vld [vmem:[%s2785] sm:$0x1]
    %s2787 = scalar_lea.vmem %s19, 1
    %v2788 = vld [vmem:[%s2787] sm:$0x1]
    %v2789 = vsel %vm82, %v2783, 0.0
    %2790 = vadd.xlane.f32.xlu0 %v2789
    %v2791 = vpop.xlane.xlu0 %2790
    %v2792 = vsel %vm82, %v2784, 0.0
    %2793 = vadd.xlane.f32.xlu0 %v2792
    %v2794 = vpop.xlane.xlu0 %2793
    %v2795 = vmul.f32 %v2791, %v89
    %v2796 = vmul.f32 %v2794, %v89
    %v2797 = vsub.f32 %v2783, %v2795
    %v2798 = vsub.f32 %v2784, %v2796
    %v2799 = vmul.f32 %v2797, %v2797
    %v2800 = vmul.f32 %v2798, %v2798
    %v2801 = vsel %vm82, %v2799, 0.0
    %2802 = vadd.xlane.f32.xlu0 %v2801
    %v2803 = vpop.xlane.xlu0 %2802
    %v2804 = vsel %vm82, %v2800, 0.0
    %2805 = vadd.xlane.f32.xlu0 %v2804
    %v2806 = vpop.xlane.xlu0 %2805
    %v2807 = vmul.f32 %v2803, %v89
    %v2808 = vmul.f32 %v2806, %v89
    %v2809 = vadd.f32 %v2807, 1e-12
    %v2810 = vadd.f32 %v2808, 1e-12
    %v2811 = vrsqrt.pop %v2809
    %v2812 = vrsqrt.pop %v2810
    %v2813 = vmul.f32 %v2797, %v2811
    %v2814 = vmul.f32 %v2798, %v2812
    %v2816 = vlaneseq
    %v2817 = vshrl.u32 %v2816, 7
    %v2818 = vsub.s32 0, %v2817
    %v2819 = vrot.slane %v2786, %v2818
    %v2821 = vmul.f32 %v2813, %v2819
    %v2822 = vmul.f32 %v2814, %v2819
    %v2824 = vlaneseq
    %v2825 = vshrl.u32 %v2824, 7
    %v2826 = vsub.s32 0, %v2825
    %v2827 = vrot.slane %v2788, %v2826
    %v2829 = vadd.f32 %v2821, %v2827
    %v2830 = vadd.f32 %v2822, %v2827
    %v2832 = vrot.slane %v2830, 7
    %vm2834 = vcmask 1040384
    %v2835 = vsel %vm2834, %v2829, %v2832
    %v2836 = vld [vmem:[%s20] sm:$0xff]
    %v2837 = vld [vmem:[%s20 + $0x8] sm:$0xff]
    %v2838 = vld [vmem:[%s20 + $0x10] sm:$0xff]
    %v2839 = vld [vmem:[%s20 + $0x18] sm:$0xff]
    %v2840 = vld [vmem:[%s21] sm:$0x1]
    %v2842 = vlaneseq
    %v2843 = vshrl.u32 %v2842, 7
    %v2844 = vsub.s32 0, %v2843
    %v2845 = vrot.slane %v2840, %v2844
    %v2848 = vsel %vm82, %v2835, 0
    %2850 = vmatprep.subr.mxu0 0.0
    %2851 = vmatpush1.msra.mxu0 0.0
    %2852 = vmatprep.subr.mxu0 0.0
    %2853 = vmatpush1.msra.mxu0 0.0
    %2854 = vmatprep.subr.mxu0 0.0
    %2855 = vmatpush1.msra.mxu0 0.0
    %2856 = vmatprep.subr.mxu0 0.0
    %2857 = vmatpush1.msra.mxu0 0.0
    %2858 = vmatprep.subr.mxu0 0.0
    %2859 = vmatpush1.msra.mxu0 0.0
    %2860 = vmatprep.subr.mxu0 0.0
    %2861 = vmatpush1.msra.mxu0 0.0
    %2862 = vmatprep.subr.mxu0 0.0
    %2863 = vmatpush1.msra.mxu0 0.0
    %2864 = vmatprep.subr.mxu0 0.0
    %2865 = vmatpush1.msra.mxu0 0.0
    %2866 = vmatprep.subr.mxu0 0.0
    %2867 = vmatpush1.msra.mxu0 0.0
    %2868 = vmatprep.subr.mxu0 0.0
    %2869 = vmatpush1.msra.mxu0 0.0
    %2870 = vmatprep.subr.mxu0 0.0
    %2871 = vmatpush1.msra.mxu0 0.0
    %2872 = vmatprep.subr.mxu0 0.0
    %2873 = vmatpush1.msra.mxu0 0.0
    %2874 = vmatprep.subr.mxu0 0.0
    %2875 = vmatpush1.msra.mxu0 %v2839
    %2876 = vmatprep.subr.mxu0 0.0
    %2877 = vmatpush1.msra.mxu0 %v2838
    %2878 = vmatprep.subr.mxu0 0.0
    %2879 = vmatpush1.msra.mxu0 %v2837
    %2880 = vmatprep.subr.mxu0 0.0
    %2881 = vmatpush1.msra.mxu0 %v2836
    %2882 = vmatprep.subr.mxu0 0.0
    %2883 = vmatpush2.msra.mxu0 0.0
    %2884 = vmatprep.subr.mxu0 0.0
    %2885 = vmatpush2.msra.mxu0 0.0
    %2886 = vmatprep.subr.mxu0 0.0
    %2887 = vmatpush2.msra.mxu0 0.0
    %2888 = vmatprep.subr.mxu0 0.0
    %2889 = vmatpush2.msra.mxu0 0.0
    %2890 = vmatprep.subr.mxu0 0.0
    %2891 = vmatpush2.msra.mxu0 0.0
    %2892 = vmatprep.subr.mxu0 0.0
    %2893 = vmatpush2.msra.mxu0 0.0
    %2894 = vmatprep.subr.mxu0 0.0
    %2895 = vmatpush2.msra.mxu0 0.0
    %2896 = vmatprep.subr.mxu0 0.0
    %2897 = vmatpush2.msra.mxu0 0.0
    %2898 = vmatprep.subr.mxu0 0.0
    %2899 = vmatpush2.msra.mxu0 0.0
    %2900 = vmatprep.subr.mxu0 0.0
    %2901 = vmatpush2.msra.mxu0 0.0
    %2902 = vmatprep.subr.mxu0 0.0
    %2903 = vmatpush2.msra.mxu0 0.0
    %2904 = vmatprep.subr.mxu0 0.0
    %2905 = vmatpush2.msra.mxu0 0.0
    %2906 = vmatprep.subr.mxu0 0.0
    %2907 = vmatpush2.msra.mxu0 0.0
    %2908 = vmatprep.subr.mxu0 0.0
    %2909 = vmatpush2.msra.mxu0 0.0
    %2910 = vmatprep.subr.mxu0 0.0
    %2911 = vmatpush2.msra.mxu0 0.0
    %2912 = vmatprep.subr.mxu0 0.0
    %2913 = vmatpush2.msra.mxu0 0.0
    %2914 = vmatprep.mubr.f32.mxu0 0.0
    %2915 = vmatmul.mubr.f32.gmra.mxu0 %v2848
    %v2916 = vpop.f32.mrf.mxu0
    %v2917 = vadd.f32 %v2845, %v2916
    %v2918 = vpop.f32.mrf.mxu0
    %2919 = vdwg.mxu0
    %v2920 = vtanh.pop %v2917
    %v2921 = vld [vmem:[%s22] sm:$0xff]
    %v2922 = vld [vmem:[%s22 + $0x8] sm:$0xff]
    %v2923 = vld [vmem:[%s22 + $0x10] sm:$0xff]
    %v2924 = vld [vmem:[%s22 + $0x18] sm:$0xff]
    %v2925 = vld [vmem:[%s23] sm:$0x1]
    %v2927 = vlaneseq
    %v2928 = vshrl.u32 %v2927, 7
    %v2929 = vsub.s32 0, %v2928
    %v2930 = vrot.slane %v2925, %v2929
    %v2933 = vsel %vm82, %v2920, 0
    %2935 = vmatprep.subr.mxu0 0.0
    %2936 = vmatpush1.msra.mxu0 0.0
    %2937 = vmatprep.subr.mxu0 0.0
    %2938 = vmatpush1.msra.mxu0 0.0
    %2939 = vmatprep.subr.mxu0 0.0
    %2940 = vmatpush1.msra.mxu0 0.0
    %2941 = vmatprep.subr.mxu0 0.0
    %2942 = vmatpush1.msra.mxu0 0.0
    %2943 = vmatprep.subr.mxu0 0.0
    %2944 = vmatpush1.msra.mxu0 0.0
    %2945 = vmatprep.subr.mxu0 0.0
    %2946 = vmatpush1.msra.mxu0 0.0
    %2947 = vmatprep.subr.mxu0 0.0
    %2948 = vmatpush1.msra.mxu0 0.0
    %2949 = vmatprep.subr.mxu0 0.0
    %2950 = vmatpush1.msra.mxu0 0.0
    %2951 = vmatprep.subr.mxu0 0.0
    %2952 = vmatpush1.msra.mxu0 0.0
    %2953 = vmatprep.subr.mxu0 0.0
    %2954 = vmatpush1.msra.mxu0 0.0
    %2955 = vmatprep.subr.mxu0 0.0
    %2956 = vmatpush1.msra.mxu0 0.0
    %2957 = vmatprep.subr.mxu0 0.0
    %2958 = vmatpush1.msra.mxu0 0.0
    %2959 = vmatprep.subr.mxu0 0.0
    %2960 = vmatpush1.msra.mxu0 %v2924
    %2961 = vmatprep.subr.mxu0 0.0
    %2962 = vmatpush1.msra.mxu0 %v2923
    %2963 = vmatprep.subr.mxu0 0.0
    %2964 = vmatpush1.msra.mxu0 %v2922
    %2965 = vmatprep.subr.mxu0 0.0
    %2966 = vmatpush1.msra.mxu0 %v2921
    %2967 = vmatprep.subr.mxu0 0.0
    %2968 = vmatpush2.msra.mxu0 0.0
    %2969 = vmatprep.subr.mxu0 0.0
    %2970 = vmatpush2.msra.mxu0 0.0
    %2971 = vmatprep.subr.mxu0 0.0
    %2972 = vmatpush2.msra.mxu0 0.0
    %2973 = vmatprep.subr.mxu0 0.0
    %2974 = vmatpush2.msra.mxu0 0.0
    %2975 = vmatprep.subr.mxu0 0.0
    %2976 = vmatpush2.msra.mxu0 0.0
    %2977 = vmatprep.subr.mxu0 0.0
    %2978 = vmatpush2.msra.mxu0 0.0
    %2979 = vmatprep.subr.mxu0 0.0
    %2980 = vmatpush2.msra.mxu0 0.0
    %2981 = vmatprep.subr.mxu0 0.0
    %2982 = vmatpush2.msra.mxu0 0.0
    %2983 = vmatprep.subr.mxu0 0.0
    %2984 = vmatpush2.msra.mxu0 0.0
    %2985 = vmatprep.subr.mxu0 0.0
    %2986 = vmatpush2.msra.mxu0 0.0
    %2987 = vmatprep.subr.mxu0 0.0
    %2988 = vmatpush2.msra.mxu0 0.0
    %2989 = vmatprep.subr.mxu0 0.0
    %2990 = vmatpush2.msra.mxu0 0.0
    %2991 = vmatprep.subr.mxu0 0.0
    %2992 = vmatpush2.msra.mxu0 0.0
    %2993 = vmatprep.subr.mxu0 0.0
    %2994 = vmatpush2.msra.mxu0 0.0
    %2995 = vmatprep.subr.mxu0 0.0
    %2996 = vmatpush2.msra.mxu0 0.0
    %2997 = vmatprep.subr.mxu0 0.0
    %2998 = vmatpush2.msra.mxu0 0.0
    %2999 = vmatprep.mubr.f32.mxu0 0.0
    %3000 = vmatmul.mubr.f32.gmra.mxu0 %v2933
    %v3001 = vpop.f32.mrf.mxu0
    %v3002 = vadd.f32 %v2930, %v3001
    %v3003 = vpop.f32.mrf.mxu0
    %3004 = vdwg.mxu0
    %vm3005 = vcmask 9216
    %3006 = vst.msk [vmem:[#allocation3] sm:$0x3] %vm3005, %v3002
    // Predicated region
    $region98: #{bert_classifier_forward.1} parent=1 // pred_check
      _
    $region99: #{bert_classifier_forward.1} parent=1 // pred_check_branch
      %3008 = sbr.rel (0) target = $region101
    $region100: #{bert_classifier_forward.1} parent=1 // pred_region
      %s3010 = ssub.s32 32, 32
      %3011 = vsyncadd [#allocation4], %s3010
      %s3013 = sshll.u32 [#allocation3], 4
      %s3014 = int_to_ptr.vmem [resolvable:$true] %s3013
      %3016 = dma.vmem_to_hbm [thread:$0]  %s3014, 32, %s24, [#allocation4]
    $region101: #{bert_classifier_forward.1} parent=1 // pred_fallthru
      _
    // Predicated region
    $region102: #{bert_classifier_forward.1} parent=1 // pred_check
      _
    $region103: #{bert_classifier_forward.1} parent=1 // pred_check_branch
      %3018 = sbr.rel (0) target = $region105
    $region104: #{bert_classifier_forward.1} parent=1 // pred_region
      %3019 = dma.done [#allocation4], 32
    $region105: #{bert_classifier_forward.1} parent=1 // pred_fallthru
      _
    %3020 = vsyncpa [#allocation4], 1

</llo_original>
